<compile_context>
chip_gen: v7x
topology: tpu7x:2x2x1
jax: 0.10.0
libtpu: 0.0.40
codegen_flags: <defaults>
</compile_context>

<pallas_src>
import functools

import jax
import jax.numpy as jnp
from jax.experimental import pallas as pl
from jax.experimental.pallas import tpu as pltpu


def _fcn_kernel(n_layers, in_features, out_features, n_chunks,
                w_ref, b_ref, x_ref, o_ref):
    """Transposed-layout, lane-chunked MLP.

    w_ref: [n_layers, H, H] zero-padded weight slab.
           layers 0..n_layers-2 : torch-layout W_i ([out_i, in_i]) in [:out_i, :in_i]
           layer  n_layers-1    : W_last^T ([H, out_features])     in [:, :out_features]
    b_ref: [n_layers, H, 1] zero-padded bias slab (bias_i in rows :out_i).
    x_ref: [n_chunks, in_features, chunk]  input tile  (batch on lanes).
    o_ref: [n_chunks, out_features, chunk] output tile (lane-dense stores).
    """
    f32 = jnp.float32
    # Hoist the tiny weight/bias loads out of the chunk loop (a few vregs each).
    w0 = w_ref[0]                          # [H, H]   (only cols :in_features used)
    b0 = b_ref[0]                          # [H, 1]
    wl = w_ref[n_layers - 1]               # [H, H]   (cols :out_features hold W_last^T)
    bl = b_ref[n_layers - 1]               # [H, 1]
    w_hid = [w_ref[li] for li in range(1, n_layers - 1)]
    b_hid = [b_ref[li] for li in range(1, n_layers - 1)]

    def chunk_body(c, carry):
        x = x_ref[c].astype(f32)                           # [in_f, chunk]

        # --- layer 0: K == in_features (tiny) -> VPU outer-product FMAs.
        h = b0 + w0[:, 0:1] * x[0:1, :]                    # [H, chunk]
        for j in range(1, in_features):
            h = h + w0[:, j:j + 1] * x[j:j + 1, :]
        h = jnp.sin(h)

        # --- hidden layers: [H,H] @ [H,chunk] on the MXU, explicit f32 precision.
        for wi, bi in zip(w_hid, b_hid):
            h = jnp.dot(wi, h, preferred_element_type=f32,
                        precision=jax.lax.Precision.HIGHEST) + bi
            h = jnp.sin(h)

        # --- last layer: N == out_features (tiny) -> VPU multiply + sublane reduce.
        cols = [jnp.sum(h * wl[:, k:k + 1], axis=0, keepdims=True)   # each [1, chunk]
                for k in range(out_features)]
        y = cols[0] if out_features == 1 else jnp.concatenate(cols, axis=0)
        y = y + bl[0:out_features, :]                      # [out_f, chunk]
        o_ref[c] = y.astype(o_ref.dtype)                   # lane-dense store
        return carry

    jax.lax.fori_loop(0, n_chunks, chunk_body, 0)


def _num_tensorcores() -> int:
    """Best-effort TensorCore count of the local chip (perf heuristic only)."""
    try:
        info = pltpu.get_tpu_info()
        for name in ("num_cores", "core_count", "num_tensorcores",
                     "tensorcore_count", "cores_per_chip"):
            v = getattr(info, name, None)
            if isinstance(v, int) and v > 0:
                return min(v, 2)
    except Exception:
        pass
    try:
        kind = jax.devices()[0].device_kind.lower()
        if "v7" in kind:
            return 2
    except Exception:
        pass
    return 1


def _choose_tiling(n: int, max_tm: int, num_cores: int):
    """Pick (tm, grid, n_pad, chunk) for the batch (lane) axis.

    Big tiles amortize the ~0.35us per-grid-step overhead.  The tile is split
    across grid steps only when the chip has >=2 TensorCores AND there is
    enough work (>=1024 rows); the grid is then kept even so both TCs get the
    same number of steps.  Inside each tile, 'chunk' is the lane width the
    kernel processes per inner-loop iteration (intermediates stay in vregs).
    """
    lanes = 128
    tm_cap = lanes * max(1, max_tm // lanes)
    lane_groups = pl.cdiv(n, lanes)

    if num_cores >= 2 and lane_groups >= 8:
        grid = max(2, pl.cdiv(lane_groups * lanes, tm_cap))
        grid += grid % 2                          # even grid -> equal steps per TC
        gps = pl.cdiv(lane_groups, grid)          # lane groups per step
        gps = 4 * pl.cdiv(gps, 4)                 # step = multiple of 512 lanes
        tm = min(tm_cap, lanes * gps)
        grid = pl.cdiv(lanes * lane_groups, tm)
    else:
        tm = min(tm_cap, lanes * lane_groups)     # single-TC: one big tile if possible
        grid = pl.cdiv(lanes * lane_groups, tm)

    # Largest of 512/384/256/128 lanes dividing tm (keeps [H, chunk] f32 in vregs).
    chunk = tm
    for cand in (512, 384, 256, 128):
        if tm % cand == 0:
            chunk = cand
            break

    n_pad = grid * tm
    return tm, grid, n_pad, chunk


def pack_fcn_params(weights, biases):
    """Pack per-layer torch-layout params into two zero-padded slabs (call ONCE)."""
    n_layers = len(weights)
    assert n_layers >= 2, "need at least one hidden layer + output layer"
    H = weights[0].shape[0]
    in_f = weights[0].shape[1]
    out_f = weights[-1].shape[0]
    for w in weights[1:-1]:
        assert w.shape == (H, H), "uniform hidden width required by the packed slab"
    assert weights[-1].shape == (out_f, H)
    assert in_f <= H and out_f <= H

    w_slab = jnp.zeros((n_layers, H, H), jnp.float32)
    b_slab = jnp.zeros((n_layers, H, 1), jnp.float32)
    for i, (w, b) in enumerate(zip(weights, biases)):
        wf = jnp.asarray(w, jnp.float32)
        if i == n_layers - 1:
            w_slab = w_slab.at[i, :wf.shape[1], :wf.shape[0]].set(wf.T)  # W_last^T
        else:
            w_slab = w_slab.at[i, :wf.shape[0], :wf.shape[1]].set(wf)
        b_slab = b_slab.at[i, :b.shape[0], 0].set(jnp.asarray(b, jnp.float32))
    return w_slab, b_slab


@functools.partial(jax.jit, static_argnames=("in_features", "out_features", "max_tm"))
def fcn_forward_packed(x, w_slab, b_slab, *, in_features, out_features,
                       max_tm: int = 16384):
    """x: [N, in_features]; slabs from pack_fcn_params. Returns [N, out_features]."""
    n = x.shape[0]
    assert x.shape[1] == in_features
    n_layers, H, _ = w_slab.shape

    num_cores = _num_tensorcores()
    tm, grid_n, n_pad, chunk = _choose_tiling(n, max_tm, num_cores)
    n_chunks_total = n_pad // chunk
    n_chunks_step = tm // chunk

    # Host-side layout: pad batch, then chunk it -> [n_chunks, in_f, chunk]
    # (features on sublanes, batch on lanes; leading axis indexed in-kernel).
    x_pad = jnp.pad(x.astype(jnp.float32), ((0, n_pad - n), (0, 0)))
    x_chunks = x_pad.reshape(n_chunks_total, chunk, in_features).transpose(0, 2, 1)

    kernel = functools.partial(_fcn_kernel, n_layers, in_features, out_features,
                               n_chunks_step)

    flops = 2 * n_pad * (in_features * H + (n_layers - 2) * H * H + H * out_features)
    transcendentals = (n_layers - 1) * H * n_pad        # dominant cost: sin
    bytes_accessed = 4 * (n_pad * (in_features + out_features)
                          + w_slab.size + b_slab.size)

    out_chunks = pl.pallas_call(
        kernel,
        out_shape=jax.ShapeDtypeStruct((n_chunks_total, out_features, chunk), x.dtype),
        grid_spec=pltpu.PrefetchScalarGridSpec(
            num_scalar_prefetch=0,
            grid=(grid_n,),
            in_specs=[
                pl.BlockSpec((n_layers, H, H), lambda i: (0, 0, 0)),        # weights
                pl.BlockSpec((n_layers, H, 1), lambda i: (0, 0, 0)),        # biases
                pl.BlockSpec((n_chunks_step, in_features, chunk),
                             lambda i: (i, 0, 0)),                          # x tile
            ],
            out_specs=pl.BlockSpec((n_chunks_step, out_features, chunk),
                                   lambda i: (i, 0, 0)),                    # out tile
        ),
        compiler_params=pltpu.CompilerParams(
            dimension_semantics=("parallel",)),
        cost_estimate=pl.CostEstimate(
            flops=flops, transcendentals=transcendentals,
            bytes_accessed=bytes_accessed),
    )(w_slab, b_slab, x_chunks)

    out = out_chunks.transpose(0, 2, 1).reshape(n_pad, out_features)
    return out[:n]


def fcn_forward(x, weights, biases, *, max_tm: int = 16384):
    """Convenience wrapper (packs params per call; prefer pack_fcn_params once)."""
    w_slab, b_slab = pack_fcn_params(weights, biases)
    return fcn_forward_packed(x, w_slab, b_slab,
                              in_features=weights[0].shape[1],
                              out_features=weights[-1].shape[0],
                              max_tm=max_tm)


def init_fcn_params(key, in_features: int, hidden, out_features: int):
    """torch.nn.Linear-style init: W [out,in], b [out], U(-1/sqrt(fan_in), +)."""
    if isinstance(hidden, int):
        hidden = [hidden] * 4
    sizes = [in_features] + list(hidden) + [out_features]
    weights, biases = [], []
    for fan_in, fan_out in zip(sizes[:-1], sizes[1:]):
        key, kw, kb = jax.random.split(key, 3)
        bound = 1.0 / float(fan_in) ** 0.5
        w = jax.random.uniform(kw, (fan_out, fan_in), jnp.float32, -bound, bound)
        b = jax.random.uniform(kb, (fan_out,), jnp.float32, -bound, bound)
        weights.append(w)
        biases.append(b)
    return weights, biases


def fcn_reference(x, weights, biases):
    h = x
    for li, (w, b) in enumerate(zip(weights, biases)):
        h = jnp.dot(h, w.T, precision=jax.lax.Precision.HIGHEST) + b
        if li < len(weights) - 1:
            h = jnp.sin(h)
    return h


if __name__ == "__main__":
    key = jax.random.PRNGKey(0)

    # PINN-like shapes: 2 input coords (x, t), 4 hidden layers of 32, 1 output.
    in_features, hidden, out_features = 2, 32, 1

    kx, kp = jax.random.split(key)
    weights, biases = init_fcn_params(kp, in_features, hidden, out_features)
    w_slab, b_slab = pack_fcn_params(weights, biases)      # hoisted: packed once

    # (batch, max_tm):
    #   256   -> single-TC chips: tm=256, grid=1, chunk=256
    #   1000  -> tm=1024, grid=1, chunk=512 (2 inner chunks; pads 1000->1024)
    #   1000 + max_tm=256 -> tm=256, grid=4 (exercises the multi-step pipeline)
    for batch, max_tm in ((256, 16384), (1000, 16384), (1000, 256)):
        kx, kxi = jax.random.split(kx)
        x = jax.random.normal(kxi, (batch, in_features), jnp.float32)
        out = jax.block_until_ready(
            fcn_forward_packed(x, w_slab, b_slab,
                               in_features=in_features,
                               out_features=out_features,
                               max_tm=max_tm))
        ref = fcn_reference(x, weights, biases)
        assert out.shape == (batch, out_features)
        assert jnp.allclose(out, ref, atol=2e-5, rtol=2e-5), (
            f"Pallas output mismatch for batch={batch}, max_tm={max_tm}")

    print("KERNEL_OK")
</pallas_src>

<mosaic_0001>
module attributes {stable_mosaic.version = 11 : i64} {
  func.func @_fcn_kernel(%arg0: i32, %arg1: memref<5x32x32xf32, #tpu.memory_space<vmem>>, %arg2: memref<5x32x1xf32, #tpu.memory_space<vmem>>, %arg3: memref<1x2x256xf32, #tpu.memory_space<vmem>>, %arg4: memref<1x1x256xf32, #tpu.memory_space<vmem>>) attributes {dimension_semantics = [#tpu.dimension_semantics<parallel>], iteration_bounds = array<i64: 1>, scalar_prefetch = 0 : i64, scratch_operands = 0 : i64, tpu.core_type = #tpu.core_type<tc>, window_params = [{pipeline_mode = #tpu.pipeline_mode<synchronous>, transform_indices = @transform_0, window_bounds = array<i64: 5, 32, 32>}, {pipeline_mode = #tpu.pipeline_mode<synchronous>, transform_indices = @transform_1, window_bounds = array<i64: 5, 32, 1>}, {transform_indices = @transform_2, window_bounds = array<i64: 1, 2, 256>}, {transform_indices = @transform_3, window_bounds = array<i64: 1, 1, 256>}]} {
    %c0 = arith.constant 0 : index
    %c0_0 = arith.constant 0 : index
    %c0_1 = arith.constant 0 : index
    %0 = vector.load %arg1[%c0, %c0_0, %c0_1] : memref<5x32x32xf32, #tpu.memory_space<vmem>>, vector<1x32x32xf32>
    %1 = vector.shape_cast %0 : vector<1x32x32xf32> to vector<32x32xf32>
    %c0_2 = arith.constant 0 : index
    %c0_3 = arith.constant 0 : index
    %c0_4 = arith.constant 0 : index
    %2 = vector.load %arg2[%c0_2, %c0_3, %c0_4] : memref<5x32x1xf32, #tpu.memory_space<vmem>>, vector<1x32x1xf32>
    %3 = vector.shape_cast %2 : vector<1x32x1xf32> to vector<32x1xf32>
    %c4 = arith.constant 4 : index
    %c0_5 = arith.constant 0 : index
    %c0_6 = arith.constant 0 : index
    %4 = vector.load %arg1[%c4, %c0_5, %c0_6] : memref<5x32x32xf32, #tpu.memory_space<vmem>>, vector<1x32x32xf32>
    %5 = vector.shape_cast %4 : vector<1x32x32xf32> to vector<32x32xf32>
    %c4_7 = arith.constant 4 : index
    %c0_8 = arith.constant 0 : index
    %c0_9 = arith.constant 0 : index
    %6 = vector.load %arg2[%c4_7, %c0_8, %c0_9] : memref<5x32x1xf32, #tpu.memory_space<vmem>>, vector<1x32x1xf32>
    %7 = vector.shape_cast %6 : vector<1x32x1xf32> to vector<32x1xf32>
    %c1 = arith.constant 1 : index
    %c0_10 = arith.constant 0 : index
    %c0_11 = arith.constant 0 : index
    %8 = vector.load %arg1[%c1, %c0_10, %c0_11] : memref<5x32x32xf32, #tpu.memory_space<vmem>>, vector<1x32x32xf32>
    %9 = vector.shape_cast %8 : vector<1x32x32xf32> to vector<32x32xf32>
    %c2 = arith.constant 2 : index
    %c0_12 = arith.constant 0 : index
    %c0_13 = arith.constant 0 : index
    %10 = vector.load %arg1[%c2, %c0_12, %c0_13] : memref<5x32x32xf32, #tpu.memory_space<vmem>>, vector<1x32x32xf32>
    %11 = vector.shape_cast %10 : vector<1x32x32xf32> to vector<32x32xf32>
    %c3 = arith.constant 3 : index
    %c0_14 = arith.constant 0 : index
    %c0_15 = arith.constant 0 : index
    %12 = vector.load %arg1[%c3, %c0_14, %c0_15] : memref<5x32x32xf32, #tpu.memory_space<vmem>>, vector<1x32x32xf32>
    %13 = vector.shape_cast %12 : vector<1x32x32xf32> to vector<32x32xf32>
    %c1_16 = arith.constant 1 : index
    %c0_17 = arith.constant 0 : index
    %c0_18 = arith.constant 0 : index
    %14 = vector.load %arg2[%c1_16, %c0_17, %c0_18] : memref<5x32x1xf32, #tpu.memory_space<vmem>>, vector<1x32x1xf32>
    %15 = vector.shape_cast %14 : vector<1x32x1xf32> to vector<32x1xf32>
    %c2_19 = arith.constant 2 : index
    %c0_20 = arith.constant 0 : index
    %c0_21 = arith.constant 0 : index
    %16 = vector.load %arg2[%c2_19, %c0_20, %c0_21] : memref<5x32x1xf32, #tpu.memory_space<vmem>>, vector<1x32x1xf32>
    %17 = vector.shape_cast %16 : vector<1x32x1xf32> to vector<32x1xf32>
    %c3_22 = arith.constant 3 : index
    %c0_23 = arith.constant 0 : index
    %c0_24 = arith.constant 0 : index
    %18 = vector.load %arg2[%c3_22, %c0_23, %c0_24] : memref<5x32x1xf32, #tpu.memory_space<vmem>>, vector<1x32x1xf32>
    %19 = vector.shape_cast %18 : vector<1x32x1xf32> to vector<32x1xf32>
    %c0_i32 = arith.constant 0 : i32
    %20 = arith.index_cast %c0_i32 : i32 to index
    %c0_25 = arith.constant 0 : index
    %c0_26 = arith.constant 0 : index
    %21 = vector.load %arg3[%20, %c0_25, %c0_26] : memref<1x2x256xf32, #tpu.memory_space<vmem>>, vector<1x2x256xf32>
    %22 = vector.shape_cast %21 : vector<1x2x256xf32> to vector<2x256xf32>
    %23 = vector.extract_strided_slice %1 {offsets = [0, 0], sizes = [32, 1], strides = [1, 1]} : vector<32x32xf32> to vector<32x1xf32>
    %24 = vector.extract_strided_slice %22 {offsets = [0, 0], sizes = [1, 256], strides = [1, 1]} : vector<2x256xf32> to vector<1x256xf32>
    %25 = vector.broadcast %23 : vector<32x1xf32> to vector<32x256xf32>
    %26 = vector.broadcast %24 : vector<1x256xf32> to vector<32x256xf32>
    %27 = arith.mulf %25, %26 : vector<32x256xf32>
    %28 = vector.broadcast %3 : vector<32x1xf32> to vector<32x256xf32>
    %29 = arith.addf %28, %27 : vector<32x256xf32>
    %30 = vector.extract_strided_slice %1 {offsets = [0, 1], sizes = [32, 1], strides = [1, 1]} : vector<32x32xf32> to vector<32x1xf32>
    %31 = vector.extract_strided_slice %22 {offsets = [1, 0], sizes = [1, 256], strides = [1, 1]} : vector<2x256xf32> to vector<1x256xf32>
    %32 = vector.broadcast %30 : vector<32x1xf32> to vector<32x256xf32>
    %33 = vector.broadcast %31 : vector<1x256xf32> to vector<32x256xf32>
    %34 = arith.mulf %32, %33 : vector<32x256xf32>
    %35 = arith.addf %29, %34 : vector<32x256xf32>
    %36 = math.sin %35 : vector<32x256xf32>
    %cst = arith.constant dense<0.000000e+00> : vector<32x256xf32>
    %37 = tpu.matmul %9, %36, %cst {dimension_numbers = #tpu.dot_dimension_numbers<[1], [0], [0], [1], [0, 0, 1, 1], [], []>, precision = #tpu.contract_precision<fp32>} : vector<32x32xf32>, vector<32x256xf32>, vector<32x256xf32> -> vector<32x256xf32>
    %38 = vector.broadcast %15 : vector<32x1xf32> to vector<32x256xf32>
    %39 = arith.addf %37, %38 : vector<32x256xf32>
    %40 = math.sin %39 : vector<32x256xf32>
    %cst_27 = arith.constant dense<0.000000e+00> : vector<32x256xf32>
    %41 = tpu.matmul %11, %40, %cst_27 {dimension_numbers = #tpu.dot_dimension_numbers<[1], [0], [0], [1], [0, 0, 1, 1], [], []>, precision = #tpu.contract_precision<fp32>} : vector<32x32xf32>, vector<32x256xf32>, vector<32x256xf32> -> vector<32x256xf32>
    %42 = vector.broadcast %17 : vector<32x1xf32> to vector<32x256xf32>
    %43 = arith.addf %41, %42 : vector<32x256xf32>
    %44 = math.sin %43 : vector<32x256xf32>
    %cst_28 = arith.constant dense<0.000000e+00> : vector<32x256xf32>
    %45 = tpu.matmul %13, %44, %cst_28 {dimension_numbers = #tpu.dot_dimension_numbers<[1], [0], [0], [1], [0, 0, 1, 1], [], []>, precision = #tpu.contract_precision<fp32>} : vector<32x32xf32>, vector<32x256xf32>, vector<32x256xf32> -> vector<32x256xf32>
    %46 = vector.broadcast %19 : vector<32x1xf32> to vector<32x256xf32>
    %47 = arith.addf %45, %46 : vector<32x256xf32>
    %48 = math.sin %47 : vector<32x256xf32>
    %49 = vector.extract_strided_slice %5 {offsets = [0, 0], sizes = [32, 1], strides = [1, 1]} : vector<32x32xf32> to vector<32x1xf32>
    %50 = vector.broadcast %49 : vector<32x1xf32> to vector<32x256xf32>
    %51 = arith.mulf %48, %50 : vector<32x256xf32>
    %cst_29 = arith.constant dense<0.000000e+00> : vector<256xf32>
    %52 = vector.multi_reduction <add>, %51, %cst_29 [0] : vector<32x256xf32> to vector<256xf32>
    %53 = vector.shape_cast %52 : vector<256xf32> to vector<1x256xf32>
    %54 = vector.extract_strided_slice %7 {offsets = [0, 0], sizes = [1, 1], strides = [1, 1]} : vector<32x1xf32> to vector<1x1xf32>
    %55 = vector.broadcast %54 : vector<1x1xf32> to vector<1x256xf32>
    %56 = arith.addf %53, %55 : vector<1x256xf32>
    %57 = arith.index_cast %c0_i32 : i32 to index
    %c0_30 = arith.constant 0 : index
    %c0_31 = arith.constant 0 : index
    %58 = vector.load %arg4[%57, %c0_30, %c0_31] : memref<1x1x256xf32, #tpu.memory_space<vmem>>, vector<1x1x256xf32>
    %59 = vector.shape_cast %58 : vector<1x1x256xf32> to vector<1x256xf32>
    %60 = vector.shape_cast %56 : vector<1x256xf32> to vector<1x1x256xf32>
    tpu.vector_store %arg4[%57, %c0_30, %c0_31], %60 {strides = array<i32>} : memref<1x1x256xf32, #tpu.memory_space<vmem>>, vector<1x1x256xf32>,
    %c1_i32 = arith.constant 1 : i32
    return
  }
  func.func @transform_0(%arg0: i32) -> (i32, i32, i32) {
    %c0_i32 = arith.constant 0 : i32
    %c0_i32_0 = arith.constant 0 : i32
    %c0_i32_1 = arith.constant 0 : i32
    %c0_i32_2 = arith.constant 0 : i32
    return %c0_i32, %c0_i32_0, %c0_i32_1 : i32, i32, i32
  }
  func.func @transform_1(%arg0: i32) -> (i32, i32, i32) {
    %c0_i32 = arith.constant 0 : i32
    %c0_i32_0 = arith.constant 0 : i32
    %c0_i32_1 = arith.constant 0 : i32
    %c0_i32_2 = arith.constant 0 : i32
    return %c0_i32, %c0_i32_0, %c0_i32_1 : i32, i32, i32
  }
  func.func @transform_2(%arg0: i32) -> (i32, i32, i32) {
    %c0_i32 = arith.constant 0 : i32
    %c0_i32_0 = arith.constant 0 : i32
    %c0_i32_1 = arith.constant 0 : i32
    return %arg0, %c0_i32, %c0_i32_0 : i32, i32, i32
  }
  func.func @transform_3(%arg0: i32) -> (i32, i32, i32) {
    %c0_i32 = arith.constant 0 : i32
    %c0_i32_0 = arith.constant 0 : i32
    %c0_i32_1 = arith.constant 0 : i32
    return %arg0, %c0_i32, %c0_i32_0 : i32, i32, i32
  }
}

</mosaic_0001>

<llo_original>
// kernel: fcn_forward_packed.1
$region0: #{fcn_forward_packed.1}
  #allocation0 [shape = 'u32[]', space=smem, size = 0x4, offset = 0x4, fixed_abs, tag = 'smem constant byte address 0x4 - core index']
  #allocation1 [shape = 'u32[144,128]{1,0:T(1,128)}', space=vmem, size = 0x12000, scoped, tag = 'internal scratch']
  %s0 = inlined_call_operand.vmem [shape: f32[5,32,32], index: 0, kind: input, shape index: {}]
  %s1 = inlined_call_operand.vmem [shape: f32[5,32,1], index: 1, kind: input, shape index: {}]
  %s2 = inlined_call_operand.vmem [shape: f32[1,2,256], index: 2, kind: input, shape index: {}]
  %s3 = inlined_call_operand.hbm [shape: f32[1,1,256], index: 3, kind: output, shape index: {}]
  %s4 = sld [smem:[#allocation0]]
  $region22: #{fcn_forward_packed.1} parent=0
    _
  %s6 = ssub.s32 1, %s4
  %s7 = scalar_select 0, %s6, %s4
  $region1: #{fcn_forward_packed.1} parent=0
    #allocation2 [shape = 'u8[1024]{0}', space=vmem, size = 0x400, scoped, tag = 'output window, operand 0, single buffered']
    #allocation3 [shape = 's32[1]{0}', space=sflag, size = 0x4, scoped, tag = 'scoped memory for fcn_forward_packed.1']
    %8 = vsyncpa [#allocation3], 0
    // Predicated region
    $region2: #{fcn_forward_packed.1} parent=1 // pred_check
      _
    $region3: #{fcn_forward_packed.1} parent=1 // pred_check_branch
      %10 = sbr.rel (0) target = $region5
    $region4: #{fcn_forward_packed.1} parent=1 // pred_region
      _
    $region5: #{fcn_forward_packed.1} parent=1 // pred_fallthru
      _
    // Predicated region
    $region6: #{fcn_forward_packed.1} parent=1 // pred_check
      _
    $region7: #{fcn_forward_packed.1} parent=1 // pred_check_branch
      %12 = sbr.rel (0) target = $region9
    $region8: #{fcn_forward_packed.1} parent=1 // pred_region
      _
    $region9: #{fcn_forward_packed.1} parent=1 // pred_fallthru
      _
    // Predicated region
    $region10: #{fcn_forward_packed.1} parent=1 // pred_check
      _
    $region11: #{fcn_forward_packed.1} parent=1 // pred_check_branch
      %14 = sbr.rel (0) target = $region13
    $region12: #{fcn_forward_packed.1} parent=1 // pred_region
      _
    $region13: #{fcn_forward_packed.1} parent=1 // pred_fallthru
      _
    %v15 = vld [vmem:[%s0] sm:$0xff]
    %v16 = vld [vmem:[%s0 + $0x8] sm:$0xff]
    %v17 = vld [vmem:[%s0 + $0x10] sm:$0xff]
    %v18 = vld [vmem:[%s0 + $0x18] sm:$0xff]
    %v19 = vld [vmem:[%s1] sm:$0xff]
    %v20 = vld [vmem:[%s1 + $0x8] sm:$0xff]
    %v21 = vld [vmem:[%s1 + $0x10] sm:$0xff]
    %v22 = vld [vmem:[%s1 + $0x18] sm:$0xff]
    %s23 = scalar_lea.vmem %s0, 128
    %v24 = vld [vmem:[%s23] sm:$0xff]
    %v25 = vld [vmem:[%s23 + $0x8] sm:$0xff]
    %v26 = vld [vmem:[%s23 + $0x10] sm:$0xff]
    %v27 = vld [vmem:[%s23 + $0x18] sm:$0xff]
    %s28 = scalar_lea.vmem %s1, 128
    %v29 = vld [vmem:[%s28] sm:$0xff]
    %s30 = scalar_lea.vmem %s0, 32
    %v31 = vld [vmem:[%s30] sm:$0xff]
    %v32 = vld [vmem:[%s30 + $0x8] sm:$0xff]
    %v33 = vld [vmem:[%s30 + $0x10] sm:$0xff]
    %v34 = vld [vmem:[%s30 + $0x18] sm:$0xff]
    %s35 = scalar_lea.vmem %s0, 64
    %v36 = vld [vmem:[%s35] sm:$0xff]
    %v37 = vld [vmem:[%s35 + $0x8] sm:$0xff]
    %v38 = vld [vmem:[%s35 + $0x10] sm:$0xff]
    %v39 = vld [vmem:[%s35 + $0x18] sm:$0xff]
    %s40 = scalar_lea.vmem %s0, 96
    %v41 = vld [vmem:[%s40] sm:$0xff]
    %v42 = vld [vmem:[%s40 + $0x8] sm:$0xff]
    %v43 = vld [vmem:[%s40 + $0x10] sm:$0xff]
    %v44 = vld [vmem:[%s40 + $0x18] sm:$0xff]
    %s45 = scalar_lea.vmem %s1, 32
    %v46 = vld [vmem:[%s45] sm:$0xff]
    %v47 = vld [vmem:[%s45 + $0x8] sm:$0xff]
    %v48 = vld [vmem:[%s45 + $0x10] sm:$0xff]
    %v49 = vld [vmem:[%s45 + $0x18] sm:$0xff]
    %s50 = scalar_lea.vmem %s1, 64
    %v51 = vld [vmem:[%s50] sm:$0xff]
    %v52 = vld [vmem:[%s50 + $0x8] sm:$0xff]
    %v53 = vld [vmem:[%s50 + $0x10] sm:$0xff]
    %v54 = vld [vmem:[%s50 + $0x18] sm:$0xff]
    %s55 = scalar_lea.vmem %s1, 96
    %v56 = vld [vmem:[%s55] sm:$0xff]
    %v57 = vld [vmem:[%s55 + $0x8] sm:$0xff]
    %v58 = vld [vmem:[%s55 + $0x10] sm:$0xff]
    %v59 = vld [vmem:[%s55 + $0x18] sm:$0xff]
    %v60 = vld [vmem:[%s2] sm:$0xf]
    %62 = vset.pattern.permute.xlu0 0
    %63 = vperm.xlu0 %62, %v15
    %v64 = vpop.permute.xlu0 %63
    %67 = vset.pattern.permute.xlu0 0
    %68 = vperm.xlu0 %67, %v16
    %v69 = vpop.permute.xlu0 %68
    %72 = vset.pattern.permute.xlu0 0
    %73 = vperm.xlu0 %72, %v17
    %v74 = vpop.permute.xlu0 %73
    %77 = vset.pattern.permute.xlu0 0
    %78 = vperm.xlu0 %77, %v18
    %v79 = vpop.permute.xlu0 %78
    %v82 = vlaneseq
    %v83 = vshrl.u32 %v82, 7
    %v84 = vsub.s32 0, %v83
    %v85 = vrot.slane %v60, %v84
    %v86 = vlaneseq
    %v87 = vshrl.u32 %v86, 7
    %v88 = vsub.s32 2, %v87
    %v89 = vrot.slane %v60, %v88
    %v92 = vlaneseq
    %v93 = vshrl.u32 %v92, 7
    %v94 = vsub.s32 0, %v93
    %v95 = vrot.slane %v85, %v94
    %v96 = vlaneseq
    %v97 = vshrl.u32 %v96, 7
    %v98 = vsub.s32 0, %v97
    %v99 = vrot.slane %v89, %v98
    %v100 = vmul.f32 %v64, %v95
    %v101 = vmul.f32 %v64, %v99
    %v102 = vmul.f32 %v69, %v95
    %v103 = vmul.f32 %v69, %v99
    %v104 = vmul.f32 %v74, %v95
    %v105 = vmul.f32 %v74, %v99
    %v106 = vmul.f32 %v79, %v95
    %v107 = vmul.f32 %v79, %v99
    %109 = vset.pattern.permute.xlu0 0
    %110 = vperm.xlu0 %109, %v19
    %v111 = vpop.permute.xlu0 %110
    %114 = vset.pattern.permute.xlu0 0
    %115 = vperm.xlu0 %114, %v20
    %v116 = vpop.permute.xlu0 %115
    %119 = vset.pattern.permute.xlu0 0
    %120 = vperm.xlu0 %119, %v21
    %v121 = vpop.permute.xlu0 %120
    %124 = vset.pattern.permute.xlu0 0
    %125 = vperm.xlu0 %124, %v22
    %v126 = vpop.permute.xlu0 %125
    %v128 = vadd.f32 %v111, %v100
    %v129 = vadd.f32 %v111, %v101
    %v130 = vadd.f32 %v116, %v102
    %v131 = vadd.f32 %v116, %v103
    %v132 = vadd.f32 %v121, %v104
    %v133 = vadd.f32 %v121, %v105
    %v134 = vadd.f32 %v126, %v106
    %v135 = vadd.f32 %v126, %v107
    %136 = vset.pattern.permute.xlu0 1
    %137 = vperm.xlu0 %136, %v15
    %v138 = vpop.permute.xlu0 %137
    %140 = vset.pattern.permute.xlu0 1
    %141 = vperm.xlu0 %140, %v16
    %v142 = vpop.permute.xlu0 %141
    %144 = vset.pattern.permute.xlu0 1
    %145 = vperm.xlu0 %144, %v17
    %v146 = vpop.permute.xlu0 %145
    %148 = vset.pattern.permute.xlu0 1
    %149 = vperm.xlu0 %148, %v18
    %v150 = vpop.permute.xlu0 %149
    %v152 = vlaneseq
    %v153 = vshrl.u32 %v152, 7
    %v154 = vsub.s32 1, %v153
    %v155 = vrot.slane %v60, %v154
    %v156 = vlaneseq
    %v157 = vshrl.u32 %v156, 7
    %v158 = vsub.s32 3, %v157
    %v159 = vrot.slane %v60, %v158
    %v162 = vlaneseq
    %v163 = vshrl.u32 %v162, 7
    %v164 = vsub.s32 1, %v163
    %v165 = vrot.slane %v155, %v164
    %v166 = vlaneseq
    %v167 = vshrl.u32 %v166, 7
    %v168 = vsub.s32 1, %v167
    %v169 = vrot.slane %v159, %v168
    %v170 = vmul.f32 %v138, %v165
    %v171 = vmul.f32 %v138, %v169
    %v172 = vmul.f32 %v142, %v165
    %v173 = vmul.f32 %v142, %v169
    %v174 = vmul.f32 %v146, %v165
    %v175 = vmul.f32 %v146, %v169
    %v176 = vmul.f32 %v150, %v165
    %v177 = vmul.f32 %v150, %v169
    %v178 = vadd.f32 %v128, %v170
    %v179 = vadd.f32 %v129, %v171
    %v180 = vadd.f32 %v130, %v172
    %v181 = vadd.f32 %v131, %v173
    %v182 = vadd.f32 %v132, %v174
    %v183 = vadd.f32 %v133, %v175
    %v184 = vadd.f32 %v134, %v176
    %v185 = vadd.f32 %v135, %v177
    %v186 = vand.u32 2147483647, %v178
    %vm187 = vcmp.le.f32.partialorder %v186, 0.7853982
    %vm188 = vcmp.lt.s32.totalorder %v178, 0
    %v189 = vand.u32 %v178, 2139095040
    %v190 = vshrl.u32 %v189, 23
    %v191 = vsub.s32 %v190, 127
    %v192 = vand.u32 2147483647, %v178
    %v193 = vand.u32 %v192, 8388607
    %v194 = vor.u32 %v193, 8388608
    %v195 = vsub.s32 0, %v194
    %v196 = vadd.s32 %v191, 1
    %vm197 = vcmp.gt.s32.totalorder %v196, 0
    %v198 = vsel %vm197, %v196, 0
    %v199 = vshrl.u32 %v198, 5
    %v200 = vand.u32 %v198, 31
    %v201 = vsub.s32 32, %v200
    %v202 = vshrl.u32 683565275, %v201
    %v203 = vshll.u32 683565275, %v200
    %v204 = vshrl.u32 2475754826, %v201
    %v205 = vor.u32 %v203, %v204
    %v206 = vshll.u32 2475754826, %v200
    %v207 = vshrl.u32 2131351028, %v201
    %v208 = vor.u32 %v206, %v207
    %v209 = vshll.u32 2131351028, %v200
    %v210 = vshrl.u32 2102212464, %v201
    %v211 = vor.u32 %v209, %v210
    %v212 = vshll.u32 2102212464, %v200
    %v213 = vshrl.u32 920167782, %v201
    %v214 = vor.u32 %v212, %v213
    %v215 = vshll.u32 920167782, %v200
    %v216 = vshrl.u32 1326507024, %v201
    %v217 = vor.u32 %v215, %v216
    %vm218 = vcmp.lt.s32.totalorder %v199, 1
    %vm219 = vcmp.lt.s32.totalorder %v199, 2
    %vm220 = vcmp.lt.s32.totalorder %v199, 3
    %vm221 = vcmp.lt.s32.totalorder %v199, 4
    %v222 = vsel %vm218, %v202, %v205
    %v223 = vsel %vm221, %v211, 2102212464
    %v224 = vsel %vm220, %v208, %v223
    %v225 = vsel %vm219, %v222, %v224
    %v226 = vsel %vm218, %v205, %v208
    %v227 = vsel %vm221, %v214, 920167782
    %v228 = vsel %vm220, %v211, %v227
    %v229 = vsel %vm219, %v226, %v228
    %v230 = vsel %vm218, %v208, %v211
    %v231 = vsel %vm221, %v217, 1326507024
    %v232 = vsel %vm220, %v214, %v231
    %v233 = vsel %vm219, %v230, %v232
    %v234 = vshll.u32 %v194, 8
    %v235 = vmul.u32.u64.compose %v234, %v233
    %v236 = vextract.low.u32 %v235
    %v237 = vextract.high.u32 %v235
    %v238 = vmul.u32.u64.compose %v234, %v229
    %v239 = vextract.low.u32 %v238
    %v240 = vextract.high.u32 %v238
    %v241 = vmul.u32 %v234, %v225
    %v242 = vadd.s32 %v237, %v239
    %vm243 = vc.u32 %v237, %v239
    %v244 = vadd.s32 %v240, 1
    %v245 = vsel %vm243, %v244, %v240
    %v246 = vadd.s32 %v241, %v245
    %v247 = vadd.s32 %v246, 536870912
    %v248 = vshrl.u32 %v247, 30
    %v249 = vshll.u32 %v248, 30
    %v250 = vsub.s32 %v246, %v249
    %vm251 = vcmp.lt.s32.totalorder %v250, 0
    %v252 = vsub.s32 0, %v250
    %v253 = vsel %vm251, %v252, %v250
    %v254 = vclz %v253
    %v255 = vsub.s32 %v254, 2
    %vm256 = vcmp.gt.s32.totalorder 0, %v255
    %v257 = vsel %vm256, 0, %v255
    %v258 = vsub.s32 32, %v257
    %v259 = vshll.u32 %v250, %v257
    %v260 = vshrl.u32 %v242, %v258
    %v261 = vor.u32 %v259, %v260
    %v262 = vsub.s32 4294967266, %v257
    %v263 = vadd.s32 %v262, 127
    %v264 = vshll.u32 %v263, 23
    %v265 = vor.u32 4788187, %v264
    %v266 = vand.u32 2147483647, %v265
    %v268 = vcvt.s32.f32 %v261
    %v269 = vmul.f32 %v268, %v266
    %v270 = vxor.u32 %v269, 2147483648
    %v271 = vsel %vm188, %v270, %v269
    %v272 = vsub.s32 4, %v248
    %v273 = vsel %vm188, %v272, %v248
    %v274 = vsel %vm187, %v178, %v271
    %v275 = vsel %vm187, 0, %v273
    %v276 = vcosq.f32.pop %v274
    %v277 = vsinq.f32.pop %v274
    %vm278 = vweird.f32 %v178
    %v279 = vadd.s32 %v275, 3
    %v280 = vand.u32 %v279, 3
    %vm281 = vcmp.lt.s32.totalorder %v280, 2
    %vm282 = vcmp.eq.s32.totalorder %v280, 0
    %v283 = vxor.u32 %v277, 2147483648
    %v284 = vsel %vm282, %v276, %v283
    %vm285 = vcmp.eq.s32.totalorder %v280, 2
    %v286 = vxor.u32 %v276, 2147483648
    %v287 = vsel %vm285, %v286, %v277
    %v288 = vsel %vm281, %v284, %v287
    %v289 = vsel %vm278, nan, %v288
    %v290 = vand.u32 2147483647, %v179
    %vm291 = vcmp.le.f32.partialorder %v290, 0.7853982
    %vm292 = vcmp.lt.s32.totalorder %v179, 0
    %v293 = vand.u32 %v179, 2139095040
    %v294 = vshrl.u32 %v293, 23
    %v295 = vsub.s32 %v294, 127
    %v296 = vand.u32 2147483647, %v179
    %v297 = vand.u32 %v296, 8388607
    %v298 = vor.u32 %v297, 8388608
    %v299 = vsub.s32 0, %v298
    %v300 = vadd.s32 %v295, 1
    %vm301 = vcmp.gt.s32.totalorder %v300, 0
    %v302 = vsel %vm301, %v300, 0
    %v303 = vshrl.u32 %v302, 5
    %v304 = vand.u32 %v302, 31
    %v305 = vsub.s32 32, %v304
    %v306 = vshrl.u32 683565275, %v305
    %v307 = vshll.u32 683565275, %v304
    %v308 = vshrl.u32 2475754826, %v305
    %v309 = vor.u32 %v307, %v308
    %v310 = vshll.u32 2475754826, %v304
    %v311 = vshrl.u32 2131351028, %v305
    %v312 = vor.u32 %v310, %v311
    %v313 = vshll.u32 2131351028, %v304
    %v314 = vshrl.u32 2102212464, %v305
    %v315 = vor.u32 %v313, %v314
    %v316 = vshll.u32 2102212464, %v304
    %v317 = vshrl.u32 920167782, %v305
    %v318 = vor.u32 %v316, %v317
    %v319 = vshll.u32 920167782, %v304
    %v320 = vshrl.u32 1326507024, %v305
    %v321 = vor.u32 %v319, %v320
    %vm322 = vcmp.lt.s32.totalorder %v303, 1
    %vm323 = vcmp.lt.s32.totalorder %v303, 2
    %vm324 = vcmp.lt.s32.totalorder %v303, 3
    %vm325 = vcmp.lt.s32.totalorder %v303, 4
    %v326 = vsel %vm322, %v306, %v309
    %v327 = vsel %vm325, %v315, 2102212464
    %v328 = vsel %vm324, %v312, %v327
    %v329 = vsel %vm323, %v326, %v328
    %v330 = vsel %vm322, %v309, %v312
    %v331 = vsel %vm325, %v318, 920167782
    %v332 = vsel %vm324, %v315, %v331
    %v333 = vsel %vm323, %v330, %v332
    %v334 = vsel %vm322, %v312, %v315
    %v335 = vsel %vm325, %v321, 1326507024
    %v336 = vsel %vm324, %v318, %v335
    %v337 = vsel %vm323, %v334, %v336
    %v338 = vshll.u32 %v298, 8
    %v339 = vmul.u32.u64.compose %v338, %v337
    %v340 = vextract.low.u32 %v339
    %v341 = vextract.high.u32 %v339
    %v342 = vmul.u32.u64.compose %v338, %v333
    %v343 = vextract.low.u32 %v342
    %v344 = vextract.high.u32 %v342
    %v345 = vmul.u32 %v338, %v329
    %v346 = vadd.s32 %v341, %v343
    %vm347 = vc.u32 %v341, %v343
    %v348 = vadd.s32 %v344, 1
    %v349 = vsel %vm347, %v348, %v344
    %v350 = vadd.s32 %v345, %v349
    %v351 = vadd.s32 %v350, 536870912
    %v352 = vshrl.u32 %v351, 30
    %v353 = vshll.u32 %v352, 30
    %v354 = vsub.s32 %v350, %v353
    %vm355 = vcmp.lt.s32.totalorder %v354, 0
    %v356 = vsub.s32 0, %v354
    %v357 = vsel %vm355, %v356, %v354
    %v358 = vclz %v357
    %v359 = vsub.s32 %v358, 2
    %vm360 = vcmp.gt.s32.totalorder 0, %v359
    %v361 = vsel %vm360, 0, %v359
    %v362 = vsub.s32 32, %v361
    %v363 = vshll.u32 %v354, %v361
    %v364 = vshrl.u32 %v346, %v362
    %v365 = vor.u32 %v363, %v364
    %v366 = vsub.s32 4294967266, %v361
    %v367 = vadd.s32 %v366, 127
    %v368 = vshll.u32 %v367, 23
    %v369 = vor.u32 4788187, %v368
    %v370 = vand.u32 2147483647, %v369
    %v372 = vcvt.s32.f32 %v365
    %v373 = vmul.f32 %v372, %v370
    %v374 = vxor.u32 %v373, 2147483648
    %v375 = vsel %vm292, %v374, %v373
    %v376 = vsub.s32 4, %v352
    %v377 = vsel %vm292, %v376, %v352
    %v378 = vsel %vm291, %v179, %v375
    %v379 = vsel %vm291, 0, %v377
    %v380 = vcosq.f32.pop %v378
    %v381 = vsinq.f32.pop %v378
    %vm382 = vweird.f32 %v179
    %v383 = vadd.s32 %v379, 3
    %v384 = vand.u32 %v383, 3
    %vm385 = vcmp.lt.s32.totalorder %v384, 2
    %vm386 = vcmp.eq.s32.totalorder %v384, 0
    %v387 = vxor.u32 %v381, 2147483648
    %v388 = vsel %vm386, %v380, %v387
    %vm389 = vcmp.eq.s32.totalorder %v384, 2
    %v390 = vxor.u32 %v380, 2147483648
    %v391 = vsel %vm389, %v390, %v381
    %v392 = vsel %vm385, %v388, %v391
    %v393 = vsel %vm382, nan, %v392
    %v394 = vand.u32 2147483647, %v180
    %vm395 = vcmp.le.f32.partialorder %v394, 0.7853982
    %vm396 = vcmp.lt.s32.totalorder %v180, 0
    %v397 = vand.u32 %v180, 2139095040
    %v398 = vshrl.u32 %v397, 23
    %v399 = vsub.s32 %v398, 127
    %v400 = vand.u32 2147483647, %v180
    %v401 = vand.u32 %v400, 8388607
    %v402 = vor.u32 %v401, 8388608
    %v403 = vsub.s32 0, %v402
    %v404 = vadd.s32 %v399, 1
    %vm405 = vcmp.gt.s32.totalorder %v404, 0
    %v406 = vsel %vm405, %v404, 0
    %v407 = vshrl.u32 %v406, 5
    %v408 = vand.u32 %v406, 31
    %v409 = vsub.s32 32, %v408
    %v410 = vshrl.u32 683565275, %v409
    %v411 = vshll.u32 683565275, %v408
    %v412 = vshrl.u32 2475754826, %v409
    %v413 = vor.u32 %v411, %v412
    %v414 = vshll.u32 2475754826, %v408
    %v415 = vshrl.u32 2131351028, %v409
    %v416 = vor.u32 %v414, %v415
    %v417 = vshll.u32 2131351028, %v408
    %v418 = vshrl.u32 2102212464, %v409
    %v419 = vor.u32 %v417, %v418
    %v420 = vshll.u32 2102212464, %v408
    %v421 = vshrl.u32 920167782, %v409
    %v422 = vor.u32 %v420, %v421
    %v423 = vshll.u32 920167782, %v408
    %v424 = vshrl.u32 1326507024, %v409
    %v425 = vor.u32 %v423, %v424
    %vm426 = vcmp.lt.s32.totalorder %v407, 1
    %vm427 = vcmp.lt.s32.totalorder %v407, 2
    %vm428 = vcmp.lt.s32.totalorder %v407, 3
    %vm429 = vcmp.lt.s32.totalorder %v407, 4
    %v430 = vsel %vm426, %v410, %v413
    %v431 = vsel %vm429, %v419, 2102212464
    %v432 = vsel %vm428, %v416, %v431
    %v433 = vsel %vm427, %v430, %v432
    %v434 = vsel %vm426, %v413, %v416
    %v435 = vsel %vm429, %v422, 920167782
    %v436 = vsel %vm428, %v419, %v435
    %v437 = vsel %vm427, %v434, %v436
    %v438 = vsel %vm426, %v416, %v419
    %v439 = vsel %vm429, %v425, 1326507024
    %v440 = vsel %vm428, %v422, %v439
    %v441 = vsel %vm427, %v438, %v440
    %v442 = vshll.u32 %v402, 8
    %v443 = vmul.u32.u64.compose %v442, %v441
    %v444 = vextract.low.u32 %v443
    %v445 = vextract.high.u32 %v443
    %v446 = vmul.u32.u64.compose %v442, %v437
    %v447 = vextract.low.u32 %v446
    %v448 = vextract.high.u32 %v446
    %v449 = vmul.u32 %v442, %v433
    %v450 = vadd.s32 %v445, %v447
    %vm451 = vc.u32 %v445, %v447
    %v452 = vadd.s32 %v448, 1
    %v453 = vsel %vm451, %v452, %v448
    %v454 = vadd.s32 %v449, %v453
    %v455 = vadd.s32 %v454, 536870912
    %v456 = vshrl.u32 %v455, 30
    %v457 = vshll.u32 %v456, 30
    %v458 = vsub.s32 %v454, %v457
    %vm459 = vcmp.lt.s32.totalorder %v458, 0
    %v460 = vsub.s32 0, %v458
    %v461 = vsel %vm459, %v460, %v458
    %v462 = vclz %v461
    %v463 = vsub.s32 %v462, 2
    %vm464 = vcmp.gt.s32.totalorder 0, %v463
    %v465 = vsel %vm464, 0, %v463
    %v466 = vsub.s32 32, %v465
    %v467 = vshll.u32 %v458, %v465
    %v468 = vshrl.u32 %v450, %v466
    %v469 = vor.u32 %v467, %v468
    %v470 = vsub.s32 4294967266, %v465
    %v471 = vadd.s32 %v470, 127
    %v472 = vshll.u32 %v471, 23
    %v473 = vor.u32 4788187, %v472
    %v474 = vand.u32 2147483647, %v473
    %v476 = vcvt.s32.f32 %v469
    %v477 = vmul.f32 %v476, %v474
    %v478 = vxor.u32 %v477, 2147483648
    %v479 = vsel %vm396, %v478, %v477
    %v480 = vsub.s32 4, %v456
    %v481 = vsel %vm396, %v480, %v456
    %v482 = vsel %vm395, %v180, %v479
    %v483 = vsel %vm395, 0, %v481
    %v484 = vcosq.f32.pop %v482
    %v485 = vsinq.f32.pop %v482
    %vm486 = vweird.f32 %v180
    %v487 = vadd.s32 %v483, 3
    %v488 = vand.u32 %v487, 3
    %vm489 = vcmp.lt.s32.totalorder %v488, 2
    %vm490 = vcmp.eq.s32.totalorder %v488, 0
    %v491 = vxor.u32 %v485, 2147483648
    %v492 = vsel %vm490, %v484, %v491
    %vm493 = vcmp.eq.s32.totalorder %v488, 2
    %v494 = vxor.u32 %v484, 2147483648
    %v495 = vsel %vm493, %v494, %v485
    %v496 = vsel %vm489, %v492, %v495
    %v497 = vsel %vm486, nan, %v496
    %v498 = vand.u32 2147483647, %v181
    %vm499 = vcmp.le.f32.partialorder %v498, 0.7853982
    %vm500 = vcmp.lt.s32.totalorder %v181, 0
    %v501 = vand.u32 %v181, 2139095040
    %v502 = vshrl.u32 %v501, 23
    %v503 = vsub.s32 %v502, 127
    %v504 = vand.u32 2147483647, %v181
    %v505 = vand.u32 %v504, 8388607
    %v506 = vor.u32 %v505, 8388608
    %v507 = vsub.s32 0, %v506
    %v508 = vadd.s32 %v503, 1
    %vm509 = vcmp.gt.s32.totalorder %v508, 0
    %v510 = vsel %vm509, %v508, 0
    %v511 = vshrl.u32 %v510, 5
    %v512 = vand.u32 %v510, 31
    %v513 = vsub.s32 32, %v512
    %v514 = vshrl.u32 683565275, %v513
    %v515 = vshll.u32 683565275, %v512
    %v516 = vshrl.u32 2475754826, %v513
    %v517 = vor.u32 %v515, %v516
    %v518 = vshll.u32 2475754826, %v512
    %v519 = vshrl.u32 2131351028, %v513
    %v520 = vor.u32 %v518, %v519
    %v521 = vshll.u32 2131351028, %v512
    %v522 = vshrl.u32 2102212464, %v513
    %v523 = vor.u32 %v521, %v522
    %v524 = vshll.u32 2102212464, %v512
    %v525 = vshrl.u32 920167782, %v513
    %v526 = vor.u32 %v524, %v525
    %v527 = vshll.u32 920167782, %v512
    %v528 = vshrl.u32 1326507024, %v513
    %v529 = vor.u32 %v527, %v528
    %vm530 = vcmp.lt.s32.totalorder %v511, 1
    %vm531 = vcmp.lt.s32.totalorder %v511, 2
    %vm532 = vcmp.lt.s32.totalorder %v511, 3
    %vm533 = vcmp.lt.s32.totalorder %v511, 4
    %v534 = vsel %vm530, %v514, %v517
    %v535 = vsel %vm533, %v523, 2102212464
    %v536 = vsel %vm532, %v520, %v535
    %v537 = vsel %vm531, %v534, %v536
    %v538 = vsel %vm530, %v517, %v520
    %v539 = vsel %vm533, %v526, 920167782
    %v540 = vsel %vm532, %v523, %v539
    %v541 = vsel %vm531, %v538, %v540
    %v542 = vsel %vm530, %v520, %v523
    %v543 = vsel %vm533, %v529, 1326507024
    %v544 = vsel %vm532, %v526, %v543
    %v545 = vsel %vm531, %v542, %v544
    %v546 = vshll.u32 %v506, 8
    %v547 = vmul.u32.u64.compose %v546, %v545
    %v548 = vextract.low.u32 %v547
    %v549 = vextract.high.u32 %v547
    %v550 = vmul.u32.u64.compose %v546, %v541
    %v551 = vextract.low.u32 %v550
    %v552 = vextract.high.u32 %v550
    %v553 = vmul.u32 %v546, %v537
    %v554 = vadd.s32 %v549, %v551
    %vm555 = vc.u32 %v549, %v551
    %v556 = vadd.s32 %v552, 1
    %v557 = vsel %vm555, %v556, %v552
    %v558 = vadd.s32 %v553, %v557
    %v559 = vadd.s32 %v558, 536870912
    %v560 = vshrl.u32 %v559, 30
    %v561 = vshll.u32 %v560, 30
    %v562 = vsub.s32 %v558, %v561
    %vm563 = vcmp.lt.s32.totalorder %v562, 0
    %v564 = vsub.s32 0, %v562
    %v565 = vsel %vm563, %v564, %v562
    %v566 = vclz %v565
    %v567 = vsub.s32 %v566, 2
    %vm568 = vcmp.gt.s32.totalorder 0, %v567
    %v569 = vsel %vm568, 0, %v567
    %v570 = vsub.s32 32, %v569
    %v571 = vshll.u32 %v562, %v569
    %v572 = vshrl.u32 %v554, %v570
    %v573 = vor.u32 %v571, %v572
    %v574 = vsub.s32 4294967266, %v569
    %v575 = vadd.s32 %v574, 127
    %v576 = vshll.u32 %v575, 23
    %v577 = vor.u32 4788187, %v576
    %v578 = vand.u32 2147483647, %v577
    %v580 = vcvt.s32.f32 %v573
    %v581 = vmul.f32 %v580, %v578
    %v582 = vxor.u32 %v581, 2147483648
    %v583 = vsel %vm500, %v582, %v581
    %v584 = vsub.s32 4, %v560
    %v585 = vsel %vm500, %v584, %v560
    %v586 = vsel %vm499, %v181, %v583
    %v587 = vsel %vm499, 0, %v585
    %v588 = vcosq.f32.pop %v586
    %v589 = vsinq.f32.pop %v586
    %vm590 = vweird.f32 %v181
    %v591 = vadd.s32 %v587, 3
    %v592 = vand.u32 %v591, 3
    %vm593 = vcmp.lt.s32.totalorder %v592, 2
    %vm594 = vcmp.eq.s32.totalorder %v592, 0
    %v595 = vxor.u32 %v589, 2147483648
    %v596 = vsel %vm594, %v588, %v595
    %vm597 = vcmp.eq.s32.totalorder %v592, 2
    %v598 = vxor.u32 %v588, 2147483648
    %v599 = vsel %vm597, %v598, %v589
    %v600 = vsel %vm593, %v596, %v599
    %v601 = vsel %vm590, nan, %v600
    %v602 = vand.u32 2147483647, %v182
    %vm603 = vcmp.le.f32.partialorder %v602, 0.7853982
    %vm604 = vcmp.lt.s32.totalorder %v182, 0
    %v605 = vand.u32 %v182, 2139095040
    %v606 = vshrl.u32 %v605, 23
    %v607 = vsub.s32 %v606, 127
    %v608 = vand.u32 2147483647, %v182
    %v609 = vand.u32 %v608, 8388607
    %v610 = vor.u32 %v609, 8388608
    %v611 = vsub.s32 0, %v610
    %v612 = vadd.s32 %v607, 1
    %vm613 = vcmp.gt.s32.totalorder %v612, 0
    %v614 = vsel %vm613, %v612, 0
    %v615 = vshrl.u32 %v614, 5
    %v616 = vand.u32 %v614, 31
    %v617 = vsub.s32 32, %v616
    %v618 = vshrl.u32 683565275, %v617
    %v619 = vshll.u32 683565275, %v616
    %v620 = vshrl.u32 2475754826, %v617
    %v621 = vor.u32 %v619, %v620
    %v622 = vshll.u32 2475754826, %v616
    %v623 = vshrl.u32 2131351028, %v617
    %v624 = vor.u32 %v622, %v623
    %v625 = vshll.u32 2131351028, %v616
    %v626 = vshrl.u32 2102212464, %v617
    %v627 = vor.u32 %v625, %v626
    %v628 = vshll.u32 2102212464, %v616
    %v629 = vshrl.u32 920167782, %v617
    %v630 = vor.u32 %v628, %v629
    %v631 = vshll.u32 920167782, %v616
    %v632 = vshrl.u32 1326507024, %v617
    %v633 = vor.u32 %v631, %v632
    %vm634 = vcmp.lt.s32.totalorder %v615, 1
    %vm635 = vcmp.lt.s32.totalorder %v615, 2
    %vm636 = vcmp.lt.s32.totalorder %v615, 3
    %vm637 = vcmp.lt.s32.totalorder %v615, 4
    %v638 = vsel %vm634, %v618, %v621
    %v639 = vsel %vm637, %v627, 2102212464
    %v640 = vsel %vm636, %v624, %v639
    %v641 = vsel %vm635, %v638, %v640
    %v642 = vsel %vm634, %v621, %v624
    %v643 = vsel %vm637, %v630, 920167782
    %v644 = vsel %vm636, %v627, %v643
    %v645 = vsel %vm635, %v642, %v644
    %v646 = vsel %vm634, %v624, %v627
    %v647 = vsel %vm637, %v633, 1326507024
    %v648 = vsel %vm636, %v630, %v647
    %v649 = vsel %vm635, %v646, %v648
    %v650 = vshll.u32 %v610, 8
    %v651 = vmul.u32.u64.compose %v650, %v649
    %v652 = vextract.low.u32 %v651
    %v653 = vextract.high.u32 %v651
    %v654 = vmul.u32.u64.compose %v650, %v645
    %v655 = vextract.low.u32 %v654
    %v656 = vextract.high.u32 %v654
    %v657 = vmul.u32 %v650, %v641
    %v658 = vadd.s32 %v653, %v655
    %vm659 = vc.u32 %v653, %v655
    %v660 = vadd.s32 %v656, 1
    %v661 = vsel %vm659, %v660, %v656
    %v662 = vadd.s32 %v657, %v661
    %v663 = vadd.s32 %v662, 536870912
    %v664 = vshrl.u32 %v663, 30
    %v665 = vshll.u32 %v664, 30
    %v666 = vsub.s32 %v662, %v665
    %vm667 = vcmp.lt.s32.totalorder %v666, 0
    %v668 = vsub.s32 0, %v666
    %v669 = vsel %vm667, %v668, %v666
    %v670 = vclz %v669
    %v671 = vsub.s32 %v670, 2
    %vm672 = vcmp.gt.s32.totalorder 0, %v671
    %v673 = vsel %vm672, 0, %v671
    %v674 = vsub.s32 32, %v673
    %v675 = vshll.u32 %v666, %v673
    %v676 = vshrl.u32 %v658, %v674
    %v677 = vor.u32 %v675, %v676
    %v678 = vsub.s32 4294967266, %v673
    %v679 = vadd.s32 %v678, 127
    %v680 = vshll.u32 %v679, 23
    %v681 = vor.u32 4788187, %v680
    %v682 = vand.u32 2147483647, %v681
    %v684 = vcvt.s32.f32 %v677
    %v685 = vmul.f32 %v684, %v682
    %v686 = vxor.u32 %v685, 2147483648
    %v687 = vsel %vm604, %v686, %v685
    %v688 = vsub.s32 4, %v664
    %v689 = vsel %vm604, %v688, %v664
    %v690 = vsel %vm603, %v182, %v687
    %v691 = vsel %vm603, 0, %v689
    %v692 = vcosq.f32.pop %v690
    %v693 = vsinq.f32.pop %v690
    %vm694 = vweird.f32 %v182
    %v695 = vadd.s32 %v691, 3
    %v696 = vand.u32 %v695, 3
    %vm697 = vcmp.lt.s32.totalorder %v696, 2
    %vm698 = vcmp.eq.s32.totalorder %v696, 0
    %v699 = vxor.u32 %v693, 2147483648
    %v700 = vsel %vm698, %v692, %v699
    %vm701 = vcmp.eq.s32.totalorder %v696, 2
    %v702 = vxor.u32 %v692, 2147483648
    %v703 = vsel %vm701, %v702, %v693
    %v704 = vsel %vm697, %v700, %v703
    %v705 = vsel %vm694, nan, %v704
    %v706 = vand.u32 2147483647, %v183
    %vm707 = vcmp.le.f32.partialorder %v706, 0.7853982
    %vm708 = vcmp.lt.s32.totalorder %v183, 0
    %v709 = vand.u32 %v183, 2139095040
    %v710 = vshrl.u32 %v709, 23
    %v711 = vsub.s32 %v710, 127
    %v712 = vand.u32 2147483647, %v183
    %v713 = vand.u32 %v712, 8388607
    %v714 = vor.u32 %v713, 8388608
    %v715 = vsub.s32 0, %v714
    %v716 = vadd.s32 %v711, 1
    %vm717 = vcmp.gt.s32.totalorder %v716, 0
    %v718 = vsel %vm717, %v716, 0
    %v719 = vshrl.u32 %v718, 5
    %v720 = vand.u32 %v718, 31
    %v721 = vsub.s32 32, %v720
    %v722 = vshrl.u32 683565275, %v721
    %v723 = vshll.u32 683565275, %v720
    %v724 = vshrl.u32 2475754826, %v721
    %v725 = vor.u32 %v723, %v724
    %v726 = vshll.u32 2475754826, %v720
    %v727 = vshrl.u32 2131351028, %v721
    %v728 = vor.u32 %v726, %v727
    %v729 = vshll.u32 2131351028, %v720
    %v730 = vshrl.u32 2102212464, %v721
    %v731 = vor.u32 %v729, %v730
    %v732 = vshll.u32 2102212464, %v720
    %v733 = vshrl.u32 920167782, %v721
    %v734 = vor.u32 %v732, %v733
    %v735 = vshll.u32 920167782, %v720
    %v736 = vshrl.u32 1326507024, %v721
    %v737 = vor.u32 %v735, %v736
    %vm738 = vcmp.lt.s32.totalorder %v719, 1
    %vm739 = vcmp.lt.s32.totalorder %v719, 2
    %vm740 = vcmp.lt.s32.totalorder %v719, 3
    %vm741 = vcmp.lt.s32.totalorder %v719, 4
    %v742 = vsel %vm738, %v722, %v725
    %v743 = vsel %vm741, %v731, 2102212464
    %v744 = vsel %vm740, %v728, %v743
    %v745 = vsel %vm739, %v742, %v744
    %v746 = vsel %vm738, %v725, %v728
    %v747 = vsel %vm741, %v734, 920167782
    %v748 = vsel %vm740, %v731, %v747
    %v749 = vsel %vm739, %v746, %v748
    %v750 = vsel %vm738, %v728, %v731
    %v751 = vsel %vm741, %v737, 1326507024
    %v752 = vsel %vm740, %v734, %v751
    %v753 = vsel %vm739, %v750, %v752
    %v754 = vshll.u32 %v714, 8
    %v755 = vmul.u32.u64.compose %v754, %v753
    %v756 = vextract.low.u32 %v755
    %v757 = vextract.high.u32 %v755
    %v758 = vmul.u32.u64.compose %v754, %v749
    %v759 = vextract.low.u32 %v758
    %v760 = vextract.high.u32 %v758
    %v761 = vmul.u32 %v754, %v745
    %v762 = vadd.s32 %v757, %v759
    %vm763 = vc.u32 %v757, %v759
    %v764 = vadd.s32 %v760, 1
    %v765 = vsel %vm763, %v764, %v760
    %v766 = vadd.s32 %v761, %v765
    %v767 = vadd.s32 %v766, 536870912
    %v768 = vshrl.u32 %v767, 30
    %v769 = vshll.u32 %v768, 30
    %v770 = vsub.s32 %v766, %v769
    %vm771 = vcmp.lt.s32.totalorder %v770, 0
    %v772 = vsub.s32 0, %v770
    %v773 = vsel %vm771, %v772, %v770
    %v774 = vclz %v773
    %v775 = vsub.s32 %v774, 2
    %vm776 = vcmp.gt.s32.totalorder 0, %v775
    %v777 = vsel %vm776, 0, %v775
    %v778 = vsub.s32 32, %v777
    %v779 = vshll.u32 %v770, %v777
    %v780 = vshrl.u32 %v762, %v778
    %v781 = vor.u32 %v779, %v780
    %v782 = vsub.s32 4294967266, %v777
    %v783 = vadd.s32 %v782, 127
    %v784 = vshll.u32 %v783, 23
    %v785 = vor.u32 4788187, %v784
    %v786 = vand.u32 2147483647, %v785
    %v788 = vcvt.s32.f32 %v781
    %v789 = vmul.f32 %v788, %v786
    %v790 = vxor.u32 %v789, 2147483648
    %v791 = vsel %vm708, %v790, %v789
    %v792 = vsub.s32 4, %v768
    %v793 = vsel %vm708, %v792, %v768
    %v794 = vsel %vm707, %v183, %v791
    %v795 = vsel %vm707, 0, %v793
    %v796 = vcosq.f32.pop %v794
    %v797 = vsinq.f32.pop %v794
    %vm798 = vweird.f32 %v183
    %v799 = vadd.s32 %v795, 3
    %v800 = vand.u32 %v799, 3
    %vm801 = vcmp.lt.s32.totalorder %v800, 2
    %vm802 = vcmp.eq.s32.totalorder %v800, 0
    %v803 = vxor.u32 %v797, 2147483648
    %v804 = vsel %vm802, %v796, %v803
    %vm805 = vcmp.eq.s32.totalorder %v800, 2
    %v806 = vxor.u32 %v796, 2147483648
    %v807 = vsel %vm805, %v806, %v797
    %v808 = vsel %vm801, %v804, %v807
    %v809 = vsel %vm798, nan, %v808
    %v810 = vand.u32 2147483647, %v184
    %vm811 = vcmp.le.f32.partialorder %v810, 0.7853982
    %vm812 = vcmp.lt.s32.totalorder %v184, 0
    %v813 = vand.u32 %v184, 2139095040
    %v814 = vshrl.u32 %v813, 23
    %v815 = vsub.s32 %v814, 127
    %v816 = vand.u32 2147483647, %v184
    %v817 = vand.u32 %v816, 8388607
    %v818 = vor.u32 %v817, 8388608
    %v819 = vsub.s32 0, %v818
    %v820 = vadd.s32 %v815, 1
    %vm821 = vcmp.gt.s32.totalorder %v820, 0
    %v822 = vsel %vm821, %v820, 0
    %v823 = vshrl.u32 %v822, 5
    %v824 = vand.u32 %v822, 31
    %v825 = vsub.s32 32, %v824
    %v826 = vshrl.u32 683565275, %v825
    %v827 = vshll.u32 683565275, %v824
    %v828 = vshrl.u32 2475754826, %v825
    %v829 = vor.u32 %v827, %v828
    %v830 = vshll.u32 2475754826, %v824
    %v831 = vshrl.u32 2131351028, %v825
    %v832 = vor.u32 %v830, %v831
    %v833 = vshll.u32 2131351028, %v824
    %v834 = vshrl.u32 2102212464, %v825
    %v835 = vor.u32 %v833, %v834
    %v836 = vshll.u32 2102212464, %v824
    %v837 = vshrl.u32 920167782, %v825
    %v838 = vor.u32 %v836, %v837
    %v839 = vshll.u32 920167782, %v824
    %v840 = vshrl.u32 1326507024, %v825
    %v841 = vor.u32 %v839, %v840
    %vm842 = vcmp.lt.s32.totalorder %v823, 1
    %vm843 = vcmp.lt.s32.totalorder %v823, 2
    %vm844 = vcmp.lt.s32.totalorder %v823, 3
    %vm845 = vcmp.lt.s32.totalorder %v823, 4
    %v846 = vsel %vm842, %v826, %v829
    %v847 = vsel %vm845, %v835, 2102212464
    %v848 = vsel %vm844, %v832, %v847
    %v849 = vsel %vm843, %v846, %v848
    %v850 = vsel %vm842, %v829, %v832
    %v851 = vsel %vm845, %v838, 920167782
    %v852 = vsel %vm844, %v835, %v851
    %v853 = vsel %vm843, %v850, %v852
    %v854 = vsel %vm842, %v832, %v835
    %v855 = vsel %vm845, %v841, 1326507024
    %v856 = vsel %vm844, %v838, %v855
    %v857 = vsel %vm843, %v854, %v856
    %v858 = vshll.u32 %v818, 8
    %v859 = vmul.u32.u64.compose %v858, %v857
    %v860 = vextract.low.u32 %v859
    %v861 = vextract.high.u32 %v859
    %v862 = vmul.u32.u64.compose %v858, %v853
    %v863 = vextract.low.u32 %v862
    %v864 = vextract.high.u32 %v862
    %v865 = vmul.u32 %v858, %v849
    %v866 = vadd.s32 %v861, %v863
    %vm867 = vc.u32 %v861, %v863
    %v868 = vadd.s32 %v864, 1
    %v869 = vsel %vm867, %v868, %v864
    %v870 = vadd.s32 %v865, %v869
    %v871 = vadd.s32 %v870, 536870912
    %v872 = vshrl.u32 %v871, 30
    %v873 = vshll.u32 %v872, 30
    %v874 = vsub.s32 %v870, %v873
    %vm875 = vcmp.lt.s32.totalorder %v874, 0
    %v876 = vsub.s32 0, %v874
    %v877 = vsel %vm875, %v876, %v874
    %v878 = vclz %v877
    %v879 = vsub.s32 %v878, 2
    %vm880 = vcmp.gt.s32.totalorder 0, %v879
    %v881 = vsel %vm880, 0, %v879
    %v882 = vsub.s32 32, %v881
    %v883 = vshll.u32 %v874, %v881
    %v884 = vshrl.u32 %v866, %v882
    %v885 = vor.u32 %v883, %v884
    %v886 = vsub.s32 4294967266, %v881
    %v887 = vadd.s32 %v886, 127
    %v888 = vshll.u32 %v887, 23
    %v889 = vor.u32 4788187, %v888
    %v890 = vand.u32 2147483647, %v889
    %v892 = vcvt.s32.f32 %v885
    %v893 = vmul.f32 %v892, %v890
    %v894 = vxor.u32 %v893, 2147483648
    %v895 = vsel %vm812, %v894, %v893
    %v896 = vsub.s32 4, %v872
    %v897 = vsel %vm812, %v896, %v872
    %v898 = vsel %vm811, %v184, %v895
    %v899 = vsel %vm811, 0, %v897
    %v900 = vcosq.f32.pop %v898
    %v901 = vsinq.f32.pop %v898
    %vm902 = vweird.f32 %v184
    %v903 = vadd.s32 %v899, 3
    %v904 = vand.u32 %v903, 3
    %vm905 = vcmp.lt.s32.totalorder %v904, 2
    %vm906 = vcmp.eq.s32.totalorder %v904, 0
    %v907 = vxor.u32 %v901, 2147483648
    %v908 = vsel %vm906, %v900, %v907
    %vm909 = vcmp.eq.s32.totalorder %v904, 2
    %v910 = vxor.u32 %v900, 2147483648
    %v911 = vsel %vm909, %v910, %v901
    %v912 = vsel %vm905, %v908, %v911
    %v913 = vsel %vm902, nan, %v912
    %v914 = vand.u32 2147483647, %v185
    %vm915 = vcmp.le.f32.partialorder %v914, 0.7853982
    %vm916 = vcmp.lt.s32.totalorder %v185, 0
    %v917 = vand.u32 %v185, 2139095040
    %v918 = vshrl.u32 %v917, 23
    %v919 = vsub.s32 %v918, 127
    %v920 = vand.u32 2147483647, %v185
    %v921 = vand.u32 %v920, 8388607
    %v922 = vor.u32 %v921, 8388608
    %v923 = vsub.s32 0, %v922
    %v924 = vadd.s32 %v919, 1
    %vm925 = vcmp.gt.s32.totalorder %v924, 0
    %v926 = vsel %vm925, %v924, 0
    %v927 = vshrl.u32 %v926, 5
    %v928 = vand.u32 %v926, 31
    %v929 = vsub.s32 32, %v928
    %v930 = vshrl.u32 683565275, %v929
    %v931 = vshll.u32 683565275, %v928
    %v932 = vshrl.u32 2475754826, %v929
    %v933 = vor.u32 %v931, %v932
    %v934 = vshll.u32 2475754826, %v928
    %v935 = vshrl.u32 2131351028, %v929
    %v936 = vor.u32 %v934, %v935
    %v937 = vshll.u32 2131351028, %v928
    %v938 = vshrl.u32 2102212464, %v929
    %v939 = vor.u32 %v937, %v938
    %v940 = vshll.u32 2102212464, %v928
    %v941 = vshrl.u32 920167782, %v929
    %v942 = vor.u32 %v940, %v941
    %v943 = vshll.u32 920167782, %v928
    %v944 = vshrl.u32 1326507024, %v929
    %v945 = vor.u32 %v943, %v944
    %vm946 = vcmp.lt.s32.totalorder %v927, 1
    %vm947 = vcmp.lt.s32.totalorder %v927, 2
    %vm948 = vcmp.lt.s32.totalorder %v927, 3
    %vm949 = vcmp.lt.s32.totalorder %v927, 4
    %v950 = vsel %vm946, %v930, %v933
    %v951 = vsel %vm949, %v939, 2102212464
    %v952 = vsel %vm948, %v936, %v951
    %v953 = vsel %vm947, %v950, %v952
    %v954 = vsel %vm946, %v933, %v936
    %v955 = vsel %vm949, %v942, 920167782
    %v956 = vsel %vm948, %v939, %v955
    %v957 = vsel %vm947, %v954, %v956
    %v958 = vsel %vm946, %v936, %v939
    %v959 = vsel %vm949, %v945, 1326507024
    %v960 = vsel %vm948, %v942, %v959
    %v961 = vsel %vm947, %v958, %v960
    %v962 = vshll.u32 %v922, 8
    %v963 = vmul.u32.u64.compose %v962, %v961
    %v964 = vextract.low.u32 %v963
    %v965 = vextract.high.u32 %v963
    %v966 = vmul.u32.u64.compose %v962, %v957
    %v967 = vextract.low.u32 %v966
    %v968 = vextract.high.u32 %v966
    %v969 = vmul.u32 %v962, %v953
    %v970 = vadd.s32 %v965, %v967
    %vm971 = vc.u32 %v965, %v967
    %v972 = vadd.s32 %v968, 1
    %v973 = vsel %vm971, %v972, %v968
    %v974 = vadd.s32 %v969, %v973
    %v975 = vadd.s32 %v974, 536870912
    %v976 = vshrl.u32 %v975, 30
    %v977 = vshll.u32 %v976, 30
    %v978 = vsub.s32 %v974, %v977
    %vm979 = vcmp.lt.s32.totalorder %v978, 0
    %v980 = vsub.s32 0, %v978
    %v981 = vsel %vm979, %v980, %v978
    %v982 = vclz %v981
    %v983 = vsub.s32 %v982, 2
    %vm984 = vcmp.gt.s32.totalorder 0, %v983
    %v985 = vsel %vm984, 0, %v983
    %v986 = vsub.s32 32, %v985
    %v987 = vshll.u32 %v978, %v985
    %v988 = vshrl.u32 %v970, %v986
    %v989 = vor.u32 %v987, %v988
    %v990 = vsub.s32 4294967266, %v985
    %v991 = vadd.s32 %v990, 127
    %v992 = vshll.u32 %v991, 23
    %v993 = vor.u32 4788187, %v992
    %v994 = vand.u32 2147483647, %v993
    %v996 = vcvt.s32.f32 %v989
    %v997 = vmul.f32 %v996, %v994
    %v998 = vxor.u32 %v997, 2147483648
    %v999 = vsel %vm916, %v998, %v997
    %v1000 = vsub.s32 4, %v976
    %v1001 = vsel %vm916, %v1000, %v976
    %v1002 = vsel %vm915, %v185, %v999
    %v1003 = vsel %vm915, 0, %v1001
    %v1004 = vcosq.f32.pop %v1002
    %v1005 = vsinq.f32.pop %v1002
    %vm1006 = vweird.f32 %v185
    %v1007 = vadd.s32 %v1003, 3
    %v1008 = vand.u32 %v1007, 3
    %vm1009 = vcmp.lt.s32.totalorder %v1008, 2
    %vm1010 = vcmp.eq.s32.totalorder %v1008, 0
    %v1011 = vxor.u32 %v1005, 2147483648
    %v1012 = vsel %vm1010, %v1004, %v1011
    %vm1013 = vcmp.eq.s32.totalorder %v1008, 2
    %v1014 = vxor.u32 %v1004, 2147483648
    %v1015 = vsel %vm1013, %v1014, %v1005
    %v1016 = vsel %vm1009, %v1012, %v1015
    %v1017 = vsel %vm1006, nan, %v1016
    %1019 = vset.pattern.permute.xlu0 0
    %1020 = vperm.xlu0 %1019, %v46
    %v1021 = vpop.permute.xlu0 %1020
    %1024 = vset.pattern.permute.xlu0 0
    %1025 = vperm.xlu0 %1024, %v47
    %v1026 = vpop.permute.xlu0 %1025
    %1029 = vset.pattern.permute.xlu0 0
    %1030 = vperm.xlu0 %1029, %v48
    %v1031 = vpop.permute.xlu0 %1030
    %1034 = vset.pattern.permute.xlu0 0
    %1035 = vperm.xlu0 %1034, %v49
    %v1036 = vpop.permute.xlu0 %1035
    %vm1038 = vcmask 261120
    %v1040 = vsel %vm1038, %v31, 0
    %v1043 = vsel %vm1038, %v32, 0
    %v1046 = vsel %vm1038, %v33, 0
    %v1049 = vsel %vm1038, %v34, 0
    %v1051 = vand.u32 %v393, 4294901760
    %1052 = vmatprep.subr.mxu0 %v1051
    %v1053 = vand.u32 %v289, 4294901760
    %1054 = vmatpush1.msra.mxu0 %v1053
    %v1055 = vand.u32 %v601, 4294901760
    %1056 = vmatprep.subr.mxu0 %v1055
    %v1057 = vand.u32 %v497, 4294901760
    %1058 = vmatpush1.msra.mxu0 %v1057
    %v1059 = vand.u32 %v809, 4294901760
    %1060 = vmatprep.subr.mxu0 %v1059
    %v1061 = vand.u32 %v705, 4294901760
    %1062 = vmatpush1.msra.mxu0 %v1061
    %v1063 = vand.u32 %v1017, 4294901760
    %1064 = vmatprep.subr.mxu0 %v1063
    %v1065 = vand.u32 %v913, 4294901760
    %1066 = vmatpush1.msra.mxu0 %v1065
    %1067 = vmatprep.subr.mxu0 0.0
    %1068 = vmatpush1.msra.mxu0 0.0
    %1069 = vmatprep.subr.mxu0 0.0
    %1070 = vmatpush1.msra.mxu0 0.0
    %1071 = vmatprep.subr.mxu0 0.0
    %1072 = vmatpush1.msra.mxu0 0.0
    %1073 = vmatprep.subr.mxu0 0.0
    %1074 = vmatpush1.msra.mxu0 0.0
    %1075 = vmatprep.subr.mxu0 0.0
    %1076 = vmatpush1.msra.mxu0 0.0
    %1077 = vmatprep.subr.mxu0 0.0
    %1078 = vmatpush1.msra.mxu0 0.0
    %1079 = vmatprep.subr.mxu0 0.0
    %1080 = vmatpush1.msra.mxu0 0.0
    %1081 = vmatprep.subr.mxu0 0.0
    %1082 = vmatpush1.msra.mxu0 0.0
    %1083 = vmatprep.subr.mxu0 0.0
    %1084 = vmatpush1.msra.mxu0 0.0
    %1085 = vmatprep.subr.mxu0 0.0
    %1086 = vmatpush1.msra.mxu0 0.0
    %1087 = vmatprep.subr.mxu0 0.0
    %1088 = vmatpush1.msra.mxu0 0.0
    %1089 = vmatprep.subr.mxu0 0.0
    %1090 = vmatpush1.msra.mxu0 0.0
    %1091 = vmatprep.subr.mxu0 0.0
    %1092 = vmatpush1.msra.mxu0 0.0
    %1093 = vmatprep.subr.mxu0 0.0
    %1094 = vmatpush1.msra.mxu0 0.0
    %1095 = vmatprep.subr.mxu0 0.0
    %1096 = vmatpush1.msra.mxu0 0.0
    %1097 = vmatprep.subr.mxu0 0.0
    %1098 = vmatpush1.msra.mxu0 0.0
    %1099 = vmatprep.subr.mxu0 0.0
    %1100 = vmatpush1.msra.mxu0 0.0
    %1101 = vmatprep.subr.mxu0 0.0
    %1102 = vmatpush1.msra.mxu0 0.0
    %1103 = vmatprep.subr.mxu0 0.0
    %1104 = vmatpush1.msra.mxu0 0.0
    %1105 = vmatprep.subr.mxu0 0.0
    %1106 = vmatpush1.msra.mxu0 0.0
    %1107 = vmatprep.subr.mxu0 0.0
    %1108 = vmatpush1.msra.mxu0 0.0
    %1109 = vmatprep.subr.mxu0 0.0
    %1110 = vmatpush1.msra.mxu0 0.0
    %1111 = vmatprep.subr.mxu0 0.0
    %1112 = vmatpush1.msra.mxu0 0.0
    %1113 = vmatprep.subr.mxu0 0.0
    %1114 = vmatpush1.msra.mxu0 0.0
    %1115 = vmatprep.subr.mxu0 0.0
    %1116 = vmatpush1.msra.mxu0 0.0
    %1117 = vmatprep.subr.mxu0 0.0
    %1118 = vmatpush1.msra.mxu0 0.0
    %1119 = vmatprep.subr.mxu0 0.0
    %1120 = vmatpush1.msra.mxu0 0.0
    %1121 = vmatprep.subr.mxu0 0.0
    %1122 = vmatpush1.msra.mxu0 0.0
    %1123 = vmatprep.mubr.f32.mxu0 0.0
    %v1124 = vand.u32 %v1040, 4294901760
    %v1125 = vsub.f32 %v1040, %v1124
    %v1126 = vand.u32 %v1125, 4294901760
    %v1127 = vsub.f32 %v1125, %v1126
    %v1128 = vand.u32 %v1127, 4294901760
    %1129 = vmatmul.mubr.f32.gmra.mrb[0].mxu0 %v1128
    %v1130 = vpop.f32.mrb[0].mxu0
    %v1131 = vadd.f32 %v1021, %v1130
    %v1132 = vpop.f32.mrb[0].mxu0
    %v1133 = vadd.f32 %v1021, %v1132
    %1134 = vmatprep.mubr.f32.mxu0 0.0
    %v1135 = vand.u32 %v1043, 4294901760
    %v1136 = vsub.f32 %v1043, %v1135
    %v1137 = vand.u32 %v1136, 4294901760
    %v1138 = vsub.f32 %v1136, %v1137
    %v1139 = vand.u32 %v1138, 4294901760
    %1140 = vmatmul.mubr.f32.gmra.mrb[0].mxu0 %v1139
    %v1141 = vpop.f32.mrb[0].mxu0
    %v1142 = vadd.f32 %v1026, %v1141
    %v1143 = vpop.f32.mrb[0].mxu0
    %v1144 = vadd.f32 %v1026, %v1143
    %1145 = vmatprep.mubr.f32.mxu0 0.0
    %v1146 = vand.u32 %v1046, 4294901760
    %v1147 = vsub.f32 %v1046, %v1146
    %v1148 = vand.u32 %v1147, 4294901760
    %v1149 = vsub.f32 %v1147, %v1148
    %v1150 = vand.u32 %v1149, 4294901760
    %1151 = vmatmul.mubr.f32.gmra.mrb[0].mxu0 %v1150
    %v1152 = vpop.f32.mrb[0].mxu0
    %v1153 = vadd.f32 %v1031, %v1152
    %v1154 = vpop.f32.mrb[0].mxu0
    %v1155 = vadd.f32 %v1031, %v1154
    %1156 = vmatprep.mubr.f32.mxu0 0.0
    %v1157 = vand.u32 %v1049, 4294901760
    %v1158 = vsub.f32 %v1049, %v1157
    %v1159 = vand.u32 %v1158, 4294901760
    %v1160 = vsub.f32 %v1158, %v1159
    %v1161 = vand.u32 %v1160, 4294901760
    %1162 = vmatmul.mubr.f32.gmra.mrb[0].mxu0 %v1161
    %v1163 = vpop.f32.mrb[0].mxu0
    %v1164 = vadd.f32 %v1036, %v1163
    %v1165 = vpop.f32.mrb[0].mxu0
    %v1166 = vadd.f32 %v1036, %v1165
    %1167 = vdwg.mxu0
    %v1168 = vand.u32 %v393, 4294901760
    %v1169 = vsub.f32 %v393, %v1168
    %v1170 = vand.u32 %v1169, 4294901760
    %v1171 = vsub.f32 %v1169, %v1170
    %v1172 = vand.u32 %v1171, 4294901760
    %1173 = vmatprep.subr.mxu0 %v1172
    %v1174 = vand.u32 %v289, 4294901760
    %v1175 = vsub.f32 %v289, %v1174
    %v1176 = vand.u32 %v1175, 4294901760
    %v1177 = vsub.f32 %v1175, %v1176
    %v1178 = vand.u32 %v1177, 4294901760
    %1179 = vmatpush1.msra.mxu0 %v1178
    %v1180 = vand.u32 %v601, 4294901760
    %v1181 = vsub.f32 %v601, %v1180
    %v1182 = vand.u32 %v1181, 4294901760
    %v1183 = vsub.f32 %v1181, %v1182
    %v1184 = vand.u32 %v1183, 4294901760
    %1185 = vmatprep.subr.mxu0 %v1184
    %v1186 = vand.u32 %v497, 4294901760
    %v1187 = vsub.f32 %v497, %v1186
    %v1188 = vand.u32 %v1187, 4294901760
    %v1189 = vsub.f32 %v1187, %v1188
    %v1190 = vand.u32 %v1189, 4294901760
    %1191 = vmatpush1.msra.mxu0 %v1190
    %v1192 = vand.u32 %v809, 4294901760
    %v1193 = vsub.f32 %v809, %v1192
    %v1194 = vand.u32 %v1193, 4294901760
    %v1195 = vsub.f32 %v1193, %v1194
    %v1196 = vand.u32 %v1195, 4294901760
    %1197 = vmatprep.subr.mxu0 %v1196
    %v1198 = vand.u32 %v705, 4294901760
    %v1199 = vsub.f32 %v705, %v1198
    %v1200 = vand.u32 %v1199, 4294901760
    %v1201 = vsub.f32 %v1199, %v1200
    %v1202 = vand.u32 %v1201, 4294901760
    %1203 = vmatpush1.msra.mxu0 %v1202
    %v1204 = vand.u32 %v1017, 4294901760
    %v1205 = vsub.f32 %v1017, %v1204
    %v1206 = vand.u32 %v1205, 4294901760
    %v1207 = vsub.f32 %v1205, %v1206
    %v1208 = vand.u32 %v1207, 4294901760
    %1209 = vmatprep.subr.mxu0 %v1208
    %v1210 = vand.u32 %v913, 4294901760
    %v1211 = vsub.f32 %v913, %v1210
    %v1212 = vand.u32 %v1211, 4294901760
    %v1213 = vsub.f32 %v1211, %v1212
    %v1214 = vand.u32 %v1213, 4294901760
    %1215 = vmatpush1.msra.mxu0 %v1214
    %1216 = vmatprep.subr.mxu0 0.0
    %1217 = vmatpush1.msra.mxu0 0.0
    %1218 = vmatprep.subr.mxu0 0.0
    %1219 = vmatpush1.msra.mxu0 0.0
    %1220 = vmatprep.subr.mxu0 0.0
    %1221 = vmatpush1.msra.mxu0 0.0
    %1222 = vmatprep.subr.mxu0 0.0
    %1223 = vmatpush1.msra.mxu0 0.0
    %1224 = vmatprep.subr.mxu0 0.0
    %1225 = vmatpush1.msra.mxu0 0.0
    %1226 = vmatprep.subr.mxu0 0.0
    %1227 = vmatpush1.msra.mxu0 0.0
    %1228 = vmatprep.subr.mxu0 0.0
    %1229 = vmatpush1.msra.mxu0 0.0
    %1230 = vmatprep.subr.mxu0 0.0
    %1231 = vmatpush1.msra.mxu0 0.0
    %1232 = vmatprep.subr.mxu0 0.0
    %1233 = vmatpush1.msra.mxu0 0.0
    %1234 = vmatprep.subr.mxu0 0.0
    %1235 = vmatpush1.msra.mxu0 0.0
    %1236 = vmatprep.subr.mxu0 0.0
    %1237 = vmatpush1.msra.mxu0 0.0
    %1238 = vmatprep.subr.mxu0 0.0
    %1239 = vmatpush1.msra.mxu0 0.0
    %1240 = vmatprep.subr.mxu0 0.0
    %1241 = vmatpush1.msra.mxu0 0.0
    %1242 = vmatprep.subr.mxu0 0.0
    %1243 = vmatpush1.msra.mxu0 0.0
    %1244 = vmatprep.subr.mxu0 0.0
    %1245 = vmatpush1.msra.mxu0 0.0
    %1246 = vmatprep.subr.mxu0 0.0
    %1247 = vmatpush1.msra.mxu0 0.0
    %1248 = vmatprep.subr.mxu0 0.0
    %1249 = vmatpush1.msra.mxu0 0.0
    %1250 = vmatprep.subr.mxu0 0.0
    %1251 = vmatpush1.msra.mxu0 0.0
    %1252 = vmatprep.subr.mxu0 0.0
    %1253 = vmatpush1.msra.mxu0 0.0
    %1254 = vmatprep.subr.mxu0 0.0
    %1255 = vmatpush1.msra.mxu0 0.0
    %1256 = vmatprep.subr.mxu0 0.0
    %1257 = vmatpush1.msra.mxu0 0.0
    %1258 = vmatprep.subr.mxu0 0.0
    %1259 = vmatpush1.msra.mxu0 0.0
    %1260 = vmatprep.subr.mxu0 0.0
    %1261 = vmatpush1.msra.mxu0 0.0
    %1262 = vmatprep.subr.mxu0 0.0
    %1263 = vmatpush1.msra.mxu0 0.0
    %1264 = vmatprep.subr.mxu0 0.0
    %1265 = vmatpush1.msra.mxu0 0.0
    %1266 = vmatprep.subr.mxu0 0.0
    %1267 = vmatpush1.msra.mxu0 0.0
    %1268 = vmatprep.subr.mxu0 0.0
    %1269 = vmatpush1.msra.mxu0 0.0
    %1270 = vmatprep.subr.mxu0 0.0
    %1271 = vmatpush1.msra.mxu0 0.0
    %1272 = vmatprep.mubr.f32.mxu0 0.0
    %v1273 = vand.u32 %v1040, 4294901760
    %1274 = vmatmul.mubr.f32.gmra.mrb[0].mxu0 %v1273
    %v1275 = vpop.f32.mrb[0].mxu0
    %v1276 = vadd.f32 %v1131, %v1275
    %v1277 = vpop.f32.mrb[0].mxu0
    %v1278 = vadd.f32 %v1133, %v1277
    %1279 = vmatprep.mubr.f32.mxu0 0.0
    %v1280 = vand.u32 %v1043, 4294901760
    %1281 = vmatmul.mubr.f32.gmra.mrb[0].mxu0 %v1280
    %v1282 = vpop.f32.mrb[0].mxu0
    %v1283 = vadd.f32 %v1142, %v1282
    %v1284 = vpop.f32.mrb[0].mxu0
    %v1285 = vadd.f32 %v1144, %v1284
    %1286 = vmatprep.mubr.f32.mxu0 0.0
    %v1287 = vand.u32 %v1046, 4294901760
    %1288 = vmatmul.mubr.f32.gmra.mrb[0].mxu0 %v1287
    %v1289 = vpop.f32.mrb[0].mxu0
    %v1290 = vadd.f32 %v1153, %v1289
    %v1291 = vpop.f32.mrb[0].mxu0
    %v1292 = vadd.f32 %v1155, %v1291
    %1293 = vmatprep.mubr.f32.mxu0 0.0
    %v1294 = vand.u32 %v1049, 4294901760
    %1295 = vmatmul.mubr.f32.gmra.mrb[0].mxu0 %v1294
    %v1296 = vpop.f32.mrb[0].mxu0
    %v1297 = vadd.f32 %v1164, %v1296
    %v1298 = vpop.f32.mrb[0].mxu0
    %v1299 = vadd.f32 %v1166, %v1298
    %1300 = vdwg.mxu0
    %v1301 = vand.u32 %v393, 4294901760
    %v1302 = vsub.f32 %v393, %v1301
    %1303 = vmatprep.subr.mxu0 %v1302
    %v1304 = vand.u32 %v289, 4294901760
    %v1305 = vsub.f32 %v289, %v1304
    %1306 = vmatpush1.msra.mxu0 %v1305
    %v1307 = vand.u32 %v601, 4294901760
    %v1308 = vsub.f32 %v601, %v1307
    %1309 = vmatprep.subr.mxu0 %v1308
    %v1310 = vand.u32 %v497, 4294901760
    %v1311 = vsub.f32 %v497, %v1310
    %1312 = vmatpush1.msra.mxu0 %v1311
    %v1313 = vand.u32 %v809, 4294901760
    %v1314 = vsub.f32 %v809, %v1313
    %1315 = vmatprep.subr.mxu0 %v1314
    %v1316 = vand.u32 %v705, 4294901760
    %v1317 = vsub.f32 %v705, %v1316
    %1318 = vmatpush1.msra.mxu0 %v1317
    %v1319 = vand.u32 %v1017, 4294901760
    %v1320 = vsub.f32 %v1017, %v1319
    %1321 = vmatprep.subr.mxu0 %v1320
    %v1322 = vand.u32 %v913, 4294901760
    %v1323 = vsub.f32 %v913, %v1322
    %1324 = vmatpush1.msra.mxu0 %v1323
    %1325 = vmatprep.subr.mxu0 0.0
    %1326 = vmatpush1.msra.mxu0 0.0
    %1327 = vmatprep.subr.mxu0 0.0
    %1328 = vmatpush1.msra.mxu0 0.0
    %1329 = vmatprep.subr.mxu0 0.0
    %1330 = vmatpush1.msra.mxu0 0.0
    %1331 = vmatprep.subr.mxu0 0.0
    %1332 = vmatpush1.msra.mxu0 0.0
    %1333 = vmatprep.subr.mxu0 0.0
    %1334 = vmatpush1.msra.mxu0 0.0
    %1335 = vmatprep.subr.mxu0 0.0
    %1336 = vmatpush1.msra.mxu0 0.0
    %1337 = vmatprep.subr.mxu0 0.0
    %1338 = vmatpush1.msra.mxu0 0.0
    %1339 = vmatprep.subr.mxu0 0.0
    %1340 = vmatpush1.msra.mxu0 0.0
    %1341 = vmatprep.subr.mxu0 0.0
    %1342 = vmatpush1.msra.mxu0 0.0
    %1343 = vmatprep.subr.mxu0 0.0
    %1344 = vmatpush1.msra.mxu0 0.0
    %1345 = vmatprep.subr.mxu0 0.0
    %1346 = vmatpush1.msra.mxu0 0.0
    %1347 = vmatprep.subr.mxu0 0.0
    %1348 = vmatpush1.msra.mxu0 0.0
    %1349 = vmatprep.subr.mxu0 0.0
    %1350 = vmatpush1.msra.mxu0 0.0
    %1351 = vmatprep.subr.mxu0 0.0
    %1352 = vmatpush1.msra.mxu0 0.0
    %1353 = vmatprep.subr.mxu0 0.0
    %1354 = vmatpush1.msra.mxu0 0.0
    %1355 = vmatprep.subr.mxu0 0.0
    %1356 = vmatpush1.msra.mxu0 0.0
    %1357 = vmatprep.subr.mxu0 0.0
    %1358 = vmatpush1.msra.mxu0 0.0
    %1359 = vmatprep.subr.mxu0 0.0
    %1360 = vmatpush1.msra.mxu0 0.0
    %1361 = vmatprep.subr.mxu0 0.0
    %1362 = vmatpush1.msra.mxu0 0.0
    %1363 = vmatprep.subr.mxu0 0.0
    %1364 = vmatpush1.msra.mxu0 0.0
    %1365 = vmatprep.subr.mxu0 0.0
    %1366 = vmatpush1.msra.mxu0 0.0
    %1367 = vmatprep.subr.mxu0 0.0
    %1368 = vmatpush1.msra.mxu0 0.0
    %1369 = vmatprep.subr.mxu0 0.0
    %1370 = vmatpush1.msra.mxu0 0.0
    %1371 = vmatprep.subr.mxu0 0.0
    %1372 = vmatpush1.msra.mxu0 0.0
    %1373 = vmatprep.subr.mxu0 0.0
    %1374 = vmatpush1.msra.mxu0 0.0
    %1375 = vmatprep.subr.mxu0 0.0
    %1376 = vmatpush1.msra.mxu0 0.0
    %1377 = vmatprep.subr.mxu0 0.0
    %1378 = vmatpush1.msra.mxu0 0.0
    %1379 = vmatprep.subr.mxu0 0.0
    %1380 = vmatpush1.msra.mxu0 0.0
    %1381 = vmatprep.mubr.f32.mxu0 0.0
    %v1382 = vand.u32 %v1040, 4294901760
    %v1383 = vsub.f32 %v1040, %v1382
    %1384 = vmatmul.mubr.f32.gmra.mrb[0].mxu0 %v1383
    %v1385 = vpop.f32.mrb[0].mxu0
    %v1386 = vadd.f32 %v1276, %v1385
    %v1387 = vpop.f32.mrb[0].mxu0
    %v1388 = vadd.f32 %v1278, %v1387
    %1389 = vmatprep.mubr.f32.mxu0 0.0
    %v1390 = vand.u32 %v1043, 4294901760
    %v1391 = vsub.f32 %v1043, %v1390
    %1392 = vmatmul.mubr.f32.gmra.mrb[0].mxu0 %v1391
    %v1393 = vpop.f32.mrb[0].mxu0
    %v1394 = vadd.f32 %v1283, %v1393
    %v1395 = vpop.f32.mrb[0].mxu0
    %v1396 = vadd.f32 %v1285, %v1395
    %1397 = vmatprep.mubr.f32.mxu0 0.0
    %v1398 = vand.u32 %v1046, 4294901760
    %v1399 = vsub.f32 %v1046, %v1398
    %1400 = vmatmul.mubr.f32.gmra.mrb[0].mxu0 %v1399
    %v1401 = vpop.f32.mrb[0].mxu0
    %v1402 = vadd.f32 %v1290, %v1401
    %v1403 = vpop.f32.mrb[0].mxu0
    %v1404 = vadd.f32 %v1292, %v1403
    %1405 = vmatprep.mubr.f32.mxu0 0.0
    %v1406 = vand.u32 %v1049, 4294901760
    %v1407 = vsub.f32 %v1049, %v1406
    %1408 = vmatmul.mubr.f32.gmra.mrb[0].mxu0 %v1407
    %v1409 = vpop.f32.mrb[0].mxu0
    %v1410 = vadd.f32 %v1297, %v1409
    %v1411 = vpop.f32.mrb[0].mxu0
    %v1412 = vadd.f32 %v1299, %v1411
    %1413 = vdwg.mxu0
    %v1414 = vand.u32 %v393, 4294901760
    %1415 = vmatprep.subr.mxu0 %v1414
    %v1416 = vand.u32 %v289, 4294901760
    %1417 = vmatpush1.msra.mxu0 %v1416
    %v1418 = vand.u32 %v601, 4294901760
    %1419 = vmatprep.subr.mxu0 %v1418
    %v1420 = vand.u32 %v497, 4294901760
    %1421 = vmatpush1.msra.mxu0 %v1420
    %v1422 = vand.u32 %v809, 4294901760
    %1423 = vmatprep.subr.mxu0 %v1422
    %v1424 = vand.u32 %v705, 4294901760
    %1425 = vmatpush1.msra.mxu0 %v1424
    %v1426 = vand.u32 %v1017, 4294901760
    %1427 = vmatprep.subr.mxu0 %v1426
    %v1428 = vand.u32 %v913, 4294901760
    %1429 = vmatpush1.msra.mxu0 %v1428
    %1430 = vmatprep.subr.mxu0 0.0
    %1431 = vmatpush1.msra.mxu0 0.0
    %1432 = vmatprep.subr.mxu0 0.0
    %1433 = vmatpush1.msra.mxu0 0.0
    %1434 = vmatprep.subr.mxu0 0.0
    %1435 = vmatpush1.msra.mxu0 0.0
    %1436 = vmatprep.subr.mxu0 0.0
    %1437 = vmatpush1.msra.mxu0 0.0
    %1438 = vmatprep.subr.mxu0 0.0
    %1439 = vmatpush1.msra.mxu0 0.0
    %1440 = vmatprep.subr.mxu0 0.0
    %1441 = vmatpush1.msra.mxu0 0.0
    %1442 = vmatprep.subr.mxu0 0.0
    %1443 = vmatpush1.msra.mxu0 0.0
    %1444 = vmatprep.subr.mxu0 0.0
    %1445 = vmatpush1.msra.mxu0 0.0
    %1446 = vmatprep.subr.mxu0 0.0
    %1447 = vmatpush1.msra.mxu0 0.0
    %1448 = vmatprep.subr.mxu0 0.0
    %1449 = vmatpush1.msra.mxu0 0.0
    %1450 = vmatprep.subr.mxu0 0.0
    %1451 = vmatpush1.msra.mxu0 0.0
    %1452 = vmatprep.subr.mxu0 0.0
    %1453 = vmatpush1.msra.mxu0 0.0
    %1454 = vmatprep.subr.mxu0 0.0
    %1455 = vmatpush1.msra.mxu0 0.0
    %1456 = vmatprep.subr.mxu0 0.0
    %1457 = vmatpush1.msra.mxu0 0.0
    %1458 = vmatprep.subr.mxu0 0.0
    %1459 = vmatpush1.msra.mxu0 0.0
    %1460 = vmatprep.subr.mxu0 0.0
    %1461 = vmatpush1.msra.mxu0 0.0
    %1462 = vmatprep.subr.mxu0 0.0
    %1463 = vmatpush1.msra.mxu0 0.0
    %1464 = vmatprep.subr.mxu0 0.0
    %1465 = vmatpush1.msra.mxu0 0.0
    %1466 = vmatprep.subr.mxu0 0.0
    %1467 = vmatpush1.msra.mxu0 0.0
    %1468 = vmatprep.subr.mxu0 0.0
    %1469 = vmatpush1.msra.mxu0 0.0
    %1470 = vmatprep.subr.mxu0 0.0
    %1471 = vmatpush1.msra.mxu0 0.0
    %1472 = vmatprep.subr.mxu0 0.0
    %1473 = vmatpush1.msra.mxu0 0.0
    %1474 = vmatprep.subr.mxu0 0.0
    %1475 = vmatpush1.msra.mxu0 0.0
    %1476 = vmatprep.subr.mxu0 0.0
    %1477 = vmatpush1.msra.mxu0 0.0
    %1478 = vmatprep.subr.mxu0 0.0
    %1479 = vmatpush1.msra.mxu0 0.0
    %1480 = vmatprep.subr.mxu0 0.0
    %1481 = vmatpush1.msra.mxu0 0.0
    %1482 = vmatprep.subr.mxu0 0.0
    %1483 = vmatpush1.msra.mxu0 0.0
    %1484 = vmatprep.subr.mxu0 0.0
    %1485 = vmatpush1.msra.mxu0 0.0
    %1486 = vmatprep.mubr.f32.mxu0 0.0
    %v1487 = vand.u32 %v1040, 4294901760
    %v1488 = vsub.f32 %v1040, %v1487
    %v1489 = vand.u32 %v1488, 4294901760
    %1490 = vmatmul.mubr.f32.gmra.mrb[0].mxu0 %v1489
    %v1491 = vpop.f32.mrb[0].mxu0
    %v1492 = vadd.f32 %v1386, %v1491
    %v1493 = vpop.f32.mrb[0].mxu0
    %v1494 = vadd.f32 %v1388, %v1493
    %1495 = vmatprep.mubr.f32.mxu0 0.0
    %v1496 = vand.u32 %v1043, 4294901760
    %v1497 = vsub.f32 %v1043, %v1496
    %v1498 = vand.u32 %v1497, 4294901760
    %1499 = vmatmul.mubr.f32.gmra.mrb[0].mxu0 %v1498
    %v1500 = vpop.f32.mrb[0].mxu0
    %v1501 = vadd.f32 %v1394, %v1500
    %v1502 = vpop.f32.mrb[0].mxu0
    %v1503 = vadd.f32 %v1396, %v1502
    %1504 = vmatprep.mubr.f32.mxu0 0.0
    %v1505 = vand.u32 %v1046, 4294901760
    %v1506 = vsub.f32 %v1046, %v1505
    %v1507 = vand.u32 %v1506, 4294901760
    %1508 = vmatmul.mubr.f32.gmra.mrb[0].mxu0 %v1507
    %v1509 = vpop.f32.mrb[0].mxu0
    %v1510 = vadd.f32 %v1402, %v1509
    %v1511 = vpop.f32.mrb[0].mxu0
    %v1512 = vadd.f32 %v1404, %v1511
    %1513 = vmatprep.mubr.f32.mxu0 0.0
    %v1514 = vand.u32 %v1049, 4294901760
    %v1515 = vsub.f32 %v1049, %v1514
    %v1516 = vand.u32 %v1515, 4294901760
    %1517 = vmatmul.mubr.f32.gmra.mrb[0].mxu0 %v1516
    %v1518 = vpop.f32.mrb[0].mxu0
    %v1519 = vadd.f32 %v1410, %v1518
    %v1520 = vpop.f32.mrb[0].mxu0
    %v1521 = vadd.f32 %v1412, %v1520
    %1522 = vdwg.mxu0
    %v1523 = vand.u32 %v393, 4294901760
    %v1524 = vsub.f32 %v393, %v1523
    %v1525 = vand.u32 %v1524, 4294901760
    %1526 = vmatprep.subr.mxu0 %v1525
    %v1527 = vand.u32 %v289, 4294901760
    %v1528 = vsub.f32 %v289, %v1527
    %v1529 = vand.u32 %v1528, 4294901760
    %1530 = vmatpush1.msra.mxu0 %v1529
    %v1531 = vand.u32 %v601, 4294901760
    %v1532 = vsub.f32 %v601, %v1531
    %v1533 = vand.u32 %v1532, 4294901760
    %1534 = vmatprep.subr.mxu0 %v1533
    %v1535 = vand.u32 %v497, 4294901760
    %v1536 = vsub.f32 %v497, %v1535
    %v1537 = vand.u32 %v1536, 4294901760
    %1538 = vmatpush1.msra.mxu0 %v1537
    %v1539 = vand.u32 %v809, 4294901760
    %v1540 = vsub.f32 %v809, %v1539
    %v1541 = vand.u32 %v1540, 4294901760
    %1542 = vmatprep.subr.mxu0 %v1541
    %v1543 = vand.u32 %v705, 4294901760
    %v1544 = vsub.f32 %v705, %v1543
    %v1545 = vand.u32 %v1544, 4294901760
    %1546 = vmatpush1.msra.mxu0 %v1545
    %v1547 = vand.u32 %v1017, 4294901760
    %v1548 = vsub.f32 %v1017, %v1547
    %v1549 = vand.u32 %v1548, 4294901760
    %1550 = vmatprep.subr.mxu0 %v1549
    %v1551 = vand.u32 %v913, 4294901760
    %v1552 = vsub.f32 %v913, %v1551
    %v1553 = vand.u32 %v1552, 4294901760
    %1554 = vmatpush1.msra.mxu0 %v1553
    %1555 = vmatprep.subr.mxu0 0.0
    %1556 = vmatpush1.msra.mxu0 0.0
    %1557 = vmatprep.subr.mxu0 0.0
    %1558 = vmatpush1.msra.mxu0 0.0
    %1559 = vmatprep.subr.mxu0 0.0
    %1560 = vmatpush1.msra.mxu0 0.0
    %1561 = vmatprep.subr.mxu0 0.0
    %1562 = vmatpush1.msra.mxu0 0.0
    %1563 = vmatprep.subr.mxu0 0.0
    %1564 = vmatpush1.msra.mxu0 0.0
    %1565 = vmatprep.subr.mxu0 0.0
    %1566 = vmatpush1.msra.mxu0 0.0
    %1567 = vmatprep.subr.mxu0 0.0
    %1568 = vmatpush1.msra.mxu0 0.0
    %1569 = vmatprep.subr.mxu0 0.0
    %1570 = vmatpush1.msra.mxu0 0.0
    %1571 = vmatprep.subr.mxu0 0.0
    %1572 = vmatpush1.msra.mxu0 0.0
    %1573 = vmatprep.subr.mxu0 0.0
    %1574 = vmatpush1.msra.mxu0 0.0
    %1575 = vmatprep.subr.mxu0 0.0
    %1576 = vmatpush1.msra.mxu0 0.0
    %1577 = vmatprep.subr.mxu0 0.0
    %1578 = vmatpush1.msra.mxu0 0.0
    %1579 = vmatprep.subr.mxu0 0.0
    %1580 = vmatpush1.msra.mxu0 0.0
    %1581 = vmatprep.subr.mxu0 0.0
    %1582 = vmatpush1.msra.mxu0 0.0
    %1583 = vmatprep.subr.mxu0 0.0
    %1584 = vmatpush1.msra.mxu0 0.0
    %1585 = vmatprep.subr.mxu0 0.0
    %1586 = vmatpush1.msra.mxu0 0.0
    %1587 = vmatprep.subr.mxu0 0.0
    %1588 = vmatpush1.msra.mxu0 0.0
    %1589 = vmatprep.subr.mxu0 0.0
    %1590 = vmatpush1.msra.mxu0 0.0
    %1591 = vmatprep.subr.mxu0 0.0
    %1592 = vmatpush1.msra.mxu0 0.0
    %1593 = vmatprep.subr.mxu0 0.0
    %1594 = vmatpush1.msra.mxu0 0.0
    %1595 = vmatprep.subr.mxu0 0.0
    %1596 = vmatpush1.msra.mxu0 0.0
    %1597 = vmatprep.subr.mxu0 0.0
    %1598 = vmatpush1.msra.mxu0 0.0
    %1599 = vmatprep.subr.mxu0 0.0
    %1600 = vmatpush1.msra.mxu0 0.0
    %1601 = vmatprep.subr.mxu0 0.0
    %1602 = vmatpush1.msra.mxu0 0.0
    %1603 = vmatprep.subr.mxu0 0.0
    %1604 = vmatpush1.msra.mxu0 0.0
    %1605 = vmatprep.subr.mxu0 0.0
    %1606 = vmatpush1.msra.mxu0 0.0
    %1607 = vmatprep.subr.mxu0 0.0
    %1608 = vmatpush1.msra.mxu0 0.0
    %1609 = vmatprep.subr.mxu0 0.0
    %1610 = vmatpush1.msra.mxu0 0.0
    %1611 = vmatprep.mubr.f32.mxu0 0.0
    %v1612 = vand.u32 %v1040, 4294901760
    %1613 = vmatmul.mubr.f32.gmra.mrb[0].mxu0 %v1612
    %v1614 = vpop.f32.mrb[0].mxu0
    %v1615 = vadd.f32 %v1492, %v1614
    %v1616 = vpop.f32.mrb[0].mxu0
    %v1617 = vadd.f32 %v1494, %v1616
    %1618 = vmatprep.mubr.f32.mxu0 0.0
    %v1619 = vand.u32 %v1043, 4294901760
    %1620 = vmatmul.mubr.f32.gmra.mrb[0].mxu0 %v1619
    %v1621 = vpop.f32.mrb[0].mxu0
    %v1622 = vadd.f32 %v1501, %v1621
    %v1623 = vpop.f32.mrb[0].mxu0
    %v1624 = vadd.f32 %v1503, %v1623
    %1625 = vmatprep.mubr.f32.mxu0 0.0
    %v1626 = vand.u32 %v1046, 4294901760
    %1627 = vmatmul.mubr.f32.gmra.mrb[0].mxu0 %v1626
    %v1628 = vpop.f32.mrb[0].mxu0
    %v1629 = vadd.f32 %v1510, %v1628
    %v1630 = vpop.f32.mrb[0].mxu0
    %v1631 = vadd.f32 %v1512, %v1630
    %1632 = vmatprep.mubr.f32.mxu0 0.0
    %v1633 = vand.u32 %v1049, 4294901760
    %1634 = vmatmul.mubr.f32.gmra.mrb[0].mxu0 %v1633
    %v1635 = vpop.f32.mrb[0].mxu0
    %v1636 = vadd.f32 %v1519, %v1635
    %v1637 = vpop.f32.mrb[0].mxu0
    %v1638 = vadd.f32 %v1521, %v1637
    %1639 = vdwg.mxu0
    %v1640 = vand.u32 %v393, 4294901760
    %1641 = vmatprep.subr.mxu0 %v1640
    %v1642 = vand.u32 %v289, 4294901760
    %1643 = vmatpush1.msra.mxu0 %v1642
    %v1644 = vand.u32 %v601, 4294901760
    %1645 = vmatprep.subr.mxu0 %v1644
    %v1646 = vand.u32 %v497, 4294901760
    %1647 = vmatpush1.msra.mxu0 %v1646
    %v1648 = vand.u32 %v809, 4294901760
    %1649 = vmatprep.subr.mxu0 %v1648
    %v1650 = vand.u32 %v705, 4294901760
    %1651 = vmatpush1.msra.mxu0 %v1650
    %v1652 = vand.u32 %v1017, 4294901760
    %1653 = vmatprep.subr.mxu0 %v1652
    %v1654 = vand.u32 %v913, 4294901760
    %1655 = vmatpush1.msra.mxu0 %v1654
    %1656 = vmatprep.subr.mxu0 0.0
    %1657 = vmatpush1.msra.mxu0 0.0
    %1658 = vmatprep.subr.mxu0 0.0
    %1659 = vmatpush1.msra.mxu0 0.0
    %1660 = vmatprep.subr.mxu0 0.0
    %1661 = vmatpush1.msra.mxu0 0.0
    %1662 = vmatprep.subr.mxu0 0.0
    %1663 = vmatpush1.msra.mxu0 0.0
    %1664 = vmatprep.subr.mxu0 0.0
    %1665 = vmatpush1.msra.mxu0 0.0
    %1666 = vmatprep.subr.mxu0 0.0
    %1667 = vmatpush1.msra.mxu0 0.0
    %1668 = vmatprep.subr.mxu0 0.0
    %1669 = vmatpush1.msra.mxu0 0.0
    %1670 = vmatprep.subr.mxu0 0.0
    %1671 = vmatpush1.msra.mxu0 0.0
    %1672 = vmatprep.subr.mxu0 0.0
    %1673 = vmatpush1.msra.mxu0 0.0
    %1674 = vmatprep.subr.mxu0 0.0
    %1675 = vmatpush1.msra.mxu0 0.0
    %1676 = vmatprep.subr.mxu0 0.0
    %1677 = vmatpush1.msra.mxu0 0.0
    %1678 = vmatprep.subr.mxu0 0.0
    %1679 = vmatpush1.msra.mxu0 0.0
    %1680 = vmatprep.subr.mxu0 0.0
    %1681 = vmatpush1.msra.mxu0 0.0
    %1682 = vmatprep.subr.mxu0 0.0
    %1683 = vmatpush1.msra.mxu0 0.0
    %1684 = vmatprep.subr.mxu0 0.0
    %1685 = vmatpush1.msra.mxu0 0.0
    %1686 = vmatprep.subr.mxu0 0.0
    %1687 = vmatpush1.msra.mxu0 0.0
    %1688 = vmatprep.subr.mxu0 0.0
    %1689 = vmatpush1.msra.mxu0 0.0
    %1690 = vmatprep.subr.mxu0 0.0
    %1691 = vmatpush1.msra.mxu0 0.0
    %1692 = vmatprep.subr.mxu0 0.0
    %1693 = vmatpush1.msra.mxu0 0.0
    %1694 = vmatprep.subr.mxu0 0.0
    %1695 = vmatpush1.msra.mxu0 0.0
    %1696 = vmatprep.subr.mxu0 0.0
    %1697 = vmatpush1.msra.mxu0 0.0
    %1698 = vmatprep.subr.mxu0 0.0
    %1699 = vmatpush1.msra.mxu0 0.0
    %1700 = vmatprep.subr.mxu0 0.0
    %1701 = vmatpush1.msra.mxu0 0.0
    %1702 = vmatprep.subr.mxu0 0.0
    %1703 = vmatpush1.msra.mxu0 0.0
    %1704 = vmatprep.subr.mxu0 0.0
    %1705 = vmatpush1.msra.mxu0 0.0
    %1706 = vmatprep.subr.mxu0 0.0
    %1707 = vmatpush1.msra.mxu0 0.0
    %1708 = vmatprep.subr.mxu0 0.0
    %1709 = vmatpush1.msra.mxu0 0.0
    %1710 = vmatprep.subr.mxu0 0.0
    %1711 = vmatpush1.msra.mxu0 0.0
    %1712 = vmatprep.mubr.f32.mxu0 0.0
    %v1713 = vand.u32 %v1040, 4294901760
    %1714 = vmatmul.mubr.f32.gmra.mrb[0].mxu0 %v1713
    %v1715 = vpop.f32.mrb[0].mxu0
    %v1716 = vadd.f32 %v1615, %v1715
    %v1717 = vpop.f32.mrb[0].mxu0
    %v1718 = vadd.f32 %v1617, %v1717
    %1719 = vmatprep.mubr.f32.mxu0 0.0
    %v1720 = vand.u32 %v1043, 4294901760
    %1721 = vmatmul.mubr.f32.gmra.mrb[0].mxu0 %v1720
    %v1722 = vpop.f32.mrb[0].mxu0
    %v1723 = vadd.f32 %v1622, %v1722
    %v1724 = vpop.f32.mrb[0].mxu0
    %v1725 = vadd.f32 %v1624, %v1724
    %1726 = vmatprep.mubr.f32.mxu0 0.0
    %v1727 = vand.u32 %v1046, 4294901760
    %1728 = vmatmul.mubr.f32.gmra.mrb[0].mxu0 %v1727
    %v1729 = vpop.f32.mrb[0].mxu0
    %v1730 = vadd.f32 %v1629, %v1729
    %v1731 = vpop.f32.mrb[0].mxu0
    %v1732 = vadd.f32 %v1631, %v1731
    %1733 = vmatprep.mubr.f32.mxu0 0.0
    %v1734 = vand.u32 %v1049, 4294901760
    %1735 = vmatmul.mubr.f32.gmra.mrb[0].mxu0 %v1734
    %v1736 = vpop.f32.mrb[0].mxu0
    %v1737 = vadd.f32 %v1636, %v1736
    %v1738 = vpop.f32.mrb[0].mxu0
    %v1739 = vadd.f32 %v1638, %v1738
    %1740 = vdwg.mxu0
    %v1741 = vand.u32 2147483647, %v1716
    %vm1742 = vcmp.le.f32.partialorder %v1741, 0.7853982
    %vm1743 = vcmp.lt.s32.totalorder %v1716, 0
    %v1744 = vand.u32 %v1716, 2139095040
    %v1745 = vshrl.u32 %v1744, 23
    %v1746 = vsub.s32 %v1745, 127
    %v1747 = vand.u32 2147483647, %v1716
    %v1748 = vand.u32 %v1747, 8388607
    %v1749 = vor.u32 %v1748, 8388608
    %v1750 = vsub.s32 0, %v1749
    %v1751 = vadd.s32 %v1746, 1
    %vm1752 = vcmp.gt.s32.totalorder %v1751, 0
    %v1753 = vsel %vm1752, %v1751, 0
    %v1754 = vshrl.u32 %v1753, 5
    %v1755 = vand.u32 %v1753, 31
    %v1756 = vsub.s32 32, %v1755
    %v1757 = vshrl.u32 683565275, %v1756
    %v1758 = vshll.u32 683565275, %v1755
    %v1759 = vshrl.u32 2475754826, %v1756
    %v1760 = vor.u32 %v1758, %v1759
    %v1761 = vshll.u32 2475754826, %v1755
    %v1762 = vshrl.u32 2131351028, %v1756
    %v1763 = vor.u32 %v1761, %v1762
    %v1764 = vshll.u32 2131351028, %v1755
    %v1765 = vshrl.u32 2102212464, %v1756
    %v1766 = vor.u32 %v1764, %v1765
    %v1767 = vshll.u32 2102212464, %v1755
    %v1768 = vshrl.u32 920167782, %v1756
    %v1769 = vor.u32 %v1767, %v1768
    %v1770 = vshll.u32 920167782, %v1755
    %v1771 = vshrl.u32 1326507024, %v1756
    %v1772 = vor.u32 %v1770, %v1771
    %vm1773 = vcmp.lt.s32.totalorder %v1754, 1
    %vm1774 = vcmp.lt.s32.totalorder %v1754, 2
    %vm1775 = vcmp.lt.s32.totalorder %v1754, 3
    %vm1776 = vcmp.lt.s32.totalorder %v1754, 4
    %v1777 = vsel %vm1773, %v1757, %v1760
    %v1778 = vsel %vm1776, %v1766, 2102212464
    %v1779 = vsel %vm1775, %v1763, %v1778
    %v1780 = vsel %vm1774, %v1777, %v1779
    %v1781 = vsel %vm1773, %v1760, %v1763
    %v1782 = vsel %vm1776, %v1769, 920167782
    %v1783 = vsel %vm1775, %v1766, %v1782
    %v1784 = vsel %vm1774, %v1781, %v1783
    %v1785 = vsel %vm1773, %v1763, %v1766
    %v1786 = vsel %vm1776, %v1772, 1326507024
    %v1787 = vsel %vm1775, %v1769, %v1786
    %v1788 = vsel %vm1774, %v1785, %v1787
    %v1789 = vshll.u32 %v1749, 8
    %v1790 = vmul.u32.u64.compose %v1789, %v1788
    %v1791 = vextract.low.u32 %v1790
    %v1792 = vextract.high.u32 %v1790
    %v1793 = vmul.u32.u64.compose %v1789, %v1784
    %v1794 = vextract.low.u32 %v1793
    %v1795 = vextract.high.u32 %v1793
    %v1796 = vmul.u32 %v1789, %v1780
    %v1797 = vadd.s32 %v1792, %v1794
    %vm1798 = vc.u32 %v1792, %v1794
    %v1799 = vadd.s32 %v1795, 1
    %v1800 = vsel %vm1798, %v1799, %v1795
    %v1801 = vadd.s32 %v1796, %v1800
    %v1802 = vadd.s32 %v1801, 536870912
    %v1803 = vshrl.u32 %v1802, 30
    %v1804 = vshll.u32 %v1803, 30
    %v1805 = vsub.s32 %v1801, %v1804
    %vm1806 = vcmp.lt.s32.totalorder %v1805, 0
    %v1807 = vsub.s32 0, %v1805
    %v1808 = vsel %vm1806, %v1807, %v1805
    %v1809 = vclz %v1808
    %v1810 = vsub.s32 %v1809, 2
    %vm1811 = vcmp.gt.s32.totalorder 0, %v1810
    %v1812 = vsel %vm1811, 0, %v1810
    %v1813 = vsub.s32 32, %v1812
    %v1814 = vshll.u32 %v1805, %v1812
    %v1815 = vshrl.u32 %v1797, %v1813
    %v1816 = vor.u32 %v1814, %v1815
    %v1817 = vsub.s32 4294967266, %v1812
    %v1818 = vadd.s32 %v1817, 127
    %v1819 = vshll.u32 %v1818, 23
    %v1820 = vor.u32 4788187, %v1819
    %v1821 = vand.u32 2147483647, %v1820
    %v1823 = vcvt.s32.f32 %v1816
    %v1824 = vmul.f32 %v1823, %v1821
    %v1825 = vxor.u32 %v1824, 2147483648
    %v1826 = vsel %vm1743, %v1825, %v1824
    %v1827 = vsub.s32 4, %v1803
    %v1828 = vsel %vm1743, %v1827, %v1803
    %v1829 = vsel %vm1742, %v1716, %v1826
    %v1830 = vsel %vm1742, 0, %v1828
    %v1831 = vcosq.f32.pop %v1829
    %v1832 = vsinq.f32.pop %v1829
    %vm1833 = vweird.f32 %v1716
    %v1834 = vadd.s32 %v1830, 3
    %v1835 = vand.u32 %v1834, 3
    %vm1836 = vcmp.lt.s32.totalorder %v1835, 2
    %vm1837 = vcmp.eq.s32.totalorder %v1835, 0
    %v1838 = vxor.u32 %v1832, 2147483648
    %v1839 = vsel %vm1837, %v1831, %v1838
    %vm1840 = vcmp.eq.s32.totalorder %v1835, 2
    %v1841 = vxor.u32 %v1831, 2147483648
    %v1842 = vsel %vm1840, %v1841, %v1832
    %v1843 = vsel %vm1836, %v1839, %v1842
    %v1844 = vsel %vm1833, nan, %v1843
    %v1845 = vand.u32 2147483647, %v1718
    %vm1846 = vcmp.le.f32.partialorder %v1845, 0.7853982
    %vm1847 = vcmp.lt.s32.totalorder %v1718, 0
    %v1848 = vand.u32 %v1718, 2139095040
    %v1849 = vshrl.u32 %v1848, 23
    %v1850 = vsub.s32 %v1849, 127
    %v1851 = vand.u32 2147483647, %v1718
    %v1852 = vand.u32 %v1851, 8388607
    %v1853 = vor.u32 %v1852, 8388608
    %v1854 = vsub.s32 0, %v1853
    %v1855 = vadd.s32 %v1850, 1
    %vm1856 = vcmp.gt.s32.totalorder %v1855, 0
    %v1857 = vsel %vm1856, %v1855, 0
    %v1858 = vshrl.u32 %v1857, 5
    %v1859 = vand.u32 %v1857, 31
    %v1860 = vsub.s32 32, %v1859
    %v1861 = vshrl.u32 683565275, %v1860
    %v1862 = vshll.u32 683565275, %v1859
    %v1863 = vshrl.u32 2475754826, %v1860
    %v1864 = vor.u32 %v1862, %v1863
    %v1865 = vshll.u32 2475754826, %v1859
    %v1866 = vshrl.u32 2131351028, %v1860
    %v1867 = vor.u32 %v1865, %v1866
    %v1868 = vshll.u32 2131351028, %v1859
    %v1869 = vshrl.u32 2102212464, %v1860
    %v1870 = vor.u32 %v1868, %v1869
    %v1871 = vshll.u32 2102212464, %v1859
    %v1872 = vshrl.u32 920167782, %v1860
    %v1873 = vor.u32 %v1871, %v1872
    %v1874 = vshll.u32 920167782, %v1859
    %v1875 = vshrl.u32 1326507024, %v1860
    %v1876 = vor.u32 %v1874, %v1875
    %vm1877 = vcmp.lt.s32.totalorder %v1858, 1
    %vm1878 = vcmp.lt.s32.totalorder %v1858, 2
    %vm1879 = vcmp.lt.s32.totalorder %v1858, 3
    %vm1880 = vcmp.lt.s32.totalorder %v1858, 4
    %v1881 = vsel %vm1877, %v1861, %v1864
    %v1882 = vsel %vm1880, %v1870, 2102212464
    %v1883 = vsel %vm1879, %v1867, %v1882
    %v1884 = vsel %vm1878, %v1881, %v1883
    %v1885 = vsel %vm1877, %v1864, %v1867
    %v1886 = vsel %vm1880, %v1873, 920167782
    %v1887 = vsel %vm1879, %v1870, %v1886
    %v1888 = vsel %vm1878, %v1885, %v1887
    %v1889 = vsel %vm1877, %v1867, %v1870
    %v1890 = vsel %vm1880, %v1876, 1326507024
    %v1891 = vsel %vm1879, %v1873, %v1890
    %v1892 = vsel %vm1878, %v1889, %v1891
    %v1893 = vshll.u32 %v1853, 8
    %v1894 = vmul.u32.u64.compose %v1893, %v1892
    %v1895 = vextract.low.u32 %v1894
    %v1896 = vextract.high.u32 %v1894
    %v1897 = vmul.u32.u64.compose %v1893, %v1888
    %v1898 = vextract.low.u32 %v1897
    %v1899 = vextract.high.u32 %v1897
    %v1900 = vmul.u32 %v1893, %v1884
    %v1901 = vadd.s32 %v1896, %v1898
    %vm1902 = vc.u32 %v1896, %v1898
    %v1903 = vadd.s32 %v1899, 1
    %v1904 = vsel %vm1902, %v1903, %v1899
    %v1905 = vadd.s32 %v1900, %v1904
    %v1906 = vadd.s32 %v1905, 536870912
    %v1907 = vshrl.u32 %v1906, 30
    %v1908 = vshll.u32 %v1907, 30
    %v1909 = vsub.s32 %v1905, %v1908
    %vm1910 = vcmp.lt.s32.totalorder %v1909, 0
    %v1911 = vsub.s32 0, %v1909
    %v1912 = vsel %vm1910, %v1911, %v1909
    %v1913 = vclz %v1912
    %v1914 = vsub.s32 %v1913, 2
    %vm1915 = vcmp.gt.s32.totalorder 0, %v1914
    %v1916 = vsel %vm1915, 0, %v1914
    %v1917 = vsub.s32 32, %v1916
    %v1918 = vshll.u32 %v1909, %v1916
    %v1919 = vshrl.u32 %v1901, %v1917
    %v1920 = vor.u32 %v1918, %v1919
    %v1921 = vsub.s32 4294967266, %v1916
    %v1922 = vadd.s32 %v1921, 127
    %v1923 = vshll.u32 %v1922, 23
    %v1924 = vor.u32 4788187, %v1923
    %v1925 = vand.u32 2147483647, %v1924
    %v1927 = vcvt.s32.f32 %v1920
    %v1928 = vmul.f32 %v1927, %v1925
    %v1929 = vxor.u32 %v1928, 2147483648
    %v1930 = vsel %vm1847, %v1929, %v1928
    %v1931 = vsub.s32 4, %v1907
    %v1932 = vsel %vm1847, %v1931, %v1907
    %v1933 = vsel %vm1846, %v1718, %v1930
    %v1934 = vsel %vm1846, 0, %v1932
    %v1935 = vcosq.f32.pop %v1933
    %v1936 = vsinq.f32.pop %v1933
    %vm1937 = vweird.f32 %v1718
    %v1938 = vadd.s32 %v1934, 3
    %v1939 = vand.u32 %v1938, 3
    %vm1940 = vcmp.lt.s32.totalorder %v1939, 2
    %vm1941 = vcmp.eq.s32.totalorder %v1939, 0
    %v1942 = vxor.u32 %v1936, 2147483648
    %v1943 = vsel %vm1941, %v1935, %v1942
    %vm1944 = vcmp.eq.s32.totalorder %v1939, 2
    %v1945 = vxor.u32 %v1935, 2147483648
    %v1946 = vsel %vm1944, %v1945, %v1936
    %v1947 = vsel %vm1940, %v1943, %v1946
    %v1948 = vsel %vm1937, nan, %v1947
    %v1949 = vand.u32 2147483647, %v1723
    %vm1950 = vcmp.le.f32.partialorder %v1949, 0.7853982
    %vm1951 = vcmp.lt.s32.totalorder %v1723, 0
    %v1952 = vand.u32 %v1723, 2139095040
    %v1953 = vshrl.u32 %v1952, 23
    %v1954 = vsub.s32 %v1953, 127
    %v1955 = vand.u32 2147483647, %v1723
    %v1956 = vand.u32 %v1955, 8388607
    %v1957 = vor.u32 %v1956, 8388608
    %v1958 = vsub.s32 0, %v1957
    %v1959 = vadd.s32 %v1954, 1
    %vm1960 = vcmp.gt.s32.totalorder %v1959, 0
    %v1961 = vsel %vm1960, %v1959, 0
    %v1962 = vshrl.u32 %v1961, 5
    %v1963 = vand.u32 %v1961, 31
    %v1964 = vsub.s32 32, %v1963
    %v1965 = vshrl.u32 683565275, %v1964
    %v1966 = vshll.u32 683565275, %v1963
    %v1967 = vshrl.u32 2475754826, %v1964
    %v1968 = vor.u32 %v1966, %v1967
    %v1969 = vshll.u32 2475754826, %v1963
    %v1970 = vshrl.u32 2131351028, %v1964
    %v1971 = vor.u32 %v1969, %v1970
    %v1972 = vshll.u32 2131351028, %v1963
    %v1973 = vshrl.u32 2102212464, %v1964
    %v1974 = vor.u32 %v1972, %v1973
    %v1975 = vshll.u32 2102212464, %v1963
    %v1976 = vshrl.u32 920167782, %v1964
    %v1977 = vor.u32 %v1975, %v1976
    %v1978 = vshll.u32 920167782, %v1963
    %v1979 = vshrl.u32 1326507024, %v1964
    %v1980 = vor.u32 %v1978, %v1979
    %vm1981 = vcmp.lt.s32.totalorder %v1962, 1
    %vm1982 = vcmp.lt.s32.totalorder %v1962, 2
    %vm1983 = vcmp.lt.s32.totalorder %v1962, 3
    %vm1984 = vcmp.lt.s32.totalorder %v1962, 4
    %v1985 = vsel %vm1981, %v1965, %v1968
    %v1986 = vsel %vm1984, %v1974, 2102212464
    %v1987 = vsel %vm1983, %v1971, %v1986
    %v1988 = vsel %vm1982, %v1985, %v1987
    %v1989 = vsel %vm1981, %v1968, %v1971
    %v1990 = vsel %vm1984, %v1977, 920167782
    %v1991 = vsel %vm1983, %v1974, %v1990
    %v1992 = vsel %vm1982, %v1989, %v1991
    %v1993 = vsel %vm1981, %v1971, %v1974
    %v1994 = vsel %vm1984, %v1980, 1326507024
    %v1995 = vsel %vm1983, %v1977, %v1994
    %v1996 = vsel %vm1982, %v1993, %v1995
    %v1997 = vshll.u32 %v1957, 8
    %v1998 = vmul.u32.u64.compose %v1997, %v1996
    %v1999 = vextract.low.u32 %v1998
    %v2000 = vextract.high.u32 %v1998
    %v2001 = vmul.u32.u64.compose %v1997, %v1992
    %v2002 = vextract.low.u32 %v2001
    %v2003 = vextract.high.u32 %v2001
    %v2004 = vmul.u32 %v1997, %v1988
    %v2005 = vadd.s32 %v2000, %v2002
    %vm2006 = vc.u32 %v2000, %v2002
    %v2007 = vadd.s32 %v2003, 1
    %v2008 = vsel %vm2006, %v2007, %v2003
    %v2009 = vadd.s32 %v2004, %v2008
    %v2010 = vadd.s32 %v2009, 536870912
    %v2011 = vshrl.u32 %v2010, 30
    %v2012 = vshll.u32 %v2011, 30
    %v2013 = vsub.s32 %v2009, %v2012
    %vm2014 = vcmp.lt.s32.totalorder %v2013, 0
    %v2015 = vsub.s32 0, %v2013
    %v2016 = vsel %vm2014, %v2015, %v2013
    %v2017 = vclz %v2016
    %v2018 = vsub.s32 %v2017, 2
    %vm2019 = vcmp.gt.s32.totalorder 0, %v2018
    %v2020 = vsel %vm2019, 0, %v2018
    %v2021 = vsub.s32 32, %v2020
    %v2022 = vshll.u32 %v2013, %v2020
    %v2023 = vshrl.u32 %v2005, %v2021
    %v2024 = vor.u32 %v2022, %v2023
    %v2025 = vsub.s32 4294967266, %v2020
    %v2026 = vadd.s32 %v2025, 127
    %v2027 = vshll.u32 %v2026, 23
    %v2028 = vor.u32 4788187, %v2027
    %v2029 = vand.u32 2147483647, %v2028
    %v2031 = vcvt.s32.f32 %v2024
    %v2032 = vmul.f32 %v2031, %v2029
    %v2033 = vxor.u32 %v2032, 2147483648
    %v2034 = vsel %vm1951, %v2033, %v2032
    %v2035 = vsub.s32 4, %v2011
    %v2036 = vsel %vm1951, %v2035, %v2011
    %v2037 = vsel %vm1950, %v1723, %v2034
    %v2038 = vsel %vm1950, 0, %v2036
    %v2039 = vcosq.f32.pop %v2037
    %v2040 = vsinq.f32.pop %v2037
    %vm2041 = vweird.f32 %v1723
    %v2042 = vadd.s32 %v2038, 3
    %v2043 = vand.u32 %v2042, 3
    %vm2044 = vcmp.lt.s32.totalorder %v2043, 2
    %vm2045 = vcmp.eq.s32.totalorder %v2043, 0
    %v2046 = vxor.u32 %v2040, 2147483648
    %v2047 = vsel %vm2045, %v2039, %v2046
    %vm2048 = vcmp.eq.s32.totalorder %v2043, 2
    %v2049 = vxor.u32 %v2039, 2147483648
    %v2050 = vsel %vm2048, %v2049, %v2040
    %v2051 = vsel %vm2044, %v2047, %v2050
    %v2052 = vsel %vm2041, nan, %v2051
    %v2053 = vand.u32 2147483647, %v1725
    %vm2054 = vcmp.le.f32.partialorder %v2053, 0.7853982
    %vm2055 = vcmp.lt.s32.totalorder %v1725, 0
    %v2056 = vand.u32 %v1725, 2139095040
    %v2057 = vshrl.u32 %v2056, 23
    %v2058 = vsub.s32 %v2057, 127
    %v2059 = vand.u32 2147483647, %v1725
    %v2060 = vand.u32 %v2059, 8388607
    %v2061 = vor.u32 %v2060, 8388608
    %v2062 = vsub.s32 0, %v2061
    %v2063 = vadd.s32 %v2058, 1
    %vm2064 = vcmp.gt.s32.totalorder %v2063, 0
    %v2065 = vsel %vm2064, %v2063, 0
    %v2066 = vshrl.u32 %v2065, 5
    %v2067 = vand.u32 %v2065, 31
    %v2068 = vsub.s32 32, %v2067
    %v2069 = vshrl.u32 683565275, %v2068
    %v2070 = vshll.u32 683565275, %v2067
    %v2071 = vshrl.u32 2475754826, %v2068
    %v2072 = vor.u32 %v2070, %v2071
    %v2073 = vshll.u32 2475754826, %v2067
    %v2074 = vshrl.u32 2131351028, %v2068
    %v2075 = vor.u32 %v2073, %v2074
    %v2076 = vshll.u32 2131351028, %v2067
    %v2077 = vshrl.u32 2102212464, %v2068
    %v2078 = vor.u32 %v2076, %v2077
    %v2079 = vshll.u32 2102212464, %v2067
    %v2080 = vshrl.u32 920167782, %v2068
    %v2081 = vor.u32 %v2079, %v2080
    %v2082 = vshll.u32 920167782, %v2067
    %v2083 = vshrl.u32 1326507024, %v2068
    %v2084 = vor.u32 %v2082, %v2083
    %vm2085 = vcmp.lt.s32.totalorder %v2066, 1
    %vm2086 = vcmp.lt.s32.totalorder %v2066, 2
    %vm2087 = vcmp.lt.s32.totalorder %v2066, 3
    %vm2088 = vcmp.lt.s32.totalorder %v2066, 4
    %v2089 = vsel %vm2085, %v2069, %v2072
    %v2090 = vsel %vm2088, %v2078, 2102212464
    %v2091 = vsel %vm2087, %v2075, %v2090
    %v2092 = vsel %vm2086, %v2089, %v2091
    %v2093 = vsel %vm2085, %v2072, %v2075
    %v2094 = vsel %vm2088, %v2081, 920167782
    %v2095 = vsel %vm2087, %v2078, %v2094
    %v2096 = vsel %vm2086, %v2093, %v2095
    %v2097 = vsel %vm2085, %v2075, %v2078
    %v2098 = vsel %vm2088, %v2084, 1326507024
    %v2099 = vsel %vm2087, %v2081, %v2098
    %v2100 = vsel %vm2086, %v2097, %v2099
    %v2101 = vshll.u32 %v2061, 8
    %v2102 = vmul.u32.u64.compose %v2101, %v2100
    %v2103 = vextract.low.u32 %v2102
    %v2104 = vextract.high.u32 %v2102
    %v2105 = vmul.u32.u64.compose %v2101, %v2096
    %v2106 = vextract.low.u32 %v2105
    %v2107 = vextract.high.u32 %v2105
    %v2108 = vmul.u32 %v2101, %v2092
    %v2109 = vadd.s32 %v2104, %v2106
    %vm2110 = vc.u32 %v2104, %v2106
    %v2111 = vadd.s32 %v2107, 1
    %v2112 = vsel %vm2110, %v2111, %v2107
    %v2113 = vadd.s32 %v2108, %v2112
    %v2114 = vadd.s32 %v2113, 536870912
    %v2115 = vshrl.u32 %v2114, 30
    %v2116 = vshll.u32 %v2115, 30
    %v2117 = vsub.s32 %v2113, %v2116
    %vm2118 = vcmp.lt.s32.totalorder %v2117, 0
    %v2119 = vsub.s32 0, %v2117
    %v2120 = vsel %vm2118, %v2119, %v2117
    %v2121 = vclz %v2120
    %v2122 = vsub.s32 %v2121, 2
    %vm2123 = vcmp.gt.s32.totalorder 0, %v2122
    %v2124 = vsel %vm2123, 0, %v2122
    %v2125 = vsub.s32 32, %v2124
    %v2126 = vshll.u32 %v2117, %v2124
    %v2127 = vshrl.u32 %v2109, %v2125
    %v2128 = vor.u32 %v2126, %v2127
    %v2129 = vsub.s32 4294967266, %v2124
    %v2130 = vadd.s32 %v2129, 127
    %v2131 = vshll.u32 %v2130, 23
    %v2132 = vor.u32 4788187, %v2131
    %v2133 = vand.u32 2147483647, %v2132
    %v2135 = vcvt.s32.f32 %v2128
    %v2136 = vmul.f32 %v2135, %v2133
    %v2137 = vxor.u32 %v2136, 2147483648
    %v2138 = vsel %vm2055, %v2137, %v2136
    %v2139 = vsub.s32 4, %v2115
    %v2140 = vsel %vm2055, %v2139, %v2115
    %v2141 = vsel %vm2054, %v1725, %v2138
    %v2142 = vsel %vm2054, 0, %v2140
    %v2143 = vcosq.f32.pop %v2141
    %v2144 = vsinq.f32.pop %v2141
    %vm2145 = vweird.f32 %v1725
    %v2146 = vadd.s32 %v2142, 3
    %v2147 = vand.u32 %v2146, 3
    %vm2148 = vcmp.lt.s32.totalorder %v2147, 2
    %vm2149 = vcmp.eq.s32.totalorder %v2147, 0
    %v2150 = vxor.u32 %v2144, 2147483648
    %v2151 = vsel %vm2149, %v2143, %v2150
    %vm2152 = vcmp.eq.s32.totalorder %v2147, 2
    %v2153 = vxor.u32 %v2143, 2147483648
    %v2154 = vsel %vm2152, %v2153, %v2144
    %v2155 = vsel %vm2148, %v2151, %v2154
    %v2156 = vsel %vm2145, nan, %v2155
    %v2157 = vand.u32 2147483647, %v1730
    %vm2158 = vcmp.le.f32.partialorder %v2157, 0.7853982
    %vm2159 = vcmp.lt.s32.totalorder %v1730, 0
    %v2160 = vand.u32 %v1730, 2139095040
    %v2161 = vshrl.u32 %v2160, 23
    %v2162 = vsub.s32 %v2161, 127
    %v2163 = vand.u32 2147483647, %v1730
    %v2164 = vand.u32 %v2163, 8388607
    %v2165 = vor.u32 %v2164, 8388608
    %v2166 = vsub.s32 0, %v2165
    %v2167 = vadd.s32 %v2162, 1
    %vm2168 = vcmp.gt.s32.totalorder %v2167, 0
    %v2169 = vsel %vm2168, %v2167, 0
    %v2170 = vshrl.u32 %v2169, 5
    %v2171 = vand.u32 %v2169, 31
    %v2172 = vsub.s32 32, %v2171
    %v2173 = vshrl.u32 683565275, %v2172
    %v2174 = vshll.u32 683565275, %v2171
    %v2175 = vshrl.u32 2475754826, %v2172
    %v2176 = vor.u32 %v2174, %v2175
    %v2177 = vshll.u32 2475754826, %v2171
    %v2178 = vshrl.u32 2131351028, %v2172
    %v2179 = vor.u32 %v2177, %v2178
    %v2180 = vshll.u32 2131351028, %v2171
    %v2181 = vshrl.u32 2102212464, %v2172
    %v2182 = vor.u32 %v2180, %v2181
    %v2183 = vshll.u32 2102212464, %v2171
    %v2184 = vshrl.u32 920167782, %v2172
    %v2185 = vor.u32 %v2183, %v2184
    %v2186 = vshll.u32 920167782, %v2171
    %v2187 = vshrl.u32 1326507024, %v2172
    %v2188 = vor.u32 %v2186, %v2187
    %vm2189 = vcmp.lt.s32.totalorder %v2170, 1
    %vm2190 = vcmp.lt.s32.totalorder %v2170, 2
    %vm2191 = vcmp.lt.s32.totalorder %v2170, 3
    %vm2192 = vcmp.lt.s32.totalorder %v2170, 4
    %v2193 = vsel %vm2189, %v2173, %v2176
    %v2194 = vsel %vm2192, %v2182, 2102212464
    %v2195 = vsel %vm2191, %v2179, %v2194
    %v2196 = vsel %vm2190, %v2193, %v2195
    %v2197 = vsel %vm2189, %v2176, %v2179
    %v2198 = vsel %vm2192, %v2185, 920167782
    %v2199 = vsel %vm2191, %v2182, %v2198
    %v2200 = vsel %vm2190, %v2197, %v2199
    %v2201 = vsel %vm2189, %v2179, %v2182
    %v2202 = vsel %vm2192, %v2188, 1326507024
    %v2203 = vsel %vm2191, %v2185, %v2202
    %v2204 = vsel %vm2190, %v2201, %v2203
    %v2205 = vshll.u32 %v2165, 8
    %v2206 = vmul.u32.u64.compose %v2205, %v2204
    %v2207 = vextract.low.u32 %v2206
    %v2208 = vextract.high.u32 %v2206
    %v2209 = vmul.u32.u64.compose %v2205, %v2200
    %v2210 = vextract.low.u32 %v2209
    %v2211 = vextract.high.u32 %v2209
    %v2212 = vmul.u32 %v2205, %v2196
    %v2213 = vadd.s32 %v2208, %v2210
    %vm2214 = vc.u32 %v2208, %v2210
    %v2215 = vadd.s32 %v2211, 1
    %v2216 = vsel %vm2214, %v2215, %v2211
    %v2217 = vadd.s32 %v2212, %v2216
    %v2218 = vadd.s32 %v2217, 536870912
    %v2219 = vshrl.u32 %v2218, 30
    %v2220 = vshll.u32 %v2219, 30
    %v2221 = vsub.s32 %v2217, %v2220
    %vm2222 = vcmp.lt.s32.totalorder %v2221, 0
    %v2223 = vsub.s32 0, %v2221
    %v2224 = vsel %vm2222, %v2223, %v2221
    %v2225 = vclz %v2224
    %v2226 = vsub.s32 %v2225, 2
    %vm2227 = vcmp.gt.s32.totalorder 0, %v2226
    %v2228 = vsel %vm2227, 0, %v2226
    %v2229 = vsub.s32 32, %v2228
    %v2230 = vshll.u32 %v2221, %v2228
    %v2231 = vshrl.u32 %v2213, %v2229
    %v2232 = vor.u32 %v2230, %v2231
    %v2233 = vsub.s32 4294967266, %v2228
    %v2234 = vadd.s32 %v2233, 127
    %v2235 = vshll.u32 %v2234, 23
    %v2236 = vor.u32 4788187, %v2235
    %v2237 = vand.u32 2147483647, %v2236
    %v2239 = vcvt.s32.f32 %v2232
    %v2240 = vmul.f32 %v2239, %v2237
    %v2241 = vxor.u32 %v2240, 2147483648
    %v2242 = vsel %vm2159, %v2241, %v2240
    %v2243 = vsub.s32 4, %v2219
    %v2244 = vsel %vm2159, %v2243, %v2219
    %v2245 = vsel %vm2158, %v1730, %v2242
    %v2246 = vsel %vm2158, 0, %v2244
    %v2247 = vcosq.f32.pop %v2245
    %v2248 = vsinq.f32.pop %v2245
    %vm2249 = vweird.f32 %v1730
    %v2250 = vadd.s32 %v2246, 3
    %v2251 = vand.u32 %v2250, 3
    %vm2252 = vcmp.lt.s32.totalorder %v2251, 2
    %vm2253 = vcmp.eq.s32.totalorder %v2251, 0
    %v2254 = vxor.u32 %v2248, 2147483648
    %v2255 = vsel %vm2253, %v2247, %v2254
    %vm2256 = vcmp.eq.s32.totalorder %v2251, 2
    %v2257 = vxor.u32 %v2247, 2147483648
    %v2258 = vsel %vm2256, %v2257, %v2248
    %v2259 = vsel %vm2252, %v2255, %v2258
    %v2260 = vsel %vm2249, nan, %v2259
    %v2261 = vand.u32 2147483647, %v1732
    %vm2262 = vcmp.le.f32.partialorder %v2261, 0.7853982
    %vm2263 = vcmp.lt.s32.totalorder %v1732, 0
    %v2264 = vand.u32 %v1732, 2139095040
    %v2265 = vshrl.u32 %v2264, 23
    %v2266 = vsub.s32 %v2265, 127
    %v2267 = vand.u32 2147483647, %v1732
    %v2268 = vand.u32 %v2267, 8388607
    %v2269 = vor.u32 %v2268, 8388608
    %v2270 = vsub.s32 0, %v2269
    %v2271 = vadd.s32 %v2266, 1
    %vm2272 = vcmp.gt.s32.totalorder %v2271, 0
    %v2273 = vsel %vm2272, %v2271, 0
    %v2274 = vshrl.u32 %v2273, 5
    %v2275 = vand.u32 %v2273, 31
    %v2276 = vsub.s32 32, %v2275
    %v2277 = vshrl.u32 683565275, %v2276
    %v2278 = vshll.u32 683565275, %v2275
    %v2279 = vshrl.u32 2475754826, %v2276
    %v2280 = vor.u32 %v2278, %v2279
    %v2281 = vshll.u32 2475754826, %v2275
    %v2282 = vshrl.u32 2131351028, %v2276
    %v2283 = vor.u32 %v2281, %v2282
    %v2284 = vshll.u32 2131351028, %v2275
    %v2285 = vshrl.u32 2102212464, %v2276
    %v2286 = vor.u32 %v2284, %v2285
    %v2287 = vshll.u32 2102212464, %v2275
    %v2288 = vshrl.u32 920167782, %v2276
    %v2289 = vor.u32 %v2287, %v2288
    %v2290 = vshll.u32 920167782, %v2275
    %v2291 = vshrl.u32 1326507024, %v2276
    %v2292 = vor.u32 %v2290, %v2291
    %vm2293 = vcmp.lt.s32.totalorder %v2274, 1
    %vm2294 = vcmp.lt.s32.totalorder %v2274, 2
    %vm2295 = vcmp.lt.s32.totalorder %v2274, 3
    %vm2296 = vcmp.lt.s32.totalorder %v2274, 4
    %v2297 = vsel %vm2293, %v2277, %v2280
    %v2298 = vsel %vm2296, %v2286, 2102212464
    %v2299 = vsel %vm2295, %v2283, %v2298
    %v2300 = vsel %vm2294, %v2297, %v2299
    %v2301 = vsel %vm2293, %v2280, %v2283
    %v2302 = vsel %vm2296, %v2289, 920167782
    %v2303 = vsel %vm2295, %v2286, %v2302
    %v2304 = vsel %vm2294, %v2301, %v2303
    %v2305 = vsel %vm2293, %v2283, %v2286
    %v2306 = vsel %vm2296, %v2292, 1326507024
    %v2307 = vsel %vm2295, %v2289, %v2306
    %v2308 = vsel %vm2294, %v2305, %v2307
    %v2309 = vshll.u32 %v2269, 8
    %v2310 = vmul.u32.u64.compose %v2309, %v2308
    %v2311 = vextract.low.u32 %v2310
    %v2312 = vextract.high.u32 %v2310
    %v2313 = vmul.u32.u64.compose %v2309, %v2304
    %v2314 = vextract.low.u32 %v2313
    %v2315 = vextract.high.u32 %v2313
    %v2316 = vmul.u32 %v2309, %v2300
    %v2317 = vadd.s32 %v2312, %v2314
    %vm2318 = vc.u32 %v2312, %v2314
    %v2319 = vadd.s32 %v2315, 1
    %v2320 = vsel %vm2318, %v2319, %v2315
    %v2321 = vadd.s32 %v2316, %v2320
    %v2322 = vadd.s32 %v2321, 536870912
    %v2323 = vshrl.u32 %v2322, 30
    %v2324 = vshll.u32 %v2323, 30
    %v2325 = vsub.s32 %v2321, %v2324
    %vm2326 = vcmp.lt.s32.totalorder %v2325, 0
    %v2327 = vsub.s32 0, %v2325
    %v2328 = vsel %vm2326, %v2327, %v2325
    %v2329 = vclz %v2328
    %v2330 = vsub.s32 %v2329, 2
    %vm2331 = vcmp.gt.s32.totalorder 0, %v2330
    %v2332 = vsel %vm2331, 0, %v2330
    %v2333 = vsub.s32 32, %v2332
    %v2334 = vshll.u32 %v2325, %v2332
    %v2335 = vshrl.u32 %v2317, %v2333
    %v2336 = vor.u32 %v2334, %v2335
    %v2337 = vsub.s32 4294967266, %v2332
    %v2338 = vadd.s32 %v2337, 127
    %v2339 = vshll.u32 %v2338, 23
    %v2340 = vor.u32 4788187, %v2339
    %v2341 = vand.u32 2147483647, %v2340
    %v2343 = vcvt.s32.f32 %v2336
    %v2344 = vmul.f32 %v2343, %v2341
    %v2345 = vxor.u32 %v2344, 2147483648
    %v2346 = vsel %vm2263, %v2345, %v2344
    %v2347 = vsub.s32 4, %v2323
    %v2348 = vsel %vm2263, %v2347, %v2323
    %v2349 = vsel %vm2262, %v1732, %v2346
    %v2350 = vsel %vm2262, 0, %v2348
    %v2351 = vcosq.f32.pop %v2349
    %v2352 = vsinq.f32.pop %v2349
    %vm2353 = vweird.f32 %v1732
    %v2354 = vadd.s32 %v2350, 3
    %v2355 = vand.u32 %v2354, 3
    %vm2356 = vcmp.lt.s32.totalorder %v2355, 2
    %vm2357 = vcmp.eq.s32.totalorder %v2355, 0
    %v2358 = vxor.u32 %v2352, 2147483648
    %v2359 = vsel %vm2357, %v2351, %v2358
    %vm2360 = vcmp.eq.s32.totalorder %v2355, 2
    %v2361 = vxor.u32 %v2351, 2147483648
    %v2362 = vsel %vm2360, %v2361, %v2352
    %v2363 = vsel %vm2356, %v2359, %v2362
    %v2364 = vsel %vm2353, nan, %v2363
    %v2365 = vand.u32 2147483647, %v1737
    %vm2366 = vcmp.le.f32.partialorder %v2365, 0.7853982
    %vm2367 = vcmp.lt.s32.totalorder %v1737, 0
    %v2368 = vand.u32 %v1737, 2139095040
    %v2369 = vshrl.u32 %v2368, 23
    %v2370 = vsub.s32 %v2369, 127
    %v2371 = vand.u32 2147483647, %v1737
    %v2372 = vand.u32 %v2371, 8388607
    %v2373 = vor.u32 %v2372, 8388608
    %v2374 = vsub.s32 0, %v2373
    %v2375 = vadd.s32 %v2370, 1
    %vm2376 = vcmp.gt.s32.totalorder %v2375, 0
    %v2377 = vsel %vm2376, %v2375, 0
    %v2378 = vshrl.u32 %v2377, 5
    %v2379 = vand.u32 %v2377, 31
    %v2380 = vsub.s32 32, %v2379
    %v2381 = vshrl.u32 683565275, %v2380
    %v2382 = vshll.u32 683565275, %v2379
    %v2383 = vshrl.u32 2475754826, %v2380
    %v2384 = vor.u32 %v2382, %v2383
    %v2385 = vshll.u32 2475754826, %v2379
    %v2386 = vshrl.u32 2131351028, %v2380
    %v2387 = vor.u32 %v2385, %v2386
    %v2388 = vshll.u32 2131351028, %v2379
    %v2389 = vshrl.u32 2102212464, %v2380
    %v2390 = vor.u32 %v2388, %v2389
    %v2391 = vshll.u32 2102212464, %v2379
    %v2392 = vshrl.u32 920167782, %v2380
    %v2393 = vor.u32 %v2391, %v2392
    %v2394 = vshll.u32 920167782, %v2379
    %v2395 = vshrl.u32 1326507024, %v2380
    %v2396 = vor.u32 %v2394, %v2395
    %vm2397 = vcmp.lt.s32.totalorder %v2378, 1
    %vm2398 = vcmp.lt.s32.totalorder %v2378, 2
    %vm2399 = vcmp.lt.s32.totalorder %v2378, 3
    %vm2400 = vcmp.lt.s32.totalorder %v2378, 4
    %v2401 = vsel %vm2397, %v2381, %v2384
    %v2402 = vsel %vm2400, %v2390, 2102212464
    %v2403 = vsel %vm2399, %v2387, %v2402
    %v2404 = vsel %vm2398, %v2401, %v2403
    %v2405 = vsel %vm2397, %v2384, %v2387
    %v2406 = vsel %vm2400, %v2393, 920167782
    %v2407 = vsel %vm2399, %v2390, %v2406
    %v2408 = vsel %vm2398, %v2405, %v2407
    %v2409 = vsel %vm2397, %v2387, %v2390
    %v2410 = vsel %vm2400, %v2396, 1326507024
    %v2411 = vsel %vm2399, %v2393, %v2410
    %v2412 = vsel %vm2398, %v2409, %v2411
    %v2413 = vshll.u32 %v2373, 8
    %v2414 = vmul.u32.u64.compose %v2413, %v2412
    %v2415 = vextract.low.u32 %v2414
    %v2416 = vextract.high.u32 %v2414
    %v2417 = vmul.u32.u64.compose %v2413, %v2408
    %v2418 = vextract.low.u32 %v2417
    %v2419 = vextract.high.u32 %v2417
    %v2420 = vmul.u32 %v2413, %v2404
    %v2421 = vadd.s32 %v2416, %v2418
    %vm2422 = vc.u32 %v2416, %v2418
    %v2423 = vadd.s32 %v2419, 1
    %v2424 = vsel %vm2422, %v2423, %v2419
    %v2425 = vadd.s32 %v2420, %v2424
    %v2426 = vadd.s32 %v2425, 536870912
    %v2427 = vshrl.u32 %v2426, 30
    %v2428 = vshll.u32 %v2427, 30
    %v2429 = vsub.s32 %v2425, %v2428
    %vm2430 = vcmp.lt.s32.totalorder %v2429, 0
    %v2431 = vsub.s32 0, %v2429
    %v2432 = vsel %vm2430, %v2431, %v2429
    %v2433 = vclz %v2432
    %v2434 = vsub.s32 %v2433, 2
    %vm2435 = vcmp.gt.s32.totalorder 0, %v2434
    %v2436 = vsel %vm2435, 0, %v2434
    %v2437 = vsub.s32 32, %v2436
    %v2438 = vshll.u32 %v2429, %v2436
    %v2439 = vshrl.u32 %v2421, %v2437
    %v2440 = vor.u32 %v2438, %v2439
    %v2441 = vsub.s32 4294967266, %v2436
    %v2442 = vadd.s32 %v2441, 127
    %v2443 = vshll.u32 %v2442, 23
    %v2444 = vor.u32 4788187, %v2443
    %v2445 = vand.u32 2147483647, %v2444
    %v2447 = vcvt.s32.f32 %v2440
    %v2448 = vmul.f32 %v2447, %v2445
    %v2449 = vxor.u32 %v2448, 2147483648
    %v2450 = vsel %vm2367, %v2449, %v2448
    %v2451 = vsub.s32 4, %v2427
    %v2452 = vsel %vm2367, %v2451, %v2427
    %v2453 = vsel %vm2366, %v1737, %v2450
    %v2454 = vsel %vm2366, 0, %v2452
    %v2455 = vcosq.f32.pop %v2453
    %v2456 = vsinq.f32.pop %v2453
    %vm2457 = vweird.f32 %v1737
    %v2458 = vadd.s32 %v2454, 3
    %v2459 = vand.u32 %v2458, 3
    %vm2460 = vcmp.lt.s32.totalorder %v2459, 2
    %vm2461 = vcmp.eq.s32.totalorder %v2459, 0
    %v2462 = vxor.u32 %v2456, 2147483648
    %v2463 = vsel %vm2461, %v2455, %v2462
    %vm2464 = vcmp.eq.s32.totalorder %v2459, 2
    %v2465 = vxor.u32 %v2455, 2147483648
    %v2466 = vsel %vm2464, %v2465, %v2456
    %v2467 = vsel %vm2460, %v2463, %v2466
    %v2468 = vsel %vm2457, nan, %v2467
    %v2469 = vand.u32 2147483647, %v1739
    %vm2470 = vcmp.le.f32.partialorder %v2469, 0.7853982
    %vm2471 = vcmp.lt.s32.totalorder %v1739, 0
    %v2472 = vand.u32 %v1739, 2139095040
    %v2473 = vshrl.u32 %v2472, 23
    %v2474 = vsub.s32 %v2473, 127
    %v2475 = vand.u32 2147483647, %v1739
    %v2476 = vand.u32 %v2475, 8388607
    %v2477 = vor.u32 %v2476, 8388608
    %v2478 = vsub.s32 0, %v2477
    %v2479 = vadd.s32 %v2474, 1
    %vm2480 = vcmp.gt.s32.totalorder %v2479, 0
    %v2481 = vsel %vm2480, %v2479, 0
    %v2482 = vshrl.u32 %v2481, 5
    %v2483 = vand.u32 %v2481, 31
    %v2484 = vsub.s32 32, %v2483
    %v2485 = vshrl.u32 683565275, %v2484
    %v2486 = vshll.u32 683565275, %v2483
    %v2487 = vshrl.u32 2475754826, %v2484
    %v2488 = vor.u32 %v2486, %v2487
    %v2489 = vshll.u32 2475754826, %v2483
    %v2490 = vshrl.u32 2131351028, %v2484
    %v2491 = vor.u32 %v2489, %v2490
    %v2492 = vshll.u32 2131351028, %v2483
    %v2493 = vshrl.u32 2102212464, %v2484
    %v2494 = vor.u32 %v2492, %v2493
    %v2495 = vshll.u32 2102212464, %v2483
    %v2496 = vshrl.u32 920167782, %v2484
    %v2497 = vor.u32 %v2495, %v2496
    %v2498 = vshll.u32 920167782, %v2483
    %v2499 = vshrl.u32 1326507024, %v2484
    %v2500 = vor.u32 %v2498, %v2499
    %vm2501 = vcmp.lt.s32.totalorder %v2482, 1
    %vm2502 = vcmp.lt.s32.totalorder %v2482, 2
    %vm2503 = vcmp.lt.s32.totalorder %v2482, 3
    %vm2504 = vcmp.lt.s32.totalorder %v2482, 4
    %v2505 = vsel %vm2501, %v2485, %v2488
    %v2506 = vsel %vm2504, %v2494, 2102212464
    %v2507 = vsel %vm2503, %v2491, %v2506
    %v2508 = vsel %vm2502, %v2505, %v2507
    %v2509 = vsel %vm2501, %v2488, %v2491
    %v2510 = vsel %vm2504, %v2497, 920167782
    %v2511 = vsel %vm2503, %v2494, %v2510
    %v2512 = vsel %vm2502, %v2509, %v2511
    %v2513 = vsel %vm2501, %v2491, %v2494
    %v2514 = vsel %vm2504, %v2500, 1326507024
    %v2515 = vsel %vm2503, %v2497, %v2514
    %v2516 = vsel %vm2502, %v2513, %v2515
    %v2517 = vshll.u32 %v2477, 8
    %v2518 = vmul.u32.u64.compose %v2517, %v2516
    %v2519 = vextract.low.u32 %v2518
    %v2520 = vextract.high.u32 %v2518
    %v2521 = vmul.u32.u64.compose %v2517, %v2512
    %v2522 = vextract.low.u32 %v2521
    %v2523 = vextract.high.u32 %v2521
    %v2524 = vmul.u32 %v2517, %v2508
    %v2525 = vadd.s32 %v2520, %v2522
    %vm2526 = vc.u32 %v2520, %v2522
    %v2527 = vadd.s32 %v2523, 1
    %v2528 = vsel %vm2526, %v2527, %v2523
    %v2529 = vadd.s32 %v2524, %v2528
    %v2530 = vadd.s32 %v2529, 536870912
    %v2531 = vshrl.u32 %v2530, 30
    %v2532 = vshll.u32 %v2531, 30
    %v2533 = vsub.s32 %v2529, %v2532
    %vm2534 = vcmp.lt.s32.totalorder %v2533, 0
    %v2535 = vsub.s32 0, %v2533
    %v2536 = vsel %vm2534, %v2535, %v2533
    %v2537 = vclz %v2536
    %v2538 = vsub.s32 %v2537, 2
    %vm2539 = vcmp.gt.s32.totalorder 0, %v2538
    %v2540 = vsel %vm2539, 0, %v2538
    %v2541 = vsub.s32 32, %v2540
    %v2542 = vshll.u32 %v2533, %v2540
    %v2543 = vshrl.u32 %v2525, %v2541
    %v2544 = vor.u32 %v2542, %v2543
    %v2545 = vsub.s32 4294967266, %v2540
    %v2546 = vadd.s32 %v2545, 127
    %v2547 = vshll.u32 %v2546, 23
    %v2548 = vor.u32 4788187, %v2547
    %v2549 = vand.u32 2147483647, %v2548
    %v2551 = vcvt.s32.f32 %v2544
    %v2552 = vmul.f32 %v2551, %v2549
    %v2553 = vxor.u32 %v2552, 2147483648
    %v2554 = vsel %vm2471, %v2553, %v2552
    %v2555 = vsub.s32 4, %v2531
    %v2556 = vsel %vm2471, %v2555, %v2531
    %v2557 = vsel %vm2470, %v1739, %v2554
    %v2558 = vsel %vm2470, 0, %v2556
    %v2559 = vcosq.f32.pop %v2557
    %v2560 = vsinq.f32.pop %v2557
    %vm2561 = vweird.f32 %v1739
    %v2562 = vadd.s32 %v2558, 3
    %v2563 = vand.u32 %v2562, 3
    %vm2564 = vcmp.lt.s32.totalorder %v2563, 2
    %vm2565 = vcmp.eq.s32.totalorder %v2563, 0
    %v2566 = vxor.u32 %v2560, 2147483648
    %v2567 = vsel %vm2565, %v2559, %v2566
    %vm2568 = vcmp.eq.s32.totalorder %v2563, 2
    %v2569 = vxor.u32 %v2559, 2147483648
    %v2570 = vsel %vm2568, %v2569, %v2560
    %v2571 = vsel %vm2564, %v2567, %v2570
    %v2572 = vsel %vm2561, nan, %v2571
    %2574 = vset.pattern.permute.xlu0 0
    %2575 = vperm.xlu0 %2574, %v51
    %v2576 = vpop.permute.xlu0 %2575
    %2579 = vset.pattern.permute.xlu0 0
    %2580 = vperm.xlu0 %2579, %v52
    %v2581 = vpop.permute.xlu0 %2580
    %2584 = vset.pattern.permute.xlu0 0
    %2585 = vperm.xlu0 %2584, %v53
    %v2586 = vpop.permute.xlu0 %2585
    %2589 = vset.pattern.permute.xlu0 0
    %2590 = vperm.xlu0 %2589, %v54
    %v2591 = vpop.permute.xlu0 %2590
    %v2594 = vsel %vm1038, %v36, 0
    %v2597 = vsel %vm1038, %v37, 0
    %v2600 = vsel %vm1038, %v38, 0
    %v2603 = vsel %vm1038, %v39, 0
    %v2605 = vand.u32 %v1948, 4294901760
    %2606 = vmatprep.subr.mxu0 %v2605
    %v2607 = vand.u32 %v1844, 4294901760
    %2608 = vmatpush1.msra.mxu0 %v2607
    %v2609 = vand.u32 %v2156, 4294901760
    %2610 = vmatprep.subr.mxu0 %v2609
    %v2611 = vand.u32 %v2052, 4294901760
    %2612 = vmatpush1.msra.mxu0 %v2611
    %v2613 = vand.u32 %v2364, 4294901760
    %2614 = vmatprep.subr.mxu0 %v2613
    %v2615 = vand.u32 %v2260, 4294901760
    %2616 = vmatpush1.msra.mxu0 %v2615
    %v2617 = vand.u32 %v2572, 4294901760
    %2618 = vmatprep.subr.mxu0 %v2617
    %v2619 = vand.u32 %v2468, 4294901760
    %2620 = vmatpush1.msra.mxu0 %v2619
    %2621 = vmatprep.subr.mxu0 0.0
    %2622 = vmatpush1.msra.mxu0 0.0
    %2623 = vmatprep.subr.mxu0 0.0
    %2624 = vmatpush1.msra.mxu0 0.0
    %2625 = vmatprep.subr.mxu0 0.0
    %2626 = vmatpush1.msra.mxu0 0.0
    %2627 = vmatprep.subr.mxu0 0.0
    %2628 = vmatpush1.msra.mxu0 0.0
    %2629 = vmatprep.subr.mxu0 0.0
    %2630 = vmatpush1.msra.mxu0 0.0
    %2631 = vmatprep.subr.mxu0 0.0
    %2632 = vmatpush1.msra.mxu0 0.0
    %2633 = vmatprep.subr.mxu0 0.0
    %2634 = vmatpush1.msra.mxu0 0.0
    %2635 = vmatprep.subr.mxu0 0.0
    %2636 = vmatpush1.msra.mxu0 0.0
    %2637 = vmatprep.subr.mxu0 0.0
    %2638 = vmatpush1.msra.mxu0 0.0
    %2639 = vmatprep.subr.mxu0 0.0
    %2640 = vmatpush1.msra.mxu0 0.0
    %2641 = vmatprep.subr.mxu0 0.0
    %2642 = vmatpush1.msra.mxu0 0.0
    %2643 = vmatprep.subr.mxu0 0.0
    %2644 = vmatpush1.msra.mxu0 0.0
    %2645 = vmatprep.subr.mxu0 0.0
    %2646 = vmatpush1.msra.mxu0 0.0
    %2647 = vmatprep.subr.mxu0 0.0
    %2648 = vmatpush1.msra.mxu0 0.0
    %2649 = vmatprep.subr.mxu0 0.0
    %2650 = vmatpush1.msra.mxu0 0.0
    %2651 = vmatprep.subr.mxu0 0.0
    %2652 = vmatpush1.msra.mxu0 0.0
    %2653 = vmatprep.subr.mxu0 0.0
    %2654 = vmatpush1.msra.mxu0 0.0
    %2655 = vmatprep.subr.mxu0 0.0
    %2656 = vmatpush1.msra.mxu0 0.0
    %2657 = vmatprep.subr.mxu0 0.0
    %2658 = vmatpush1.msra.mxu0 0.0
    %2659 = vmatprep.subr.mxu0 0.0
    %2660 = vmatpush1.msra.mxu0 0.0
    %2661 = vmatprep.subr.mxu0 0.0
    %2662 = vmatpush1.msra.mxu0 0.0
    %2663 = vmatprep.subr.mxu0 0.0
    %2664 = vmatpush1.msra.mxu0 0.0
    %2665 = vmatprep.subr.mxu0 0.0
    %2666 = vmatpush1.msra.mxu0 0.0
    %2667 = vmatprep.subr.mxu0 0.0
    %2668 = vmatpush1.msra.mxu0 0.0
    %2669 = vmatprep.subr.mxu0 0.0
    %2670 = vmatpush1.msra.mxu0 0.0
    %2671 = vmatprep.subr.mxu0 0.0
    %2672 = vmatpush1.msra.mxu0 0.0
    %2673 = vmatprep.subr.mxu0 0.0
    %2674 = vmatpush1.msra.mxu0 0.0
    %2675 = vmatprep.subr.mxu0 0.0
    %2676 = vmatpush1.msra.mxu0 0.0
    %2677 = vmatprep.mubr.f32.mxu0 0.0
    %v2678 = vand.u32 %v2594, 4294901760
    %v2679 = vsub.f32 %v2594, %v2678
    %v2680 = vand.u32 %v2679, 4294901760
    %v2681 = vsub.f32 %v2679, %v2680
    %v2682 = vand.u32 %v2681, 4294901760
    %2683 = vmatmul.mubr.f32.gmra.mrb[0].mxu0 %v2682
    %v2684 = vpop.f32.mrb[0].mxu0
    %v2685 = vadd.f32 %v2576, %v2684
    %v2686 = vpop.f32.mrb[0].mxu0
    %v2687 = vadd.f32 %v2576, %v2686
    %2688 = vmatprep.mubr.f32.mxu0 0.0
    %v2689 = vand.u32 %v2597, 4294901760
    %v2690 = vsub.f32 %v2597, %v2689
    %v2691 = vand.u32 %v2690, 4294901760
    %v2692 = vsub.f32 %v2690, %v2691
    %v2693 = vand.u32 %v2692, 4294901760
    %2694 = vmatmul.mubr.f32.gmra.mrb[0].mxu0 %v2693
    %v2695 = vpop.f32.mrb[0].mxu0
    %v2696 = vadd.f32 %v2581, %v2695
    %v2697 = vpop.f32.mrb[0].mxu0
    %v2698 = vadd.f32 %v2581, %v2697
    %2699 = vmatprep.mubr.f32.mxu0 0.0
    %v2700 = vand.u32 %v2600, 4294901760
    %v2701 = vsub.f32 %v2600, %v2700
    %v2702 = vand.u32 %v2701, 4294901760
    %v2703 = vsub.f32 %v2701, %v2702
    %v2704 = vand.u32 %v2703, 4294901760
    %2705 = vmatmul.mubr.f32.gmra.mrb[0].mxu0 %v2704
    %v2706 = vpop.f32.mrb[0].mxu0
    %v2707 = vadd.f32 %v2586, %v2706
    %v2708 = vpop.f32.mrb[0].mxu0
    %v2709 = vadd.f32 %v2586, %v2708
    %2710 = vmatprep.mubr.f32.mxu0 0.0
    %v2711 = vand.u32 %v2603, 4294901760
    %v2712 = vsub.f32 %v2603, %v2711
    %v2713 = vand.u32 %v2712, 4294901760
    %v2714 = vsub.f32 %v2712, %v2713
    %v2715 = vand.u32 %v2714, 4294901760
    %2716 = vmatmul.mubr.f32.gmra.mrb[0].mxu0 %v2715
    %v2717 = vpop.f32.mrb[0].mxu0
    %v2718 = vadd.f32 %v2591, %v2717
    %v2719 = vpop.f32.mrb[0].mxu0
    %v2720 = vadd.f32 %v2591, %v2719
    %2721 = vdwg.mxu0
    %v2722 = vand.u32 %v1948, 4294901760
    %v2723 = vsub.f32 %v1948, %v2722
    %v2724 = vand.u32 %v2723, 4294901760
    %v2725 = vsub.f32 %v2723, %v2724
    %v2726 = vand.u32 %v2725, 4294901760
    %2727 = vmatprep.subr.mxu0 %v2726
    %v2728 = vand.u32 %v1844, 4294901760
    %v2729 = vsub.f32 %v1844, %v2728
    %v2730 = vand.u32 %v2729, 4294901760
    %v2731 = vsub.f32 %v2729, %v2730
    %v2732 = vand.u32 %v2731, 4294901760
    %2733 = vmatpush1.msra.mxu0 %v2732
    %v2734 = vand.u32 %v2156, 4294901760
    %v2735 = vsub.f32 %v2156, %v2734
    %v2736 = vand.u32 %v2735, 4294901760
    %v2737 = vsub.f32 %v2735, %v2736
    %v2738 = vand.u32 %v2737, 4294901760
    %2739 = vmatprep.subr.mxu0 %v2738
    %v2740 = vand.u32 %v2052, 4294901760
    %v2741 = vsub.f32 %v2052, %v2740
    %v2742 = vand.u32 %v2741, 4294901760
    %v2743 = vsub.f32 %v2741, %v2742
    %v2744 = vand.u32 %v2743, 4294901760
    %2745 = vmatpush1.msra.mxu0 %v2744
    %v2746 = vand.u32 %v2364, 4294901760
    %v2747 = vsub.f32 %v2364, %v2746
    %v2748 = vand.u32 %v2747, 4294901760
    %v2749 = vsub.f32 %v2747, %v2748
    %v2750 = vand.u32 %v2749, 4294901760
    %2751 = vmatprep.subr.mxu0 %v2750
    %v2752 = vand.u32 %v2260, 4294901760
    %v2753 = vsub.f32 %v2260, %v2752
    %v2754 = vand.u32 %v2753, 4294901760
    %v2755 = vsub.f32 %v2753, %v2754
    %v2756 = vand.u32 %v2755, 4294901760
    %2757 = vmatpush1.msra.mxu0 %v2756
    %v2758 = vand.u32 %v2572, 4294901760
    %v2759 = vsub.f32 %v2572, %v2758
    %v2760 = vand.u32 %v2759, 4294901760
    %v2761 = vsub.f32 %v2759, %v2760
    %v2762 = vand.u32 %v2761, 4294901760
    %2763 = vmatprep.subr.mxu0 %v2762
    %v2764 = vand.u32 %v2468, 4294901760
    %v2765 = vsub.f32 %v2468, %v2764
    %v2766 = vand.u32 %v2765, 4294901760
    %v2767 = vsub.f32 %v2765, %v2766
    %v2768 = vand.u32 %v2767, 4294901760
    %2769 = vmatpush1.msra.mxu0 %v2768
    %2770 = vmatprep.subr.mxu0 0.0
    %2771 = vmatpush1.msra.mxu0 0.0
    %2772 = vmatprep.subr.mxu0 0.0
    %2773 = vmatpush1.msra.mxu0 0.0
    %2774 = vmatprep.subr.mxu0 0.0
    %2775 = vmatpush1.msra.mxu0 0.0
    %2776 = vmatprep.subr.mxu0 0.0
    %2777 = vmatpush1.msra.mxu0 0.0
    %2778 = vmatprep.subr.mxu0 0.0
    %2779 = vmatpush1.msra.mxu0 0.0
    %2780 = vmatprep.subr.mxu0 0.0
    %2781 = vmatpush1.msra.mxu0 0.0
    %2782 = vmatprep.subr.mxu0 0.0
    %2783 = vmatpush1.msra.mxu0 0.0
    %2784 = vmatprep.subr.mxu0 0.0
    %2785 = vmatpush1.msra.mxu0 0.0
    %2786 = vmatprep.subr.mxu0 0.0
    %2787 = vmatpush1.msra.mxu0 0.0
    %2788 = vmatprep.subr.mxu0 0.0
    %2789 = vmatpush1.msra.mxu0 0.0
    %2790 = vmatprep.subr.mxu0 0.0
    %2791 = vmatpush1.msra.mxu0 0.0
    %2792 = vmatprep.subr.mxu0 0.0
    %2793 = vmatpush1.msra.mxu0 0.0
    %2794 = vmatprep.subr.mxu0 0.0
    %2795 = vmatpush1.msra.mxu0 0.0
    %2796 = vmatprep.subr.mxu0 0.0
    %2797 = vmatpush1.msra.mxu0 0.0
    %2798 = vmatprep.subr.mxu0 0.0
    %2799 = vmatpush1.msra.mxu0 0.0
    %2800 = vmatprep.subr.mxu0 0.0
    %2801 = vmatpush1.msra.mxu0 0.0
    %2802 = vmatprep.subr.mxu0 0.0
    %2803 = vmatpush1.msra.mxu0 0.0
    %2804 = vmatprep.subr.mxu0 0.0
    %2805 = vmatpush1.msra.mxu0 0.0
    %2806 = vmatprep.subr.mxu0 0.0
    %2807 = vmatpush1.msra.mxu0 0.0
    %2808 = vmatprep.subr.mxu0 0.0
    %2809 = vmatpush1.msra.mxu0 0.0
    %2810 = vmatprep.subr.mxu0 0.0
    %2811 = vmatpush1.msra.mxu0 0.0
    %2812 = vmatprep.subr.mxu0 0.0
    %2813 = vmatpush1.msra.mxu0 0.0
    %2814 = vmatprep.subr.mxu0 0.0
    %2815 = vmatpush1.msra.mxu0 0.0
    %2816 = vmatprep.subr.mxu0 0.0
    %2817 = vmatpush1.msra.mxu0 0.0
    %2818 = vmatprep.subr.mxu0 0.0
    %2819 = vmatpush1.msra.mxu0 0.0
    %2820 = vmatprep.subr.mxu0 0.0
    %2821 = vmatpush1.msra.mxu0 0.0
    %2822 = vmatprep.subr.mxu0 0.0
    %2823 = vmatpush1.msra.mxu0 0.0
    %2824 = vmatprep.subr.mxu0 0.0
    %2825 = vmatpush1.msra.mxu0 0.0
    %2826 = vmatprep.mubr.f32.mxu0 0.0
    %v2827 = vand.u32 %v2594, 4294901760
    %2828 = vmatmul.mubr.f32.gmra.mrb[0].mxu0 %v2827
    %v2829 = vpop.f32.mrb[0].mxu0
    %v2830 = vadd.f32 %v2685, %v2829
    %v2831 = vpop.f32.mrb[0].mxu0
    %v2832 = vadd.f32 %v2687, %v2831
    %2833 = vmatprep.mubr.f32.mxu0 0.0
    %v2834 = vand.u32 %v2597, 4294901760
    %2835 = vmatmul.mubr.f32.gmra.mrb[0].mxu0 %v2834
    %v2836 = vpop.f32.mrb[0].mxu0
    %v2837 = vadd.f32 %v2696, %v2836
    %v2838 = vpop.f32.mrb[0].mxu0
    %v2839 = vadd.f32 %v2698, %v2838
    %2840 = vmatprep.mubr.f32.mxu0 0.0
    %v2841 = vand.u32 %v2600, 4294901760
    %2842 = vmatmul.mubr.f32.gmra.mrb[0].mxu0 %v2841
    %v2843 = vpop.f32.mrb[0].mxu0
    %v2844 = vadd.f32 %v2707, %v2843
    %v2845 = vpop.f32.mrb[0].mxu0
    %v2846 = vadd.f32 %v2709, %v2845
    %2847 = vmatprep.mubr.f32.mxu0 0.0
    %v2848 = vand.u32 %v2603, 4294901760
    %2849 = vmatmul.mubr.f32.gmra.mrb[0].mxu0 %v2848
    %v2850 = vpop.f32.mrb[0].mxu0
    %v2851 = vadd.f32 %v2718, %v2850
    %v2852 = vpop.f32.mrb[0].mxu0
    %v2853 = vadd.f32 %v2720, %v2852
    %2854 = vdwg.mxu0
    %v2855 = vand.u32 %v1948, 4294901760
    %v2856 = vsub.f32 %v1948, %v2855
    %2857 = vmatprep.subr.mxu0 %v2856
    %v2858 = vand.u32 %v1844, 4294901760
    %v2859 = vsub.f32 %v1844, %v2858
    %2860 = vmatpush1.msra.mxu0 %v2859
    %v2861 = vand.u32 %v2156, 4294901760
    %v2862 = vsub.f32 %v2156, %v2861
    %2863 = vmatprep.subr.mxu0 %v2862
    %v2864 = vand.u32 %v2052, 4294901760
    %v2865 = vsub.f32 %v2052, %v2864
    %2866 = vmatpush1.msra.mxu0 %v2865
    %v2867 = vand.u32 %v2364, 4294901760
    %v2868 = vsub.f32 %v2364, %v2867
    %2869 = vmatprep.subr.mxu0 %v2868
    %v2870 = vand.u32 %v2260, 4294901760
    %v2871 = vsub.f32 %v2260, %v2870
    %2872 = vmatpush1.msra.mxu0 %v2871
    %v2873 = vand.u32 %v2572, 4294901760
    %v2874 = vsub.f32 %v2572, %v2873
    %2875 = vmatprep.subr.mxu0 %v2874
    %v2876 = vand.u32 %v2468, 4294901760
    %v2877 = vsub.f32 %v2468, %v2876
    %2878 = vmatpush1.msra.mxu0 %v2877
    %2879 = vmatprep.subr.mxu0 0.0
    %2880 = vmatpush1.msra.mxu0 0.0
    %2881 = vmatprep.subr.mxu0 0.0
    %2882 = vmatpush1.msra.mxu0 0.0
    %2883 = vmatprep.subr.mxu0 0.0
    %2884 = vmatpush1.msra.mxu0 0.0
    %2885 = vmatprep.subr.mxu0 0.0
    %2886 = vmatpush1.msra.mxu0 0.0
    %2887 = vmatprep.subr.mxu0 0.0
    %2888 = vmatpush1.msra.mxu0 0.0
    %2889 = vmatprep.subr.mxu0 0.0
    %2890 = vmatpush1.msra.mxu0 0.0
    %2891 = vmatprep.subr.mxu0 0.0
    %2892 = vmatpush1.msra.mxu0 0.0
    %2893 = vmatprep.subr.mxu0 0.0
    %2894 = vmatpush1.msra.mxu0 0.0
    %2895 = vmatprep.subr.mxu0 0.0
    %2896 = vmatpush1.msra.mxu0 0.0
    %2897 = vmatprep.subr.mxu0 0.0
    %2898 = vmatpush1.msra.mxu0 0.0
    %2899 = vmatprep.subr.mxu0 0.0
    %2900 = vmatpush1.msra.mxu0 0.0
    %2901 = vmatprep.subr.mxu0 0.0
    %2902 = vmatpush1.msra.mxu0 0.0
    %2903 = vmatprep.subr.mxu0 0.0
    %2904 = vmatpush1.msra.mxu0 0.0
    %2905 = vmatprep.subr.mxu0 0.0
    %2906 = vmatpush1.msra.mxu0 0.0
    %2907 = vmatprep.subr.mxu0 0.0
    %2908 = vmatpush1.msra.mxu0 0.0
    %2909 = vmatprep.subr.mxu0 0.0
    %2910 = vmatpush1.msra.mxu0 0.0
    %2911 = vmatprep.subr.mxu0 0.0
    %2912 = vmatpush1.msra.mxu0 0.0
    %2913 = vmatprep.subr.mxu0 0.0
    %2914 = vmatpush1.msra.mxu0 0.0
    %2915 = vmatprep.subr.mxu0 0.0
    %2916 = vmatpush1.msra.mxu0 0.0
    %2917 = vmatprep.subr.mxu0 0.0
    %2918 = vmatpush1.msra.mxu0 0.0
    %2919 = vmatprep.subr.mxu0 0.0
    %2920 = vmatpush1.msra.mxu0 0.0
    %2921 = vmatprep.subr.mxu0 0.0
    %2922 = vmatpush1.msra.mxu0 0.0
    %2923 = vmatprep.subr.mxu0 0.0
    %2924 = vmatpush1.msra.mxu0 0.0
    %2925 = vmatprep.subr.mxu0 0.0
    %2926 = vmatpush1.msra.mxu0 0.0
    %2927 = vmatprep.subr.mxu0 0.0
    %2928 = vmatpush1.msra.mxu0 0.0
    %2929 = vmatprep.subr.mxu0 0.0
    %2930 = vmatpush1.msra.mxu0 0.0
    %2931 = vmatprep.subr.mxu0 0.0
    %2932 = vmatpush1.msra.mxu0 0.0
    %2933 = vmatprep.subr.mxu0 0.0
    %2934 = vmatpush1.msra.mxu0 0.0
    %2935 = vmatprep.mubr.f32.mxu0 0.0
    %v2936 = vand.u32 %v2594, 4294901760
    %v2937 = vsub.f32 %v2594, %v2936
    %2938 = vmatmul.mubr.f32.gmra.mrb[0].mxu0 %v2937
    %v2939 = vpop.f32.mrb[0].mxu0
    %v2940 = vadd.f32 %v2830, %v2939
    %v2941 = vpop.f32.mrb[0].mxu0
    %v2942 = vadd.f32 %v2832, %v2941
    %2943 = vmatprep.mubr.f32.mxu0 0.0
    %v2944 = vand.u32 %v2597, 4294901760
    %v2945 = vsub.f32 %v2597, %v2944
    %2946 = vmatmul.mubr.f32.gmra.mrb[0].mxu0 %v2945
    %v2947 = vpop.f32.mrb[0].mxu0
    %v2948 = vadd.f32 %v2837, %v2947
    %v2949 = vpop.f32.mrb[0].mxu0
    %v2950 = vadd.f32 %v2839, %v2949
    %2951 = vmatprep.mubr.f32.mxu0 0.0
    %v2952 = vand.u32 %v2600, 4294901760
    %v2953 = vsub.f32 %v2600, %v2952
    %2954 = vmatmul.mubr.f32.gmra.mrb[0].mxu0 %v2953
    %v2955 = vpop.f32.mrb[0].mxu0
    %v2956 = vadd.f32 %v2844, %v2955
    %v2957 = vpop.f32.mrb[0].mxu0
    %v2958 = vadd.f32 %v2846, %v2957
    %2959 = vmatprep.mubr.f32.mxu0 0.0
    %v2960 = vand.u32 %v2603, 4294901760
    %v2961 = vsub.f32 %v2603, %v2960
    %2962 = vmatmul.mubr.f32.gmra.mrb[0].mxu0 %v2961
    %v2963 = vpop.f32.mrb[0].mxu0
    %v2964 = vadd.f32 %v2851, %v2963
    %v2965 = vpop.f32.mrb[0].mxu0
    %v2966 = vadd.f32 %v2853, %v2965
    %2967 = vdwg.mxu0
    %v2968 = vand.u32 %v1948, 4294901760
    %2969 = vmatprep.subr.mxu0 %v2968
    %v2970 = vand.u32 %v1844, 4294901760
    %2971 = vmatpush1.msra.mxu0 %v2970
    %v2972 = vand.u32 %v2156, 4294901760
    %2973 = vmatprep.subr.mxu0 %v2972
    %v2974 = vand.u32 %v2052, 4294901760
    %2975 = vmatpush1.msra.mxu0 %v2974
    %v2976 = vand.u32 %v2364, 4294901760
    %2977 = vmatprep.subr.mxu0 %v2976
    %v2978 = vand.u32 %v2260, 4294901760
    %2979 = vmatpush1.msra.mxu0 %v2978
    %v2980 = vand.u32 %v2572, 4294901760
    %2981 = vmatprep.subr.mxu0 %v2980
    %v2982 = vand.u32 %v2468, 4294901760
    %2983 = vmatpush1.msra.mxu0 %v2982
    %2984 = vmatprep.subr.mxu0 0.0
    %2985 = vmatpush1.msra.mxu0 0.0
    %2986 = vmatprep.subr.mxu0 0.0
    %2987 = vmatpush1.msra.mxu0 0.0
    %2988 = vmatprep.subr.mxu0 0.0
    %2989 = vmatpush1.msra.mxu0 0.0
    %2990 = vmatprep.subr.mxu0 0.0
    %2991 = vmatpush1.msra.mxu0 0.0
    %2992 = vmatprep.subr.mxu0 0.0
    %2993 = vmatpush1.msra.mxu0 0.0
    %2994 = vmatprep.subr.mxu0 0.0
    %2995 = vmatpush1.msra.mxu0 0.0
    %2996 = vmatprep.subr.mxu0 0.0
    %2997 = vmatpush1.msra.mxu0 0.0
    %2998 = vmatprep.subr.mxu0 0.0
    %2999 = vmatpush1.msra.mxu0 0.0
    %3000 = vmatprep.subr.mxu0 0.0
    %3001 = vmatpush1.msra.mxu0 0.0
    %3002 = vmatprep.subr.mxu0 0.0
    %3003 = vmatpush1.msra.mxu0 0.0
    %3004 = vmatprep.subr.mxu0 0.0
    %3005 = vmatpush1.msra.mxu0 0.0
    %3006 = vmatprep.subr.mxu0 0.0
    %3007 = vmatpush1.msra.mxu0 0.0
    %3008 = vmatprep.subr.mxu0 0.0
    %3009 = vmatpush1.msra.mxu0 0.0
    %3010 = vmatprep.subr.mxu0 0.0
    %3011 = vmatpush1.msra.mxu0 0.0
    %3012 = vmatprep.subr.mxu0 0.0
    %3013 = vmatpush1.msra.mxu0 0.0
    %3014 = vmatprep.subr.mxu0 0.0
    %3015 = vmatpush1.msra.mxu0 0.0
    %3016 = vmatprep.subr.mxu0 0.0
    %3017 = vmatpush1.msra.mxu0 0.0
    %3018 = vmatprep.subr.mxu0 0.0
    %3019 = vmatpush1.msra.mxu0 0.0
    %3020 = vmatprep.subr.mxu0 0.0
    %3021 = vmatpush1.msra.mxu0 0.0
    %3022 = vmatprep.subr.mxu0 0.0
    %3023 = vmatpush1.msra.mxu0 0.0
    %3024 = vmatprep.subr.mxu0 0.0
    %3025 = vmatpush1.msra.mxu0 0.0
    %3026 = vmatprep.subr.mxu0 0.0
    %3027 = vmatpush1.msra.mxu0 0.0
    %3028 = vmatprep.subr.mxu0 0.0
    %3029 = vmatpush1.msra.mxu0 0.0
    %3030 = vmatprep.subr.mxu0 0.0
    %3031 = vmatpush1.msra.mxu0 0.0
    %3032 = vmatprep.subr.mxu0 0.0
    %3033 = vmatpush1.msra.mxu0 0.0
    %3034 = vmatprep.subr.mxu0 0.0
    %3035 = vmatpush1.msra.mxu0 0.0
    %3036 = vmatprep.subr.mxu0 0.0
    %3037 = vmatpush1.msra.mxu0 0.0
    %3038 = vmatprep.subr.mxu0 0.0
    %3039 = vmatpush1.msra.mxu0 0.0
    %3040 = vmatprep.mubr.f32.mxu0 0.0
    %v3041 = vand.u32 %v2594, 4294901760
    %v3042 = vsub.f32 %v2594, %v3041
    %v3043 = vand.u32 %v3042, 4294901760
    %3044 = vmatmul.mubr.f32.gmra.mrb[0].mxu0 %v3043
    %v3045 = vpop.f32.mrb[0].mxu0
    %v3046 = vadd.f32 %v2940, %v3045
    %v3047 = vpop.f32.mrb[0].mxu0
    %v3048 = vadd.f32 %v2942, %v3047
    %3049 = vmatprep.mubr.f32.mxu0 0.0
    %v3050 = vand.u32 %v2597, 4294901760
    %v3051 = vsub.f32 %v2597, %v3050
    %v3052 = vand.u32 %v3051, 4294901760
    %3053 = vmatmul.mubr.f32.gmra.mrb[0].mxu0 %v3052
    %v3054 = vpop.f32.mrb[0].mxu0
    %v3055 = vadd.f32 %v2948, %v3054
    %v3056 = vpop.f32.mrb[0].mxu0
    %v3057 = vadd.f32 %v2950, %v3056
    %3058 = vmatprep.mubr.f32.mxu0 0.0
    %v3059 = vand.u32 %v2600, 4294901760
    %v3060 = vsub.f32 %v2600, %v3059
    %v3061 = vand.u32 %v3060, 4294901760
    %3062 = vmatmul.mubr.f32.gmra.mrb[0].mxu0 %v3061
    %v3063 = vpop.f32.mrb[0].mxu0
    %v3064 = vadd.f32 %v2956, %v3063
    %v3065 = vpop.f32.mrb[0].mxu0
    %v3066 = vadd.f32 %v2958, %v3065
    %3067 = vmatprep.mubr.f32.mxu0 0.0
    %v3068 = vand.u32 %v2603, 4294901760
    %v3069 = vsub.f32 %v2603, %v3068
    %v3070 = vand.u32 %v3069, 4294901760
    %3071 = vmatmul.mubr.f32.gmra.mrb[0].mxu0 %v3070
    %v3072 = vpop.f32.mrb[0].mxu0
    %v3073 = vadd.f32 %v2964, %v3072
    %v3074 = vpop.f32.mrb[0].mxu0
    %v3075 = vadd.f32 %v2966, %v3074
    %3076 = vdwg.mxu0
    %v3077 = vand.u32 %v1948, 4294901760
    %v3078 = vsub.f32 %v1948, %v3077
    %v3079 = vand.u32 %v3078, 4294901760
    %3080 = vmatprep.subr.mxu0 %v3079
    %v3081 = vand.u32 %v1844, 4294901760
    %v3082 = vsub.f32 %v1844, %v3081
    %v3083 = vand.u32 %v3082, 4294901760
    %3084 = vmatpush1.msra.mxu0 %v3083
    %v3085 = vand.u32 %v2156, 4294901760
    %v3086 = vsub.f32 %v2156, %v3085
    %v3087 = vand.u32 %v3086, 4294901760
    %3088 = vmatprep.subr.mxu0 %v3087
    %v3089 = vand.u32 %v2052, 4294901760
    %v3090 = vsub.f32 %v2052, %v3089
    %v3091 = vand.u32 %v3090, 4294901760
    %3092 = vmatpush1.msra.mxu0 %v3091
    %v3093 = vand.u32 %v2364, 4294901760
    %v3094 = vsub.f32 %v2364, %v3093
    %v3095 = vand.u32 %v3094, 4294901760
    %3096 = vmatprep.subr.mxu0 %v3095
    %v3097 = vand.u32 %v2260, 4294901760
    %v3098 = vsub.f32 %v2260, %v3097
    %v3099 = vand.u32 %v3098, 4294901760
    %3100 = vmatpush1.msra.mxu0 %v3099
    %v3101 = vand.u32 %v2572, 4294901760
    %v3102 = vsub.f32 %v2572, %v3101
    %v3103 = vand.u32 %v3102, 4294901760
    %3104 = vmatprep.subr.mxu0 %v3103
    %v3105 = vand.u32 %v2468, 4294901760
    %v3106 = vsub.f32 %v2468, %v3105
    %v3107 = vand.u32 %v3106, 4294901760
    %3108 = vmatpush1.msra.mxu0 %v3107
    %3109 = vmatprep.subr.mxu0 0.0
    %3110 = vmatpush1.msra.mxu0 0.0
    %3111 = vmatprep.subr.mxu0 0.0
    %3112 = vmatpush1.msra.mxu0 0.0
    %3113 = vmatprep.subr.mxu0 0.0
    %3114 = vmatpush1.msra.mxu0 0.0
    %3115 = vmatprep.subr.mxu0 0.0
    %3116 = vmatpush1.msra.mxu0 0.0
    %3117 = vmatprep.subr.mxu0 0.0
    %3118 = vmatpush1.msra.mxu0 0.0
    %3119 = vmatprep.subr.mxu0 0.0
    %3120 = vmatpush1.msra.mxu0 0.0
    %3121 = vmatprep.subr.mxu0 0.0
    %3122 = vmatpush1.msra.mxu0 0.0
    %3123 = vmatprep.subr.mxu0 0.0
    %3124 = vmatpush1.msra.mxu0 0.0
    %3125 = vmatprep.subr.mxu0 0.0
    %3126 = vmatpush1.msra.mxu0 0.0
    %3127 = vmatprep.subr.mxu0 0.0
    %3128 = vmatpush1.msra.mxu0 0.0
    %3129 = vmatprep.subr.mxu0 0.0
    %3130 = vmatpush1.msra.mxu0 0.0
    %3131 = vmatprep.subr.mxu0 0.0
    %3132 = vmatpush1.msra.mxu0 0.0
    %3133 = vmatprep.subr.mxu0 0.0
    %3134 = vmatpush1.msra.mxu0 0.0
    %3135 = vmatprep.subr.mxu0 0.0
    %3136 = vmatpush1.msra.mxu0 0.0
    %3137 = vmatprep.subr.mxu0 0.0
    %3138 = vmatpush1.msra.mxu0 0.0
    %3139 = vmatprep.subr.mxu0 0.0
    %3140 = vmatpush1.msra.mxu0 0.0
    %3141 = vmatprep.subr.mxu0 0.0
    %3142 = vmatpush1.msra.mxu0 0.0
    %3143 = vmatprep.subr.mxu0 0.0
    %3144 = vmatpush1.msra.mxu0 0.0
    %3145 = vmatprep.subr.mxu0 0.0
    %3146 = vmatpush1.msra.mxu0 0.0
    %3147 = vmatprep.subr.mxu0 0.0
    %3148 = vmatpush1.msra.mxu0 0.0
    %3149 = vmatprep.subr.mxu0 0.0
    %3150 = vmatpush1.msra.mxu0 0.0
    %3151 = vmatprep.subr.mxu0 0.0
    %3152 = vmatpush1.msra.mxu0 0.0
    %3153 = vmatprep.subr.mxu0 0.0
    %3154 = vmatpush1.msra.mxu0 0.0
    %3155 = vmatprep.subr.mxu0 0.0
    %3156 = vmatpush1.msra.mxu0 0.0
    %3157 = vmatprep.subr.mxu0 0.0
    %3158 = vmatpush1.msra.mxu0 0.0
    %3159 = vmatprep.subr.mxu0 0.0
    %3160 = vmatpush1.msra.mxu0 0.0
    %3161 = vmatprep.subr.mxu0 0.0
    %3162 = vmatpush1.msra.mxu0 0.0
    %3163 = vmatprep.subr.mxu0 0.0
    %3164 = vmatpush1.msra.mxu0 0.0
    %3165 = vmatprep.mubr.f32.mxu0 0.0
    %v3166 = vand.u32 %v2594, 4294901760
    %3167 = vmatmul.mubr.f32.gmra.mrb[0].mxu0 %v3166
    %v3168 = vpop.f32.mrb[0].mxu0
    %v3169 = vadd.f32 %v3046, %v3168
    %v3170 = vpop.f32.mrb[0].mxu0
    %v3171 = vadd.f32 %v3048, %v3170
    %3172 = vmatprep.mubr.f32.mxu0 0.0
    %v3173 = vand.u32 %v2597, 4294901760
    %3174 = vmatmul.mubr.f32.gmra.mrb[0].mxu0 %v3173
    %v3175 = vpop.f32.mrb[0].mxu0
    %v3176 = vadd.f32 %v3055, %v3175
    %v3177 = vpop.f32.mrb[0].mxu0
    %v3178 = vadd.f32 %v3057, %v3177
    %3179 = vmatprep.mubr.f32.mxu0 0.0
    %v3180 = vand.u32 %v2600, 4294901760
    %3181 = vmatmul.mubr.f32.gmra.mrb[0].mxu0 %v3180
    %v3182 = vpop.f32.mrb[0].mxu0
    %v3183 = vadd.f32 %v3064, %v3182
    %v3184 = vpop.f32.mrb[0].mxu0
    %v3185 = vadd.f32 %v3066, %v3184
    %3186 = vmatprep.mubr.f32.mxu0 0.0
    %v3187 = vand.u32 %v2603, 4294901760
    %3188 = vmatmul.mubr.f32.gmra.mrb[0].mxu0 %v3187
    %v3189 = vpop.f32.mrb[0].mxu0
    %v3190 = vadd.f32 %v3073, %v3189
    %v3191 = vpop.f32.mrb[0].mxu0
    %v3192 = vadd.f32 %v3075, %v3191
    %3193 = vdwg.mxu0
    %v3194 = vand.u32 %v1948, 4294901760
    %3195 = vmatprep.subr.mxu0 %v3194
    %v3196 = vand.u32 %v1844, 4294901760
    %3197 = vmatpush1.msra.mxu0 %v3196
    %v3198 = vand.u32 %v2156, 4294901760
    %3199 = vmatprep.subr.mxu0 %v3198
    %v3200 = vand.u32 %v2052, 4294901760
    %3201 = vmatpush1.msra.mxu0 %v3200
    %v3202 = vand.u32 %v2364, 4294901760
    %3203 = vmatprep.subr.mxu0 %v3202
    %v3204 = vand.u32 %v2260, 4294901760
    %3205 = vmatpush1.msra.mxu0 %v3204
    %v3206 = vand.u32 %v2572, 4294901760
    %3207 = vmatprep.subr.mxu0 %v3206
    %v3208 = vand.u32 %v2468, 4294901760
    %3209 = vmatpush1.msra.mxu0 %v3208
    %3210 = vmatprep.subr.mxu0 0.0
    %3211 = vmatpush1.msra.mxu0 0.0
    %3212 = vmatprep.subr.mxu0 0.0
    %3213 = vmatpush1.msra.mxu0 0.0
    %3214 = vmatprep.subr.mxu0 0.0
    %3215 = vmatpush1.msra.mxu0 0.0
    %3216 = vmatprep.subr.mxu0 0.0
    %3217 = vmatpush1.msra.mxu0 0.0
    %3218 = vmatprep.subr.mxu0 0.0
    %3219 = vmatpush1.msra.mxu0 0.0
    %3220 = vmatprep.subr.mxu0 0.0
    %3221 = vmatpush1.msra.mxu0 0.0
    %3222 = vmatprep.subr.mxu0 0.0
    %3223 = vmatpush1.msra.mxu0 0.0
    %3224 = vmatprep.subr.mxu0 0.0
    %3225 = vmatpush1.msra.mxu0 0.0
    %3226 = vmatprep.subr.mxu0 0.0
    %3227 = vmatpush1.msra.mxu0 0.0
    %3228 = vmatprep.subr.mxu0 0.0
    %3229 = vmatpush1.msra.mxu0 0.0
    %3230 = vmatprep.subr.mxu0 0.0
    %3231 = vmatpush1.msra.mxu0 0.0
    %3232 = vmatprep.subr.mxu0 0.0
    %3233 = vmatpush1.msra.mxu0 0.0
    %3234 = vmatprep.subr.mxu0 0.0
    %3235 = vmatpush1.msra.mxu0 0.0
    %3236 = vmatprep.subr.mxu0 0.0
    %3237 = vmatpush1.msra.mxu0 0.0
    %3238 = vmatprep.subr.mxu0 0.0
    %3239 = vmatpush1.msra.mxu0 0.0
    %3240 = vmatprep.subr.mxu0 0.0
    %3241 = vmatpush1.msra.mxu0 0.0
    %3242 = vmatprep.subr.mxu0 0.0
    %3243 = vmatpush1.msra.mxu0 0.0
    %3244 = vmatprep.subr.mxu0 0.0
    %3245 = vmatpush1.msra.mxu0 0.0
    %3246 = vmatprep.subr.mxu0 0.0
    %3247 = vmatpush1.msra.mxu0 0.0
    %3248 = vmatprep.subr.mxu0 0.0
    %3249 = vmatpush1.msra.mxu0 0.0
    %3250 = vmatprep.subr.mxu0 0.0
    %3251 = vmatpush1.msra.mxu0 0.0
    %3252 = vmatprep.subr.mxu0 0.0
    %3253 = vmatpush1.msra.mxu0 0.0
    %3254 = vmatprep.subr.mxu0 0.0
    %3255 = vmatpush1.msra.mxu0 0.0
    %3256 = vmatprep.subr.mxu0 0.0
    %3257 = vmatpush1.msra.mxu0 0.0
    %3258 = vmatprep.subr.mxu0 0.0
    %3259 = vmatpush1.msra.mxu0 0.0
    %3260 = vmatprep.subr.mxu0 0.0
    %3261 = vmatpush1.msra.mxu0 0.0
    %3262 = vmatprep.subr.mxu0 0.0
    %3263 = vmatpush1.msra.mxu0 0.0
    %3264 = vmatprep.subr.mxu0 0.0
    %3265 = vmatpush1.msra.mxu0 0.0
    %3266 = vmatprep.mubr.f32.mxu0 0.0
    %v3267 = vand.u32 %v2594, 4294901760
    %3268 = vmatmul.mubr.f32.gmra.mrb[0].mxu0 %v3267
    %v3269 = vpop.f32.mrb[0].mxu0
    %v3270 = vadd.f32 %v3169, %v3269
    %v3271 = vpop.f32.mrb[0].mxu0
    %v3272 = vadd.f32 %v3171, %v3271
    %3273 = vmatprep.mubr.f32.mxu0 0.0
    %v3274 = vand.u32 %v2597, 4294901760
    %3275 = vmatmul.mubr.f32.gmra.mrb[0].mxu0 %v3274
    %v3276 = vpop.f32.mrb[0].mxu0
    %v3277 = vadd.f32 %v3176, %v3276
    %v3278 = vpop.f32.mrb[0].mxu0
    %v3279 = vadd.f32 %v3178, %v3278
    %3280 = vmatprep.mubr.f32.mxu0 0.0
    %v3281 = vand.u32 %v2600, 4294901760
    %3282 = vmatmul.mubr.f32.gmra.mrb[0].mxu0 %v3281
    %v3283 = vpop.f32.mrb[0].mxu0
    %v3284 = vadd.f32 %v3183, %v3283
    %v3285 = vpop.f32.mrb[0].mxu0
    %v3286 = vadd.f32 %v3185, %v3285
    %3287 = vmatprep.mubr.f32.mxu0 0.0
    %v3288 = vand.u32 %v2603, 4294901760
    %3289 = vmatmul.mubr.f32.gmra.mrb[0].mxu0 %v3288
    %v3290 = vpop.f32.mrb[0].mxu0
    %v3291 = vadd.f32 %v3190, %v3290
    %v3292 = vpop.f32.mrb[0].mxu0
    %v3293 = vadd.f32 %v3192, %v3292
    %3294 = vdwg.mxu0
    %v3295 = vand.u32 2147483647, %v3270
    %vm3296 = vcmp.le.f32.partialorder %v3295, 0.7853982
    %vm3297 = vcmp.lt.s32.totalorder %v3270, 0
    %v3298 = vand.u32 %v3270, 2139095040
    %v3299 = vshrl.u32 %v3298, 23
    %v3300 = vsub.s32 %v3299, 127
    %v3301 = vand.u32 2147483647, %v3270
    %v3302 = vand.u32 %v3301, 8388607
    %v3303 = vor.u32 %v3302, 8388608
    %v3304 = vsub.s32 0, %v3303
    %v3305 = vadd.s32 %v3300, 1
    %vm3306 = vcmp.gt.s32.totalorder %v3305, 0
    %v3307 = vsel %vm3306, %v3305, 0
    %v3308 = vshrl.u32 %v3307, 5
    %v3309 = vand.u32 %v3307, 31
    %v3310 = vsub.s32 32, %v3309
    %v3311 = vshrl.u32 683565275, %v3310
    %v3312 = vshll.u32 683565275, %v3309
    %v3313 = vshrl.u32 2475754826, %v3310
    %v3314 = vor.u32 %v3312, %v3313
    %v3315 = vshll.u32 2475754826, %v3309
    %v3316 = vshrl.u32 2131351028, %v3310
    %v3317 = vor.u32 %v3315, %v3316
    %v3318 = vshll.u32 2131351028, %v3309
    %v3319 = vshrl.u32 2102212464, %v3310
    %v3320 = vor.u32 %v3318, %v3319
    %v3321 = vshll.u32 2102212464, %v3309
    %v3322 = vshrl.u32 920167782, %v3310
    %v3323 = vor.u32 %v3321, %v3322
    %v3324 = vshll.u32 920167782, %v3309
    %v3325 = vshrl.u32 1326507024, %v3310
    %v3326 = vor.u32 %v3324, %v3325
    %vm3327 = vcmp.lt.s32.totalorder %v3308, 1
    %vm3328 = vcmp.lt.s32.totalorder %v3308, 2
    %vm3329 = vcmp.lt.s32.totalorder %v3308, 3
    %vm3330 = vcmp.lt.s32.totalorder %v3308, 4
    %v3331 = vsel %vm3327, %v3311, %v3314
    %v3332 = vsel %vm3330, %v3320, 2102212464
    %v3333 = vsel %vm3329, %v3317, %v3332
    %v3334 = vsel %vm3328, %v3331, %v3333
    %v3335 = vsel %vm3327, %v3314, %v3317
    %v3336 = vsel %vm3330, %v3323, 920167782
    %v3337 = vsel %vm3329, %v3320, %v3336
    %v3338 = vsel %vm3328, %v3335, %v3337
    %v3339 = vsel %vm3327, %v3317, %v3320
    %v3340 = vsel %vm3330, %v3326, 1326507024
    %v3341 = vsel %vm3329, %v3323, %v3340
    %v3342 = vsel %vm3328, %v3339, %v3341
    %v3343 = vshll.u32 %v3303, 8
    %v3344 = vmul.u32.u64.compose %v3343, %v3342
    %v3345 = vextract.low.u32 %v3344
    %v3346 = vextract.high.u32 %v3344
    %v3347 = vmul.u32.u64.compose %v3343, %v3338
    %v3348 = vextract.low.u32 %v3347
    %v3349 = vextract.high.u32 %v3347
    %v3350 = vmul.u32 %v3343, %v3334
    %v3351 = vadd.s32 %v3346, %v3348
    %vm3352 = vc.u32 %v3346, %v3348
    %v3353 = vadd.s32 %v3349, 1
    %v3354 = vsel %vm3352, %v3353, %v3349
    %v3355 = vadd.s32 %v3350, %v3354
    %v3356 = vadd.s32 %v3355, 536870912
    %v3357 = vshrl.u32 %v3356, 30
    %v3358 = vshll.u32 %v3357, 30
    %v3359 = vsub.s32 %v3355, %v3358
    %vm3360 = vcmp.lt.s32.totalorder %v3359, 0
    %v3361 = vsub.s32 0, %v3359
    %v3362 = vsel %vm3360, %v3361, %v3359
    %v3363 = vclz %v3362
    %v3364 = vsub.s32 %v3363, 2
    %vm3365 = vcmp.gt.s32.totalorder 0, %v3364
    %v3366 = vsel %vm3365, 0, %v3364
    %v3367 = vsub.s32 32, %v3366
    %v3368 = vshll.u32 %v3359, %v3366
    %v3369 = vshrl.u32 %v3351, %v3367
    %v3370 = vor.u32 %v3368, %v3369
    %v3371 = vsub.s32 4294967266, %v3366
    %v3372 = vadd.s32 %v3371, 127
    %v3373 = vshll.u32 %v3372, 23
    %v3374 = vor.u32 4788187, %v3373
    %v3375 = vand.u32 2147483647, %v3374
    %v3377 = vcvt.s32.f32 %v3370
    %v3378 = vmul.f32 %v3377, %v3375
    %v3379 = vxor.u32 %v3378, 2147483648
    %v3380 = vsel %vm3297, %v3379, %v3378
    %v3381 = vsub.s32 4, %v3357
    %v3382 = vsel %vm3297, %v3381, %v3357
    %v3383 = vsel %vm3296, %v3270, %v3380
    %v3384 = vsel %vm3296, 0, %v3382
    %v3385 = vcosq.f32.pop %v3383
    %v3386 = vsinq.f32.pop %v3383
    %vm3387 = vweird.f32 %v3270
    %v3388 = vadd.s32 %v3384, 3
    %v3389 = vand.u32 %v3388, 3
    %vm3390 = vcmp.lt.s32.totalorder %v3389, 2
    %vm3391 = vcmp.eq.s32.totalorder %v3389, 0
    %v3392 = vxor.u32 %v3386, 2147483648
    %v3393 = vsel %vm3391, %v3385, %v3392
    %vm3394 = vcmp.eq.s32.totalorder %v3389, 2
    %v3395 = vxor.u32 %v3385, 2147483648
    %v3396 = vsel %vm3394, %v3395, %v3386
    %v3397 = vsel %vm3390, %v3393, %v3396
    %v3398 = vsel %vm3387, nan, %v3397
    %v3399 = vand.u32 2147483647, %v3272
    %vm3400 = vcmp.le.f32.partialorder %v3399, 0.7853982
    %vm3401 = vcmp.lt.s32.totalorder %v3272, 0
    %v3402 = vand.u32 %v3272, 2139095040
    %v3403 = vshrl.u32 %v3402, 23
    %v3404 = vsub.s32 %v3403, 127
    %v3405 = vand.u32 2147483647, %v3272
    %v3406 = vand.u32 %v3405, 8388607
    %v3407 = vor.u32 %v3406, 8388608
    %v3408 = vsub.s32 0, %v3407
    %v3409 = vadd.s32 %v3404, 1
    %vm3410 = vcmp.gt.s32.totalorder %v3409, 0
    %v3411 = vsel %vm3410, %v3409, 0
    %v3412 = vshrl.u32 %v3411, 5
    %v3413 = vand.u32 %v3411, 31
    %v3414 = vsub.s32 32, %v3413
    %v3415 = vshrl.u32 683565275, %v3414
    %v3416 = vshll.u32 683565275, %v3413
    %v3417 = vshrl.u32 2475754826, %v3414
    %v3418 = vor.u32 %v3416, %v3417
    %v3419 = vshll.u32 2475754826, %v3413
    %v3420 = vshrl.u32 2131351028, %v3414
    %v3421 = vor.u32 %v3419, %v3420
    %v3422 = vshll.u32 2131351028, %v3413
    %v3423 = vshrl.u32 2102212464, %v3414
    %v3424 = vor.u32 %v3422, %v3423
    %v3425 = vshll.u32 2102212464, %v3413
    %v3426 = vshrl.u32 920167782, %v3414
    %v3427 = vor.u32 %v3425, %v3426
    %v3428 = vshll.u32 920167782, %v3413
    %v3429 = vshrl.u32 1326507024, %v3414
    %v3430 = vor.u32 %v3428, %v3429
    %vm3431 = vcmp.lt.s32.totalorder %v3412, 1
    %vm3432 = vcmp.lt.s32.totalorder %v3412, 2
    %vm3433 = vcmp.lt.s32.totalorder %v3412, 3
    %vm3434 = vcmp.lt.s32.totalorder %v3412, 4
    %v3435 = vsel %vm3431, %v3415, %v3418
    %v3436 = vsel %vm3434, %v3424, 2102212464
    %v3437 = vsel %vm3433, %v3421, %v3436
    %v3438 = vsel %vm3432, %v3435, %v3437
    %v3439 = vsel %vm3431, %v3418, %v3421
    %v3440 = vsel %vm3434, %v3427, 920167782
    %v3441 = vsel %vm3433, %v3424, %v3440
    %v3442 = vsel %vm3432, %v3439, %v3441
    %v3443 = vsel %vm3431, %v3421, %v3424
    %v3444 = vsel %vm3434, %v3430, 1326507024
    %v3445 = vsel %vm3433, %v3427, %v3444
    %v3446 = vsel %vm3432, %v3443, %v3445
    %v3447 = vshll.u32 %v3407, 8
    %v3448 = vmul.u32.u64.compose %v3447, %v3446
    %v3449 = vextract.low.u32 %v3448
    %v3450 = vextract.high.u32 %v3448
    %v3451 = vmul.u32.u64.compose %v3447, %v3442
    %v3452 = vextract.low.u32 %v3451
    %v3453 = vextract.high.u32 %v3451
    %v3454 = vmul.u32 %v3447, %v3438
    %v3455 = vadd.s32 %v3450, %v3452
    %vm3456 = vc.u32 %v3450, %v3452
    %v3457 = vadd.s32 %v3453, 1
    %v3458 = vsel %vm3456, %v3457, %v3453
    %v3459 = vadd.s32 %v3454, %v3458
    %v3460 = vadd.s32 %v3459, 536870912
    %v3461 = vshrl.u32 %v3460, 30
    %v3462 = vshll.u32 %v3461, 30
    %v3463 = vsub.s32 %v3459, %v3462
    %vm3464 = vcmp.lt.s32.totalorder %v3463, 0
    %v3465 = vsub.s32 0, %v3463
    %v3466 = vsel %vm3464, %v3465, %v3463
    %v3467 = vclz %v3466
    %v3468 = vsub.s32 %v3467, 2
    %vm3469 = vcmp.gt.s32.totalorder 0, %v3468
    %v3470 = vsel %vm3469, 0, %v3468
    %v3471 = vsub.s32 32, %v3470
    %v3472 = vshll.u32 %v3463, %v3470
    %v3473 = vshrl.u32 %v3455, %v3471
    %v3474 = vor.u32 %v3472, %v3473
    %v3475 = vsub.s32 4294967266, %v3470
    %v3476 = vadd.s32 %v3475, 127
    %v3477 = vshll.u32 %v3476, 23
    %v3478 = vor.u32 4788187, %v3477
    %v3479 = vand.u32 2147483647, %v3478
    %v3481 = vcvt.s32.f32 %v3474
    %v3482 = vmul.f32 %v3481, %v3479
    %v3483 = vxor.u32 %v3482, 2147483648
    %v3484 = vsel %vm3401, %v3483, %v3482
    %v3485 = vsub.s32 4, %v3461
    %v3486 = vsel %vm3401, %v3485, %v3461
    %v3487 = vsel %vm3400, %v3272, %v3484
    %v3488 = vsel %vm3400, 0, %v3486
    %v3489 = vcosq.f32.pop %v3487
    %v3490 = vsinq.f32.pop %v3487
    %vm3491 = vweird.f32 %v3272
    %v3492 = vadd.s32 %v3488, 3
    %v3493 = vand.u32 %v3492, 3
    %vm3494 = vcmp.lt.s32.totalorder %v3493, 2
    %vm3495 = vcmp.eq.s32.totalorder %v3493, 0
    %v3496 = vxor.u32 %v3490, 2147483648
    %v3497 = vsel %vm3495, %v3489, %v3496
    %vm3498 = vcmp.eq.s32.totalorder %v3493, 2
    %v3499 = vxor.u32 %v3489, 2147483648
    %v3500 = vsel %vm3498, %v3499, %v3490
    %v3501 = vsel %vm3494, %v3497, %v3500
    %v3502 = vsel %vm3491, nan, %v3501
    %v3503 = vand.u32 2147483647, %v3277
    %vm3504 = vcmp.le.f32.partialorder %v3503, 0.7853982
    %vm3505 = vcmp.lt.s32.totalorder %v3277, 0
    %v3506 = vand.u32 %v3277, 2139095040
    %v3507 = vshrl.u32 %v3506, 23
    %v3508 = vsub.s32 %v3507, 127
    %v3509 = vand.u32 2147483647, %v3277
    %v3510 = vand.u32 %v3509, 8388607
    %v3511 = vor.u32 %v3510, 8388608
    %v3512 = vsub.s32 0, %v3511
    %v3513 = vadd.s32 %v3508, 1
    %vm3514 = vcmp.gt.s32.totalorder %v3513, 0
    %v3515 = vsel %vm3514, %v3513, 0
    %v3516 = vshrl.u32 %v3515, 5
    %v3517 = vand.u32 %v3515, 31
    %v3518 = vsub.s32 32, %v3517
    %v3519 = vshrl.u32 683565275, %v3518
    %v3520 = vshll.u32 683565275, %v3517
    %v3521 = vshrl.u32 2475754826, %v3518
    %v3522 = vor.u32 %v3520, %v3521
    %v3523 = vshll.u32 2475754826, %v3517
    %v3524 = vshrl.u32 2131351028, %v3518
    %v3525 = vor.u32 %v3523, %v3524
    %v3526 = vshll.u32 2131351028, %v3517
    %v3527 = vshrl.u32 2102212464, %v3518
    %v3528 = vor.u32 %v3526, %v3527
    %v3529 = vshll.u32 2102212464, %v3517
    %v3530 = vshrl.u32 920167782, %v3518
    %v3531 = vor.u32 %v3529, %v3530
    %v3532 = vshll.u32 920167782, %v3517
    %v3533 = vshrl.u32 1326507024, %v3518
    %v3534 = vor.u32 %v3532, %v3533
    %vm3535 = vcmp.lt.s32.totalorder %v3516, 1
    %vm3536 = vcmp.lt.s32.totalorder %v3516, 2
    %vm3537 = vcmp.lt.s32.totalorder %v3516, 3
    %vm3538 = vcmp.lt.s32.totalorder %v3516, 4
    %v3539 = vsel %vm3535, %v3519, %v3522
    %v3540 = vsel %vm3538, %v3528, 2102212464
    %v3541 = vsel %vm3537, %v3525, %v3540
    %v3542 = vsel %vm3536, %v3539, %v3541
    %v3543 = vsel %vm3535, %v3522, %v3525
    %v3544 = vsel %vm3538, %v3531, 920167782
    %v3545 = vsel %vm3537, %v3528, %v3544
    %v3546 = vsel %vm3536, %v3543, %v3545
    %v3547 = vsel %vm3535, %v3525, %v3528
    %v3548 = vsel %vm3538, %v3534, 1326507024
    %v3549 = vsel %vm3537, %v3531, %v3548
    %v3550 = vsel %vm3536, %v3547, %v3549
    %v3551 = vshll.u32 %v3511, 8
    %v3552 = vmul.u32.u64.compose %v3551, %v3550
    %v3553 = vextract.low.u32 %v3552
    %v3554 = vextract.high.u32 %v3552
    %v3555 = vmul.u32.u64.compose %v3551, %v3546
    %v3556 = vextract.low.u32 %v3555
    %v3557 = vextract.high.u32 %v3555
    %v3558 = vmul.u32 %v3551, %v3542
    %v3559 = vadd.s32 %v3554, %v3556
    %vm3560 = vc.u32 %v3554, %v3556
    %v3561 = vadd.s32 %v3557, 1
    %v3562 = vsel %vm3560, %v3561, %v3557
    %v3563 = vadd.s32 %v3558, %v3562
    %v3564 = vadd.s32 %v3563, 536870912
    %v3565 = vshrl.u32 %v3564, 30
    %v3566 = vshll.u32 %v3565, 30
    %v3567 = vsub.s32 %v3563, %v3566
    %vm3568 = vcmp.lt.s32.totalorder %v3567, 0
    %v3569 = vsub.s32 0, %v3567
    %v3570 = vsel %vm3568, %v3569, %v3567
    %v3571 = vclz %v3570
    %v3572 = vsub.s32 %v3571, 2
    %vm3573 = vcmp.gt.s32.totalorder 0, %v3572
    %v3574 = vsel %vm3573, 0, %v3572
    %v3575 = vsub.s32 32, %v3574
    %v3576 = vshll.u32 %v3567, %v3574
    %v3577 = vshrl.u32 %v3559, %v3575
    %v3578 = vor.u32 %v3576, %v3577
    %v3579 = vsub.s32 4294967266, %v3574
    %v3580 = vadd.s32 %v3579, 127
    %v3581 = vshll.u32 %v3580, 23
    %v3582 = vor.u32 4788187, %v3581
    %v3583 = vand.u32 2147483647, %v3582
    %v3585 = vcvt.s32.f32 %v3578
    %v3586 = vmul.f32 %v3585, %v3583
    %v3587 = vxor.u32 %v3586, 2147483648
    %v3588 = vsel %vm3505, %v3587, %v3586
    %v3589 = vsub.s32 4, %v3565
    %v3590 = vsel %vm3505, %v3589, %v3565
    %v3591 = vsel %vm3504, %v3277, %v3588
    %v3592 = vsel %vm3504, 0, %v3590
    %v3593 = vcosq.f32.pop %v3591
    %v3594 = vsinq.f32.pop %v3591
    %vm3595 = vweird.f32 %v3277
    %v3596 = vadd.s32 %v3592, 3
    %v3597 = vand.u32 %v3596, 3
    %vm3598 = vcmp.lt.s32.totalorder %v3597, 2
    %vm3599 = vcmp.eq.s32.totalorder %v3597, 0
    %v3600 = vxor.u32 %v3594, 2147483648
    %v3601 = vsel %vm3599, %v3593, %v3600
    %vm3602 = vcmp.eq.s32.totalorder %v3597, 2
    %v3603 = vxor.u32 %v3593, 2147483648
    %v3604 = vsel %vm3602, %v3603, %v3594
    %v3605 = vsel %vm3598, %v3601, %v3604
    %v3606 = vsel %vm3595, nan, %v3605
    %v3607 = vand.u32 2147483647, %v3279
    %vm3608 = vcmp.le.f32.partialorder %v3607, 0.7853982
    %vm3609 = vcmp.lt.s32.totalorder %v3279, 0
    %v3610 = vand.u32 %v3279, 2139095040
    %v3611 = vshrl.u32 %v3610, 23
    %v3612 = vsub.s32 %v3611, 127
    %v3613 = vand.u32 2147483647, %v3279
    %v3614 = vand.u32 %v3613, 8388607
    %v3615 = vor.u32 %v3614, 8388608
    %v3616 = vsub.s32 0, %v3615
    %v3617 = vadd.s32 %v3612, 1
    %vm3618 = vcmp.gt.s32.totalorder %v3617, 0
    %v3619 = vsel %vm3618, %v3617, 0
    %v3620 = vshrl.u32 %v3619, 5
    %v3621 = vand.u32 %v3619, 31
    %v3622 = vsub.s32 32, %v3621
    %v3623 = vshrl.u32 683565275, %v3622
    %v3624 = vshll.u32 683565275, %v3621
    %v3625 = vshrl.u32 2475754826, %v3622
    %v3626 = vor.u32 %v3624, %v3625
    %v3627 = vshll.u32 2475754826, %v3621
    %v3628 = vshrl.u32 2131351028, %v3622
    %v3629 = vor.u32 %v3627, %v3628
    %v3630 = vshll.u32 2131351028, %v3621
    %v3631 = vshrl.u32 2102212464, %v3622
    %v3632 = vor.u32 %v3630, %v3631
    %v3633 = vshll.u32 2102212464, %v3621
    %v3634 = vshrl.u32 920167782, %v3622
    %v3635 = vor.u32 %v3633, %v3634
    %v3636 = vshll.u32 920167782, %v3621
    %v3637 = vshrl.u32 1326507024, %v3622
    %v3638 = vor.u32 %v3636, %v3637
    %vm3639 = vcmp.lt.s32.totalorder %v3620, 1
    %vm3640 = vcmp.lt.s32.totalorder %v3620, 2
    %vm3641 = vcmp.lt.s32.totalorder %v3620, 3
    %vm3642 = vcmp.lt.s32.totalorder %v3620, 4
    %v3643 = vsel %vm3639, %v3623, %v3626
    %v3644 = vsel %vm3642, %v3632, 2102212464
    %v3645 = vsel %vm3641, %v3629, %v3644
    %v3646 = vsel %vm3640, %v3643, %v3645
    %v3647 = vsel %vm3639, %v3626, %v3629
    %v3648 = vsel %vm3642, %v3635, 920167782
    %v3649 = vsel %vm3641, %v3632, %v3648
    %v3650 = vsel %vm3640, %v3647, %v3649
    %v3651 = vsel %vm3639, %v3629, %v3632
    %v3652 = vsel %vm3642, %v3638, 1326507024
    %v3653 = vsel %vm3641, %v3635, %v3652
    %v3654 = vsel %vm3640, %v3651, %v3653
    %v3655 = vshll.u32 %v3615, 8
    %v3656 = vmul.u32.u64.compose %v3655, %v3654
    %v3657 = vextract.low.u32 %v3656
    %v3658 = vextract.high.u32 %v3656
    %v3659 = vmul.u32.u64.compose %v3655, %v3650
    %v3660 = vextract.low.u32 %v3659
    %v3661 = vextract.high.u32 %v3659
    %v3662 = vmul.u32 %v3655, %v3646
    %v3663 = vadd.s32 %v3658, %v3660
    %vm3664 = vc.u32 %v3658, %v3660
    %v3665 = vadd.s32 %v3661, 1
    %v3666 = vsel %vm3664, %v3665, %v3661
    %v3667 = vadd.s32 %v3662, %v3666
    %v3668 = vadd.s32 %v3667, 536870912
    %v3669 = vshrl.u32 %v3668, 30
    %v3670 = vshll.u32 %v3669, 30
    %v3671 = vsub.s32 %v3667, %v3670
    %vm3672 = vcmp.lt.s32.totalorder %v3671, 0
    %v3673 = vsub.s32 0, %v3671
    %v3674 = vsel %vm3672, %v3673, %v3671
    %v3675 = vclz %v3674
    %v3676 = vsub.s32 %v3675, 2
    %vm3677 = vcmp.gt.s32.totalorder 0, %v3676
    %v3678 = vsel %vm3677, 0, %v3676
    %v3679 = vsub.s32 32, %v3678
    %v3680 = vshll.u32 %v3671, %v3678
    %v3681 = vshrl.u32 %v3663, %v3679
    %v3682 = vor.u32 %v3680, %v3681
    %v3683 = vsub.s32 4294967266, %v3678
    %v3684 = vadd.s32 %v3683, 127
    %v3685 = vshll.u32 %v3684, 23
    %v3686 = vor.u32 4788187, %v3685
    %v3687 = vand.u32 2147483647, %v3686
    %v3689 = vcvt.s32.f32 %v3682
    %v3690 = vmul.f32 %v3689, %v3687
    %v3691 = vxor.u32 %v3690, 2147483648
    %v3692 = vsel %vm3609, %v3691, %v3690
    %v3693 = vsub.s32 4, %v3669
    %v3694 = vsel %vm3609, %v3693, %v3669
    %v3695 = vsel %vm3608, %v3279, %v3692
    %v3696 = vsel %vm3608, 0, %v3694
    %v3697 = vcosq.f32.pop %v3695
    %v3698 = vsinq.f32.pop %v3695
    %vm3699 = vweird.f32 %v3279
    %v3700 = vadd.s32 %v3696, 3
    %v3701 = vand.u32 %v3700, 3
    %vm3702 = vcmp.lt.s32.totalorder %v3701, 2
    %vm3703 = vcmp.eq.s32.totalorder %v3701, 0
    %v3704 = vxor.u32 %v3698, 2147483648
    %v3705 = vsel %vm3703, %v3697, %v3704
    %vm3706 = vcmp.eq.s32.totalorder %v3701, 2
    %v3707 = vxor.u32 %v3697, 2147483648
    %v3708 = vsel %vm3706, %v3707, %v3698
    %v3709 = vsel %vm3702, %v3705, %v3708
    %v3710 = vsel %vm3699, nan, %v3709
    %v3711 = vand.u32 2147483647, %v3284
    %vm3712 = vcmp.le.f32.partialorder %v3711, 0.7853982
    %vm3713 = vcmp.lt.s32.totalorder %v3284, 0
    %v3714 = vand.u32 %v3284, 2139095040
    %v3715 = vshrl.u32 %v3714, 23
    %v3716 = vsub.s32 %v3715, 127
    %v3717 = vand.u32 2147483647, %v3284
    %v3718 = vand.u32 %v3717, 8388607
    %v3719 = vor.u32 %v3718, 8388608
    %v3720 = vsub.s32 0, %v3719
    %v3721 = vadd.s32 %v3716, 1
    %vm3722 = vcmp.gt.s32.totalorder %v3721, 0
    %v3723 = vsel %vm3722, %v3721, 0
    %v3724 = vshrl.u32 %v3723, 5
    %v3725 = vand.u32 %v3723, 31
    %v3726 = vsub.s32 32, %v3725
    %v3727 = vshrl.u32 683565275, %v3726
    %v3728 = vshll.u32 683565275, %v3725
    %v3729 = vshrl.u32 2475754826, %v3726
    %v3730 = vor.u32 %v3728, %v3729
    %v3731 = vshll.u32 2475754826, %v3725
    %v3732 = vshrl.u32 2131351028, %v3726
    %v3733 = vor.u32 %v3731, %v3732
    %v3734 = vshll.u32 2131351028, %v3725
    %v3735 = vshrl.u32 2102212464, %v3726
    %v3736 = vor.u32 %v3734, %v3735
    %v3737 = vshll.u32 2102212464, %v3725
    %v3738 = vshrl.u32 920167782, %v3726
    %v3739 = vor.u32 %v3737, %v3738
    %v3740 = vshll.u32 920167782, %v3725
    %v3741 = vshrl.u32 1326507024, %v3726
    %v3742 = vor.u32 %v3740, %v3741
    %vm3743 = vcmp.lt.s32.totalorder %v3724, 1
    %vm3744 = vcmp.lt.s32.totalorder %v3724, 2
    %vm3745 = vcmp.lt.s32.totalorder %v3724, 3
    %vm3746 = vcmp.lt.s32.totalorder %v3724, 4
    %v3747 = vsel %vm3743, %v3727, %v3730
    %v3748 = vsel %vm3746, %v3736, 2102212464
    %v3749 = vsel %vm3745, %v3733, %v3748
    %v3750 = vsel %vm3744, %v3747, %v3749
    %v3751 = vsel %vm3743, %v3730, %v3733
    %v3752 = vsel %vm3746, %v3739, 920167782
    %v3753 = vsel %vm3745, %v3736, %v3752
    %v3754 = vsel %vm3744, %v3751, %v3753
    %v3755 = vsel %vm3743, %v3733, %v3736
    %v3756 = vsel %vm3746, %v3742, 1326507024
    %v3757 = vsel %vm3745, %v3739, %v3756
    %v3758 = vsel %vm3744, %v3755, %v3757
    %v3759 = vshll.u32 %v3719, 8
    %v3760 = vmul.u32.u64.compose %v3759, %v3758
    %v3761 = vextract.low.u32 %v3760
    %v3762 = vextract.high.u32 %v3760
    %v3763 = vmul.u32.u64.compose %v3759, %v3754
    %v3764 = vextract.low.u32 %v3763
    %v3765 = vextract.high.u32 %v3763
    %v3766 = vmul.u32 %v3759, %v3750
    %v3767 = vadd.s32 %v3762, %v3764
    %vm3768 = vc.u32 %v3762, %v3764
    %v3769 = vadd.s32 %v3765, 1
    %v3770 = vsel %vm3768, %v3769, %v3765
    %v3771 = vadd.s32 %v3766, %v3770
    %v3772 = vadd.s32 %v3771, 536870912
    %v3773 = vshrl.u32 %v3772, 30
    %v3774 = vshll.u32 %v3773, 30
    %v3775 = vsub.s32 %v3771, %v3774
    %vm3776 = vcmp.lt.s32.totalorder %v3775, 0
    %v3777 = vsub.s32 0, %v3775
    %v3778 = vsel %vm3776, %v3777, %v3775
    %v3779 = vclz %v3778
    %v3780 = vsub.s32 %v3779, 2
    %vm3781 = vcmp.gt.s32.totalorder 0, %v3780
    %v3782 = vsel %vm3781, 0, %v3780
    %v3783 = vsub.s32 32, %v3782
    %v3784 = vshll.u32 %v3775, %v3782
    %v3785 = vshrl.u32 %v3767, %v3783
    %v3786 = vor.u32 %v3784, %v3785
    %v3787 = vsub.s32 4294967266, %v3782
    %v3788 = vadd.s32 %v3787, 127
    %v3789 = vshll.u32 %v3788, 23
    %v3790 = vor.u32 4788187, %v3789
    %v3791 = vand.u32 2147483647, %v3790
    %v3793 = vcvt.s32.f32 %v3786
    %v3794 = vmul.f32 %v3793, %v3791
    %v3795 = vxor.u32 %v3794, 2147483648
    %v3796 = vsel %vm3713, %v3795, %v3794
    %v3797 = vsub.s32 4, %v3773
    %v3798 = vsel %vm3713, %v3797, %v3773
    %v3799 = vsel %vm3712, %v3284, %v3796
    %v3800 = vsel %vm3712, 0, %v3798
    %v3801 = vcosq.f32.pop %v3799
    %v3802 = vsinq.f32.pop %v3799
    %vm3803 = vweird.f32 %v3284
    %v3804 = vadd.s32 %v3800, 3
    %v3805 = vand.u32 %v3804, 3
    %vm3806 = vcmp.lt.s32.totalorder %v3805, 2
    %vm3807 = vcmp.eq.s32.totalorder %v3805, 0
    %v3808 = vxor.u32 %v3802, 2147483648
    %v3809 = vsel %vm3807, %v3801, %v3808
    %vm3810 = vcmp.eq.s32.totalorder %v3805, 2
    %v3811 = vxor.u32 %v3801, 2147483648
    %v3812 = vsel %vm3810, %v3811, %v3802
    %v3813 = vsel %vm3806, %v3809, %v3812
    %v3814 = vsel %vm3803, nan, %v3813
    %v3815 = vand.u32 2147483647, %v3286
    %vm3816 = vcmp.le.f32.partialorder %v3815, 0.7853982
    %vm3817 = vcmp.lt.s32.totalorder %v3286, 0
    %v3818 = vand.u32 %v3286, 2139095040
    %v3819 = vshrl.u32 %v3818, 23
    %v3820 = vsub.s32 %v3819, 127
    %v3821 = vand.u32 2147483647, %v3286
    %v3822 = vand.u32 %v3821, 8388607
    %v3823 = vor.u32 %v3822, 8388608
    %v3824 = vsub.s32 0, %v3823
    %v3825 = vadd.s32 %v3820, 1
    %vm3826 = vcmp.gt.s32.totalorder %v3825, 0
    %v3827 = vsel %vm3826, %v3825, 0
    %v3828 = vshrl.u32 %v3827, 5
    %v3829 = vand.u32 %v3827, 31
    %v3830 = vsub.s32 32, %v3829
    %v3831 = vshrl.u32 683565275, %v3830
    %v3832 = vshll.u32 683565275, %v3829
    %v3833 = vshrl.u32 2475754826, %v3830
    %v3834 = vor.u32 %v3832, %v3833
    %v3835 = vshll.u32 2475754826, %v3829
    %v3836 = vshrl.u32 2131351028, %v3830
    %v3837 = vor.u32 %v3835, %v3836
    %v3838 = vshll.u32 2131351028, %v3829
    %v3839 = vshrl.u32 2102212464, %v3830
    %v3840 = vor.u32 %v3838, %v3839
    %v3841 = vshll.u32 2102212464, %v3829
    %v3842 = vshrl.u32 920167782, %v3830
    %v3843 = vor.u32 %v3841, %v3842
    %v3844 = vshll.u32 920167782, %v3829
    %v3845 = vshrl.u32 1326507024, %v3830
    %v3846 = vor.u32 %v3844, %v3845
    %vm3847 = vcmp.lt.s32.totalorder %v3828, 1
    %vm3848 = vcmp.lt.s32.totalorder %v3828, 2
    %vm3849 = vcmp.lt.s32.totalorder %v3828, 3
    %vm3850 = vcmp.lt.s32.totalorder %v3828, 4
    %v3851 = vsel %vm3847, %v3831, %v3834
    %v3852 = vsel %vm3850, %v3840, 2102212464
    %v3853 = vsel %vm3849, %v3837, %v3852
    %v3854 = vsel %vm3848, %v3851, %v3853
    %v3855 = vsel %vm3847, %v3834, %v3837
    %v3856 = vsel %vm3850, %v3843, 920167782
    %v3857 = vsel %vm3849, %v3840, %v3856
    %v3858 = vsel %vm3848, %v3855, %v3857
    %v3859 = vsel %vm3847, %v3837, %v3840
    %v3860 = vsel %vm3850, %v3846, 1326507024
    %v3861 = vsel %vm3849, %v3843, %v3860
    %v3862 = vsel %vm3848, %v3859, %v3861
    %v3863 = vshll.u32 %v3823, 8
    %v3864 = vmul.u32.u64.compose %v3863, %v3862
    %v3865 = vextract.low.u32 %v3864
    %v3866 = vextract.high.u32 %v3864
    %v3867 = vmul.u32.u64.compose %v3863, %v3858
    %v3868 = vextract.low.u32 %v3867
    %v3869 = vextract.high.u32 %v3867
    %v3870 = vmul.u32 %v3863, %v3854
    %v3871 = vadd.s32 %v3866, %v3868
    %vm3872 = vc.u32 %v3866, %v3868
    %v3873 = vadd.s32 %v3869, 1
    %v3874 = vsel %vm3872, %v3873, %v3869
    %v3875 = vadd.s32 %v3870, %v3874
    %v3876 = vadd.s32 %v3875, 536870912
    %v3877 = vshrl.u32 %v3876, 30
    %v3878 = vshll.u32 %v3877, 30
    %v3879 = vsub.s32 %v3875, %v3878
    %vm3880 = vcmp.lt.s32.totalorder %v3879, 0
    %v3881 = vsub.s32 0, %v3879
    %v3882 = vsel %vm3880, %v3881, %v3879
    %v3883 = vclz %v3882
    %v3884 = vsub.s32 %v3883, 2
    %vm3885 = vcmp.gt.s32.totalorder 0, %v3884
    %v3886 = vsel %vm3885, 0, %v3884
    %v3887 = vsub.s32 32, %v3886
    %v3888 = vshll.u32 %v3879, %v3886
    %v3889 = vshrl.u32 %v3871, %v3887
    %v3890 = vor.u32 %v3888, %v3889
    %v3891 = vsub.s32 4294967266, %v3886
    %v3892 = vadd.s32 %v3891, 127
    %v3893 = vshll.u32 %v3892, 23
    %v3894 = vor.u32 4788187, %v3893
    %v3895 = vand.u32 2147483647, %v3894
    %v3897 = vcvt.s32.f32 %v3890
    %v3898 = vmul.f32 %v3897, %v3895
    %v3899 = vxor.u32 %v3898, 2147483648
    %v3900 = vsel %vm3817, %v3899, %v3898
    %v3901 = vsub.s32 4, %v3877
    %v3902 = vsel %vm3817, %v3901, %v3877
    %v3903 = vsel %vm3816, %v3286, %v3900
    %v3904 = vsel %vm3816, 0, %v3902
    %v3905 = vcosq.f32.pop %v3903
    %v3906 = vsinq.f32.pop %v3903
    %vm3907 = vweird.f32 %v3286
    %v3908 = vadd.s32 %v3904, 3
    %v3909 = vand.u32 %v3908, 3
    %vm3910 = vcmp.lt.s32.totalorder %v3909, 2
    %vm3911 = vcmp.eq.s32.totalorder %v3909, 0
    %v3912 = vxor.u32 %v3906, 2147483648
    %v3913 = vsel %vm3911, %v3905, %v3912
    %vm3914 = vcmp.eq.s32.totalorder %v3909, 2
    %v3915 = vxor.u32 %v3905, 2147483648
    %v3916 = vsel %vm3914, %v3915, %v3906
    %v3917 = vsel %vm3910, %v3913, %v3916
    %v3918 = vsel %vm3907, nan, %v3917
    %v3919 = vand.u32 2147483647, %v3291
    %vm3920 = vcmp.le.f32.partialorder %v3919, 0.7853982
    %vm3921 = vcmp.lt.s32.totalorder %v3291, 0
    %v3922 = vand.u32 %v3291, 2139095040
    %v3923 = vshrl.u32 %v3922, 23
    %v3924 = vsub.s32 %v3923, 127
    %v3925 = vand.u32 2147483647, %v3291
    %v3926 = vand.u32 %v3925, 8388607
    %v3927 = vor.u32 %v3926, 8388608
    %v3928 = vsub.s32 0, %v3927
    %v3929 = vadd.s32 %v3924, 1
    %vm3930 = vcmp.gt.s32.totalorder %v3929, 0
    %v3931 = vsel %vm3930, %v3929, 0
    %v3932 = vshrl.u32 %v3931, 5
    %v3933 = vand.u32 %v3931, 31
    %v3934 = vsub.s32 32, %v3933
    %v3935 = vshrl.u32 683565275, %v3934
    %v3936 = vshll.u32 683565275, %v3933
    %v3937 = vshrl.u32 2475754826, %v3934
    %v3938 = vor.u32 %v3936, %v3937
    %v3939 = vshll.u32 2475754826, %v3933
    %v3940 = vshrl.u32 2131351028, %v3934
    %v3941 = vor.u32 %v3939, %v3940
    %v3942 = vshll.u32 2131351028, %v3933
    %v3943 = vshrl.u32 2102212464, %v3934
    %v3944 = vor.u32 %v3942, %v3943
    %v3945 = vshll.u32 2102212464, %v3933
    %v3946 = vshrl.u32 920167782, %v3934
    %v3947 = vor.u32 %v3945, %v3946
    %v3948 = vshll.u32 920167782, %v3933
    %v3949 = vshrl.u32 1326507024, %v3934
    %v3950 = vor.u32 %v3948, %v3949
    %vm3951 = vcmp.lt.s32.totalorder %v3932, 1
    %vm3952 = vcmp.lt.s32.totalorder %v3932, 2
    %vm3953 = vcmp.lt.s32.totalorder %v3932, 3
    %vm3954 = vcmp.lt.s32.totalorder %v3932, 4
    %v3955 = vsel %vm3951, %v3935, %v3938
    %v3956 = vsel %vm3954, %v3944, 2102212464
    %v3957 = vsel %vm3953, %v3941, %v3956
    %v3958 = vsel %vm3952, %v3955, %v3957
    %v3959 = vsel %vm3951, %v3938, %v3941
    %v3960 = vsel %vm3954, %v3947, 920167782
    %v3961 = vsel %vm3953, %v3944, %v3960
    %v3962 = vsel %vm3952, %v3959, %v3961
    %v3963 = vsel %vm3951, %v3941, %v3944
    %v3964 = vsel %vm3954, %v3950, 1326507024
    %v3965 = vsel %vm3953, %v3947, %v3964
    %v3966 = vsel %vm3952, %v3963, %v3965
    %v3967 = vshll.u32 %v3927, 8
    %v3968 = vmul.u32.u64.compose %v3967, %v3966
    %v3969 = vextract.low.u32 %v3968
    %v3970 = vextract.high.u32 %v3968
    %v3971 = vmul.u32.u64.compose %v3967, %v3962
    %v3972 = vextract.low.u32 %v3971
    %v3973 = vextract.high.u32 %v3971
    %v3974 = vmul.u32 %v3967, %v3958
    %v3975 = vadd.s32 %v3970, %v3972
    %vm3976 = vc.u32 %v3970, %v3972
    %v3977 = vadd.s32 %v3973, 1
    %v3978 = vsel %vm3976, %v3977, %v3973
    %v3979 = vadd.s32 %v3974, %v3978
    %v3980 = vadd.s32 %v3979, 536870912
    %v3981 = vshrl.u32 %v3980, 30
    %v3982 = vshll.u32 %v3981, 30
    %v3983 = vsub.s32 %v3979, %v3982
    %vm3984 = vcmp.lt.s32.totalorder %v3983, 0
    %v3985 = vsub.s32 0, %v3983
    %v3986 = vsel %vm3984, %v3985, %v3983
    %v3987 = vclz %v3986
    %v3988 = vsub.s32 %v3987, 2
    %vm3989 = vcmp.gt.s32.totalorder 0, %v3988
    %v3990 = vsel %vm3989, 0, %v3988
    %v3991 = vsub.s32 32, %v3990
    %v3992 = vshll.u32 %v3983, %v3990
    %v3993 = vshrl.u32 %v3975, %v3991
    %v3994 = vor.u32 %v3992, %v3993
    %v3995 = vsub.s32 4294967266, %v3990
    %v3996 = vadd.s32 %v3995, 127
    %v3997 = vshll.u32 %v3996, 23
    %v3998 = vor.u32 4788187, %v3997
    %v3999 = vand.u32 2147483647, %v3998
    %v4001 = vcvt.s32.f32 %v3994
    %v4002 = vmul.f32 %v4001, %v3999
    %v4003 = vxor.u32 %v4002, 2147483648
    %v4004 = vsel %vm3921, %v4003, %v4002
    %v4005 = vsub.s32 4, %v3981
    %v4006 = vsel %vm3921, %v4005, %v3981
    %v4007 = vsel %vm3920, %v3291, %v4004
    %v4008 = vsel %vm3920, 0, %v4006
    %v4009 = vcosq.f32.pop %v4007
    %v4010 = vsinq.f32.pop %v4007
    %vm4011 = vweird.f32 %v3291
    %v4012 = vadd.s32 %v4008, 3
    %v4013 = vand.u32 %v4012, 3
    %vm4014 = vcmp.lt.s32.totalorder %v4013, 2
    %vm4015 = vcmp.eq.s32.totalorder %v4013, 0
    %v4016 = vxor.u32 %v4010, 2147483648
    %v4017 = vsel %vm4015, %v4009, %v4016
    %vm4018 = vcmp.eq.s32.totalorder %v4013, 2
    %v4019 = vxor.u32 %v4009, 2147483648
    %v4020 = vsel %vm4018, %v4019, %v4010
    %v4021 = vsel %vm4014, %v4017, %v4020
    %v4022 = vsel %vm4011, nan, %v4021
    %v4023 = vand.u32 2147483647, %v3293
    %vm4024 = vcmp.le.f32.partialorder %v4023, 0.7853982
    %vm4025 = vcmp.lt.s32.totalorder %v3293, 0
    %v4026 = vand.u32 %v3293, 2139095040
    %v4027 = vshrl.u32 %v4026, 23
    %v4028 = vsub.s32 %v4027, 127
    %v4029 = vand.u32 2147483647, %v3293
    %v4030 = vand.u32 %v4029, 8388607
    %v4031 = vor.u32 %v4030, 8388608
    %v4032 = vsub.s32 0, %v4031
    %v4033 = vadd.s32 %v4028, 1
    %vm4034 = vcmp.gt.s32.totalorder %v4033, 0
    %v4035 = vsel %vm4034, %v4033, 0
    %v4036 = vshrl.u32 %v4035, 5
    %v4037 = vand.u32 %v4035, 31
    %v4038 = vsub.s32 32, %v4037
    %v4039 = vshrl.u32 683565275, %v4038
    %v4040 = vshll.u32 683565275, %v4037
    %v4041 = vshrl.u32 2475754826, %v4038
    %v4042 = vor.u32 %v4040, %v4041
    %v4043 = vshll.u32 2475754826, %v4037
    %v4044 = vshrl.u32 2131351028, %v4038
    %v4045 = vor.u32 %v4043, %v4044
    %v4046 = vshll.u32 2131351028, %v4037
    %v4047 = vshrl.u32 2102212464, %v4038
    %v4048 = vor.u32 %v4046, %v4047
    %v4049 = vshll.u32 2102212464, %v4037
    %v4050 = vshrl.u32 920167782, %v4038
    %v4051 = vor.u32 %v4049, %v4050
    %v4052 = vshll.u32 920167782, %v4037
    %v4053 = vshrl.u32 1326507024, %v4038
    %v4054 = vor.u32 %v4052, %v4053
    %vm4055 = vcmp.lt.s32.totalorder %v4036, 1
    %vm4056 = vcmp.lt.s32.totalorder %v4036, 2
    %vm4057 = vcmp.lt.s32.totalorder %v4036, 3
    %vm4058 = vcmp.lt.s32.totalorder %v4036, 4
    %v4059 = vsel %vm4055, %v4039, %v4042
    %v4060 = vsel %vm4058, %v4048, 2102212464
    %v4061 = vsel %vm4057, %v4045, %v4060
    %v4062 = vsel %vm4056, %v4059, %v4061
    %v4063 = vsel %vm4055, %v4042, %v4045
    %v4064 = vsel %vm4058, %v4051, 920167782
    %v4065 = vsel %vm4057, %v4048, %v4064
    %v4066 = vsel %vm4056, %v4063, %v4065
    %v4067 = vsel %vm4055, %v4045, %v4048
    %v4068 = vsel %vm4058, %v4054, 1326507024
    %v4069 = vsel %vm4057, %v4051, %v4068
    %v4070 = vsel %vm4056, %v4067, %v4069
    %v4071 = vshll.u32 %v4031, 8
    %v4072 = vmul.u32.u64.compose %v4071, %v4070
    %v4073 = vextract.low.u32 %v4072
    %v4074 = vextract.high.u32 %v4072
    %v4075 = vmul.u32.u64.compose %v4071, %v4066
    %v4076 = vextract.low.u32 %v4075
    %v4077 = vextract.high.u32 %v4075
    %v4078 = vmul.u32 %v4071, %v4062
    %v4079 = vadd.s32 %v4074, %v4076
    %vm4080 = vc.u32 %v4074, %v4076
    %v4081 = vadd.s32 %v4077, 1
    %v4082 = vsel %vm4080, %v4081, %v4077
    %v4083 = vadd.s32 %v4078, %v4082
    %v4084 = vadd.s32 %v4083, 536870912
    %v4085 = vshrl.u32 %v4084, 30
    %v4086 = vshll.u32 %v4085, 30
    %v4087 = vsub.s32 %v4083, %v4086
    %vm4088 = vcmp.lt.s32.totalorder %v4087, 0
    %v4089 = vsub.s32 0, %v4087
    %v4090 = vsel %vm4088, %v4089, %v4087
    %v4091 = vclz %v4090
    %v4092 = vsub.s32 %v4091, 2
    %vm4093 = vcmp.gt.s32.totalorder 0, %v4092
    %v4094 = vsel %vm4093, 0, %v4092
    %v4095 = vsub.s32 32, %v4094
    %v4096 = vshll.u32 %v4087, %v4094
    %v4097 = vshrl.u32 %v4079, %v4095
    %v4098 = vor.u32 %v4096, %v4097
    %v4099 = vsub.s32 4294967266, %v4094
    %v4100 = vadd.s32 %v4099, 127
    %v4101 = vshll.u32 %v4100, 23
    %v4102 = vor.u32 4788187, %v4101
    %v4103 = vand.u32 2147483647, %v4102
    %v4105 = vcvt.s32.f32 %v4098
    %v4106 = vmul.f32 %v4105, %v4103
    %v4107 = vxor.u32 %v4106, 2147483648
    %v4108 = vsel %vm4025, %v4107, %v4106
    %v4109 = vsub.s32 4, %v4085
    %v4110 = vsel %vm4025, %v4109, %v4085
    %v4111 = vsel %vm4024, %v3293, %v4108
    %v4112 = vsel %vm4024, 0, %v4110
    %v4113 = vcosq.f32.pop %v4111
    %v4114 = vsinq.f32.pop %v4111
    %vm4115 = vweird.f32 %v3293
    %v4116 = vadd.s32 %v4112, 3
    %v4117 = vand.u32 %v4116, 3
    %vm4118 = vcmp.lt.s32.totalorder %v4117, 2
    %vm4119 = vcmp.eq.s32.totalorder %v4117, 0
    %v4120 = vxor.u32 %v4114, 2147483648
    %v4121 = vsel %vm4119, %v4113, %v4120
    %vm4122 = vcmp.eq.s32.totalorder %v4117, 2
    %v4123 = vxor.u32 %v4113, 2147483648
    %v4124 = vsel %vm4122, %v4123, %v4114
    %v4125 = vsel %vm4118, %v4121, %v4124
    %v4126 = vsel %vm4115, nan, %v4125
    %4128 = vset.pattern.permute.xlu0 0
    %4129 = vperm.xlu0 %4128, %v56
    %v4130 = vpop.permute.xlu0 %4129
    %4133 = vset.pattern.permute.xlu0 0
    %4134 = vperm.xlu0 %4133, %v57
    %v4135 = vpop.permute.xlu0 %4134
    %4138 = vset.pattern.permute.xlu0 0
    %4139 = vperm.xlu0 %4138, %v58
    %v4140 = vpop.permute.xlu0 %4139
    %4143 = vset.pattern.permute.xlu0 0
    %4144 = vperm.xlu0 %4143, %v59
    %v4145 = vpop.permute.xlu0 %4144
    %v4148 = vsel %vm1038, %v41, 0
    %v4151 = vsel %vm1038, %v42, 0
    %v4154 = vsel %vm1038, %v43, 0
    %v4157 = vsel %vm1038, %v44, 0
    %v4159 = vand.u32 %v3502, 4294901760
    %4160 = vmatprep.subr.mxu0 %v4159
    %v4161 = vand.u32 %v3398, 4294901760
    %4162 = vmatpush1.msra.mxu0 %v4161
    %v4163 = vand.u32 %v3710, 4294901760
    %4164 = vmatprep.subr.mxu0 %v4163
    %v4165 = vand.u32 %v3606, 4294901760
    %4166 = vmatpush1.msra.mxu0 %v4165
    %v4167 = vand.u32 %v3918, 4294901760
    %4168 = vmatprep.subr.mxu0 %v4167
    %v4169 = vand.u32 %v3814, 4294901760
    %4170 = vmatpush1.msra.mxu0 %v4169
    %v4171 = vand.u32 %v4126, 4294901760
    %4172 = vmatprep.subr.mxu0 %v4171
    %v4173 = vand.u32 %v4022, 4294901760
    %4174 = vmatpush1.msra.mxu0 %v4173
    %4175 = vmatprep.subr.mxu0 0.0
    %4176 = vmatpush1.msra.mxu0 0.0
    %4177 = vmatprep.subr.mxu0 0.0
    %4178 = vmatpush1.msra.mxu0 0.0
    %4179 = vmatprep.subr.mxu0 0.0
    %4180 = vmatpush1.msra.mxu0 0.0
    %4181 = vmatprep.subr.mxu0 0.0
    %4182 = vmatpush1.msra.mxu0 0.0
    %4183 = vmatprep.subr.mxu0 0.0
    %4184 = vmatpush1.msra.mxu0 0.0
    %4185 = vmatprep.subr.mxu0 0.0
    %4186 = vmatpush1.msra.mxu0 0.0
    %4187 = vmatprep.subr.mxu0 0.0
    %4188 = vmatpush1.msra.mxu0 0.0
    %4189 = vmatprep.subr.mxu0 0.0
    %4190 = vmatpush1.msra.mxu0 0.0
    %4191 = vmatprep.subr.mxu0 0.0
    %4192 = vmatpush1.msra.mxu0 0.0
    %4193 = vmatprep.subr.mxu0 0.0
    %4194 = vmatpush1.msra.mxu0 0.0
    %4195 = vmatprep.subr.mxu0 0.0
    %4196 = vmatpush1.msra.mxu0 0.0
    %4197 = vmatprep.subr.mxu0 0.0
    %4198 = vmatpush1.msra.mxu0 0.0
    %4199 = vmatprep.subr.mxu0 0.0
    %4200 = vmatpush1.msra.mxu0 0.0
    %4201 = vmatprep.subr.mxu0 0.0
    %4202 = vmatpush1.msra.mxu0 0.0
    %4203 = vmatprep.subr.mxu0 0.0
    %4204 = vmatpush1.msra.mxu0 0.0
    %4205 = vmatprep.subr.mxu0 0.0
    %4206 = vmatpush1.msra.mxu0 0.0
    %4207 = vmatprep.subr.mxu0 0.0
    %4208 = vmatpush1.msra.mxu0 0.0
    %4209 = vmatprep.subr.mxu0 0.0
    %4210 = vmatpush1.msra.mxu0 0.0
    %4211 = vmatprep.subr.mxu0 0.0
    %4212 = vmatpush1.msra.mxu0 0.0
    %4213 = vmatprep.subr.mxu0 0.0
    %4214 = vmatpush1.msra.mxu0 0.0
    %4215 = vmatprep.subr.mxu0 0.0
    %4216 = vmatpush1.msra.mxu0 0.0
    %4217 = vmatprep.subr.mxu0 0.0
    %4218 = vmatpush1.msra.mxu0 0.0
    %4219 = vmatprep.subr.mxu0 0.0
    %4220 = vmatpush1.msra.mxu0 0.0
    %4221 = vmatprep.subr.mxu0 0.0
    %4222 = vmatpush1.msra.mxu0 0.0
    %4223 = vmatprep.subr.mxu0 0.0
    %4224 = vmatpush1.msra.mxu0 0.0
    %4225 = vmatprep.subr.mxu0 0.0
    %4226 = vmatpush1.msra.mxu0 0.0
    %4227 = vmatprep.subr.mxu0 0.0
    %4228 = vmatpush1.msra.mxu0 0.0
    %4229 = vmatprep.subr.mxu0 0.0
    %4230 = vmatpush1.msra.mxu0 0.0
    %4231 = vmatprep.mubr.f32.mxu0 0.0
    %v4232 = vand.u32 %v4148, 4294901760
    %v4233 = vsub.f32 %v4148, %v4232
    %v4234 = vand.u32 %v4233, 4294901760
    %v4235 = vsub.f32 %v4233, %v4234
    %v4236 = vand.u32 %v4235, 4294901760
    %4237 = vmatmul.mubr.f32.gmra.mrb[0].mxu0 %v4236
    %v4238 = vpop.f32.mrb[0].mxu0
    %v4239 = vadd.f32 %v4130, %v4238
    %v4240 = vpop.f32.mrb[0].mxu0
    %v4241 = vadd.f32 %v4130, %v4240
    %4242 = vmatprep.mubr.f32.mxu0 0.0
    %v4243 = vand.u32 %v4151, 4294901760
    %v4244 = vsub.f32 %v4151, %v4243
    %v4245 = vand.u32 %v4244, 4294901760
    %v4246 = vsub.f32 %v4244, %v4245
    %v4247 = vand.u32 %v4246, 4294901760
    %4248 = vmatmul.mubr.f32.gmra.mrb[0].mxu0 %v4247
    %v4249 = vpop.f32.mrb[0].mxu0
    %v4250 = vadd.f32 %v4135, %v4249
    %v4251 = vpop.f32.mrb[0].mxu0
    %v4252 = vadd.f32 %v4135, %v4251
    %4253 = vmatprep.mubr.f32.mxu0 0.0
    %v4254 = vand.u32 %v4154, 4294901760
    %v4255 = vsub.f32 %v4154, %v4254
    %v4256 = vand.u32 %v4255, 4294901760
    %v4257 = vsub.f32 %v4255, %v4256
    %v4258 = vand.u32 %v4257, 4294901760
    %4259 = vmatmul.mubr.f32.gmra.mrb[0].mxu0 %v4258
    %v4260 = vpop.f32.mrb[0].mxu0
    %v4261 = vadd.f32 %v4140, %v4260
    %v4262 = vpop.f32.mrb[0].mxu0
    %v4263 = vadd.f32 %v4140, %v4262
    %4264 = vmatprep.mubr.f32.mxu0 0.0
    %v4265 = vand.u32 %v4157, 4294901760
    %v4266 = vsub.f32 %v4157, %v4265
    %v4267 = vand.u32 %v4266, 4294901760
    %v4268 = vsub.f32 %v4266, %v4267
    %v4269 = vand.u32 %v4268, 4294901760
    %4270 = vmatmul.mubr.f32.gmra.mrb[0].mxu0 %v4269
    %v4271 = vpop.f32.mrb[0].mxu0
    %v4272 = vadd.f32 %v4145, %v4271
    %v4273 = vpop.f32.mrb[0].mxu0
    %v4274 = vadd.f32 %v4145, %v4273
    %4275 = vdwg.mxu0
    %v4276 = vand.u32 %v3502, 4294901760
    %v4277 = vsub.f32 %v3502, %v4276
    %v4278 = vand.u32 %v4277, 4294901760
    %v4279 = vsub.f32 %v4277, %v4278
    %v4280 = vand.u32 %v4279, 4294901760
    %4281 = vmatprep.subr.mxu0 %v4280
    %v4282 = vand.u32 %v3398, 4294901760
    %v4283 = vsub.f32 %v3398, %v4282
    %v4284 = vand.u32 %v4283, 4294901760
    %v4285 = vsub.f32 %v4283, %v4284
    %v4286 = vand.u32 %v4285, 4294901760
    %4287 = vmatpush1.msra.mxu0 %v4286
    %v4288 = vand.u32 %v3710, 4294901760
    %v4289 = vsub.f32 %v3710, %v4288
    %v4290 = vand.u32 %v4289, 4294901760
    %v4291 = vsub.f32 %v4289, %v4290
    %v4292 = vand.u32 %v4291, 4294901760
    %4293 = vmatprep.subr.mxu0 %v4292
    %v4294 = vand.u32 %v3606, 4294901760
    %v4295 = vsub.f32 %v3606, %v4294
    %v4296 = vand.u32 %v4295, 4294901760
    %v4297 = vsub.f32 %v4295, %v4296
    %v4298 = vand.u32 %v4297, 4294901760
    %4299 = vmatpush1.msra.mxu0 %v4298
    %v4300 = vand.u32 %v3918, 4294901760
    %v4301 = vsub.f32 %v3918, %v4300
    %v4302 = vand.u32 %v4301, 4294901760
    %v4303 = vsub.f32 %v4301, %v4302
    %v4304 = vand.u32 %v4303, 4294901760
    %4305 = vmatprep.subr.mxu0 %v4304
    %v4306 = vand.u32 %v3814, 4294901760
    %v4307 = vsub.f32 %v3814, %v4306
    %v4308 = vand.u32 %v4307, 4294901760
    %v4309 = vsub.f32 %v4307, %v4308
    %v4310 = vand.u32 %v4309, 4294901760
    %4311 = vmatpush1.msra.mxu0 %v4310
    %v4312 = vand.u32 %v4126, 4294901760
    %v4313 = vsub.f32 %v4126, %v4312
    %v4314 = vand.u32 %v4313, 4294901760
    %v4315 = vsub.f32 %v4313, %v4314
    %v4316 = vand.u32 %v4315, 4294901760
    %4317 = vmatprep.subr.mxu0 %v4316
    %v4318 = vand.u32 %v4022, 4294901760
    %v4319 = vsub.f32 %v4022, %v4318
    %v4320 = vand.u32 %v4319, 4294901760
    %v4321 = vsub.f32 %v4319, %v4320
    %v4322 = vand.u32 %v4321, 4294901760
    %4323 = vmatpush1.msra.mxu0 %v4322
    %4324 = vmatprep.subr.mxu0 0.0
    %4325 = vmatpush1.msra.mxu0 0.0
    %4326 = vmatprep.subr.mxu0 0.0
    %4327 = vmatpush1.msra.mxu0 0.0
    %4328 = vmatprep.subr.mxu0 0.0
    %4329 = vmatpush1.msra.mxu0 0.0
    %4330 = vmatprep.subr.mxu0 0.0
    %4331 = vmatpush1.msra.mxu0 0.0
    %4332 = vmatprep.subr.mxu0 0.0
    %4333 = vmatpush1.msra.mxu0 0.0
    %4334 = vmatprep.subr.mxu0 0.0
    %4335 = vmatpush1.msra.mxu0 0.0
    %4336 = vmatprep.subr.mxu0 0.0
    %4337 = vmatpush1.msra.mxu0 0.0
    %4338 = vmatprep.subr.mxu0 0.0
    %4339 = vmatpush1.msra.mxu0 0.0
    %4340 = vmatprep.subr.mxu0 0.0
    %4341 = vmatpush1.msra.mxu0 0.0
    %4342 = vmatprep.subr.mxu0 0.0
    %4343 = vmatpush1.msra.mxu0 0.0
    %4344 = vmatprep.subr.mxu0 0.0
    %4345 = vmatpush1.msra.mxu0 0.0
    %4346 = vmatprep.subr.mxu0 0.0
    %4347 = vmatpush1.msra.mxu0 0.0
    %4348 = vmatprep.subr.mxu0 0.0
    %4349 = vmatpush1.msra.mxu0 0.0
    %4350 = vmatprep.subr.mxu0 0.0
    %4351 = vmatpush1.msra.mxu0 0.0
    %4352 = vmatprep.subr.mxu0 0.0
    %4353 = vmatpush1.msra.mxu0 0.0
    %4354 = vmatprep.subr.mxu0 0.0
    %4355 = vmatpush1.msra.mxu0 0.0
    %4356 = vmatprep.subr.mxu0 0.0
    %4357 = vmatpush1.msra.mxu0 0.0
    %4358 = vmatprep.subr.mxu0 0.0
    %4359 = vmatpush1.msra.mxu0 0.0
    %4360 = vmatprep.subr.mxu0 0.0
    %4361 = vmatpush1.msra.mxu0 0.0
    %4362 = vmatprep.subr.mxu0 0.0
    %4363 = vmatpush1.msra.mxu0 0.0
    %4364 = vmatprep.subr.mxu0 0.0
    %4365 = vmatpush1.msra.mxu0 0.0
    %4366 = vmatprep.subr.mxu0 0.0
    %4367 = vmatpush1.msra.mxu0 0.0
    %4368 = vmatprep.subr.mxu0 0.0
    %4369 = vmatpush1.msra.mxu0 0.0
    %4370 = vmatprep.subr.mxu0 0.0
    %4371 = vmatpush1.msra.mxu0 0.0
    %4372 = vmatprep.subr.mxu0 0.0
    %4373 = vmatpush1.msra.mxu0 0.0
    %4374 = vmatprep.subr.mxu0 0.0
    %4375 = vmatpush1.msra.mxu0 0.0
    %4376 = vmatprep.subr.mxu0 0.0
    %4377 = vmatpush1.msra.mxu0 0.0
    %4378 = vmatprep.subr.mxu0 0.0
    %4379 = vmatpush1.msra.mxu0 0.0
    %4380 = vmatprep.mubr.f32.mxu0 0.0
    %v4381 = vand.u32 %v4148, 4294901760
    %4382 = vmatmul.mubr.f32.gmra.mrb[0].mxu0 %v4381
    %v4383 = vpop.f32.mrb[0].mxu0
    %v4384 = vadd.f32 %v4239, %v4383
    %v4385 = vpop.f32.mrb[0].mxu0
    %v4386 = vadd.f32 %v4241, %v4385
    %4387 = vmatprep.mubr.f32.mxu0 0.0
    %v4388 = vand.u32 %v4151, 4294901760
    %4389 = vmatmul.mubr.f32.gmra.mrb[0].mxu0 %v4388
    %v4390 = vpop.f32.mrb[0].mxu0
    %v4391 = vadd.f32 %v4250, %v4390
    %v4392 = vpop.f32.mrb[0].mxu0
    %v4393 = vadd.f32 %v4252, %v4392
    %4394 = vmatprep.mubr.f32.mxu0 0.0
    %v4395 = vand.u32 %v4154, 4294901760
    %4396 = vmatmul.mubr.f32.gmra.mrb[0].mxu0 %v4395
    %v4397 = vpop.f32.mrb[0].mxu0
    %v4398 = vadd.f32 %v4261, %v4397
    %v4399 = vpop.f32.mrb[0].mxu0
    %v4400 = vadd.f32 %v4263, %v4399
    %4401 = vmatprep.mubr.f32.mxu0 0.0
    %v4402 = vand.u32 %v4157, 4294901760
    %4403 = vmatmul.mubr.f32.gmra.mrb[0].mxu0 %v4402
    %v4404 = vpop.f32.mrb[0].mxu0
    %v4405 = vadd.f32 %v4272, %v4404
    %v4406 = vpop.f32.mrb[0].mxu0
    %v4407 = vadd.f32 %v4274, %v4406
    %4408 = vdwg.mxu0
    %v4409 = vand.u32 %v3502, 4294901760
    %v4410 = vsub.f32 %v3502, %v4409
    %4411 = vmatprep.subr.mxu0 %v4410
    %v4412 = vand.u32 %v3398, 4294901760
    %v4413 = vsub.f32 %v3398, %v4412
    %4414 = vmatpush1.msra.mxu0 %v4413
    %v4415 = vand.u32 %v3710, 4294901760
    %v4416 = vsub.f32 %v3710, %v4415
    %4417 = vmatprep.subr.mxu0 %v4416
    %v4418 = vand.u32 %v3606, 4294901760
    %v4419 = vsub.f32 %v3606, %v4418
    %4420 = vmatpush1.msra.mxu0 %v4419
    %v4421 = vand.u32 %v3918, 4294901760
    %v4422 = vsub.f32 %v3918, %v4421
    %4423 = vmatprep.subr.mxu0 %v4422
    %v4424 = vand.u32 %v3814, 4294901760
    %v4425 = vsub.f32 %v3814, %v4424
    %4426 = vmatpush1.msra.mxu0 %v4425
    %v4427 = vand.u32 %v4126, 4294901760
    %v4428 = vsub.f32 %v4126, %v4427
    %4429 = vmatprep.subr.mxu0 %v4428
    %v4430 = vand.u32 %v4022, 4294901760
    %v4431 = vsub.f32 %v4022, %v4430
    %4432 = vmatpush1.msra.mxu0 %v4431
    %4433 = vmatprep.subr.mxu0 0.0
    %4434 = vmatpush1.msra.mxu0 0.0
    %4435 = vmatprep.subr.mxu0 0.0
    %4436 = vmatpush1.msra.mxu0 0.0
    %4437 = vmatprep.subr.mxu0 0.0
    %4438 = vmatpush1.msra.mxu0 0.0
    %4439 = vmatprep.subr.mxu0 0.0
    %4440 = vmatpush1.msra.mxu0 0.0
    %4441 = vmatprep.subr.mxu0 0.0
    %4442 = vmatpush1.msra.mxu0 0.0
    %4443 = vmatprep.subr.mxu0 0.0
    %4444 = vmatpush1.msra.mxu0 0.0
    %4445 = vmatprep.subr.mxu0 0.0
    %4446 = vmatpush1.msra.mxu0 0.0
    %4447 = vmatprep.subr.mxu0 0.0
    %4448 = vmatpush1.msra.mxu0 0.0
    %4449 = vmatprep.subr.mxu0 0.0
    %4450 = vmatpush1.msra.mxu0 0.0
    %4451 = vmatprep.subr.mxu0 0.0
    %4452 = vmatpush1.msra.mxu0 0.0
    %4453 = vmatprep.subr.mxu0 0.0
    %4454 = vmatpush1.msra.mxu0 0.0
    %4455 = vmatprep.subr.mxu0 0.0
    %4456 = vmatpush1.msra.mxu0 0.0
    %4457 = vmatprep.subr.mxu0 0.0
    %4458 = vmatpush1.msra.mxu0 0.0
    %4459 = vmatprep.subr.mxu0 0.0
    %4460 = vmatpush1.msra.mxu0 0.0
    %4461 = vmatprep.subr.mxu0 0.0
    %4462 = vmatpush1.msra.mxu0 0.0
    %4463 = vmatprep.subr.mxu0 0.0
    %4464 = vmatpush1.msra.mxu0 0.0
    %4465 = vmatprep.subr.mxu0 0.0
    %4466 = vmatpush1.msra.mxu0 0.0
    %4467 = vmatprep.subr.mxu0 0.0
    %4468 = vmatpush1.msra.mxu0 0.0
    %4469 = vmatprep.subr.mxu0 0.0
    %4470 = vmatpush1.msra.mxu0 0.0
    %4471 = vmatprep.subr.mxu0 0.0
    %4472 = vmatpush1.msra.mxu0 0.0
    %4473 = vmatprep.subr.mxu0 0.0
    %4474 = vmatpush1.msra.mxu0 0.0
    %4475 = vmatprep.subr.mxu0 0.0
    %4476 = vmatpush1.msra.mxu0 0.0
    %4477 = vmatprep.subr.mxu0 0.0
    %4478 = vmatpush1.msra.mxu0 0.0
    %4479 = vmatprep.subr.mxu0 0.0
    %4480 = vmatpush1.msra.mxu0 0.0
    %4481 = vmatprep.subr.mxu0 0.0
    %4482 = vmatpush1.msra.mxu0 0.0
    %4483 = vmatprep.subr.mxu0 0.0
    %4484 = vmatpush1.msra.mxu0 0.0
    %4485 = vmatprep.subr.mxu0 0.0
    %4486 = vmatpush1.msra.mxu0 0.0
    %4487 = vmatprep.subr.mxu0 0.0
    %4488 = vmatpush1.msra.mxu0 0.0
    %4489 = vmatprep.mubr.f32.mxu0 0.0
    %v4490 = vand.u32 %v4148, 4294901760
    %v4491 = vsub.f32 %v4148, %v4490
    %4492 = vmatmul.mubr.f32.gmra.mrb[0].mxu0 %v4491
    %v4493 = vpop.f32.mrb[0].mxu0
    %v4494 = vadd.f32 %v4384, %v4493
    %v4495 = vpop.f32.mrb[0].mxu0
    %v4496 = vadd.f32 %v4386, %v4495
    %4497 = vmatprep.mubr.f32.mxu0 0.0
    %v4498 = vand.u32 %v4151, 4294901760
    %v4499 = vsub.f32 %v4151, %v4498
    %4500 = vmatmul.mubr.f32.gmra.mrb[0].mxu0 %v4499
    %v4501 = vpop.f32.mrb[0].mxu0
    %v4502 = vadd.f32 %v4391, %v4501
    %v4503 = vpop.f32.mrb[0].mxu0
    %v4504 = vadd.f32 %v4393, %v4503
    %4505 = vmatprep.mubr.f32.mxu0 0.0
    %v4506 = vand.u32 %v4154, 4294901760
    %v4507 = vsub.f32 %v4154, %v4506
    %4508 = vmatmul.mubr.f32.gmra.mrb[0].mxu0 %v4507
    %v4509 = vpop.f32.mrb[0].mxu0
    %v4510 = vadd.f32 %v4398, %v4509
    %v4511 = vpop.f32.mrb[0].mxu0
    %v4512 = vadd.f32 %v4400, %v4511
    %4513 = vmatprep.mubr.f32.mxu0 0.0
    %v4514 = vand.u32 %v4157, 4294901760
    %v4515 = vsub.f32 %v4157, %v4514
    %4516 = vmatmul.mubr.f32.gmra.mrb[0].mxu0 %v4515
    %v4517 = vpop.f32.mrb[0].mxu0
    %v4518 = vadd.f32 %v4405, %v4517
    %v4519 = vpop.f32.mrb[0].mxu0
    %v4520 = vadd.f32 %v4407, %v4519
    %4521 = vdwg.mxu0
    %v4522 = vand.u32 %v3502, 4294901760
    %4523 = vmatprep.subr.mxu0 %v4522
    %v4524 = vand.u32 %v3398, 4294901760
    %4525 = vmatpush1.msra.mxu0 %v4524
    %v4526 = vand.u32 %v3710, 4294901760
    %4527 = vmatprep.subr.mxu0 %v4526
    %v4528 = vand.u32 %v3606, 4294901760
    %4529 = vmatpush1.msra.mxu0 %v4528
    %v4530 = vand.u32 %v3918, 4294901760
    %4531 = vmatprep.subr.mxu0 %v4530
    %v4532 = vand.u32 %v3814, 4294901760
    %4533 = vmatpush1.msra.mxu0 %v4532
    %v4534 = vand.u32 %v4126, 4294901760
    %4535 = vmatprep.subr.mxu0 %v4534
    %v4536 = vand.u32 %v4022, 4294901760
    %4537 = vmatpush1.msra.mxu0 %v4536
    %4538 = vmatprep.subr.mxu0 0.0
    %4539 = vmatpush1.msra.mxu0 0.0
    %4540 = vmatprep.subr.mxu0 0.0
    %4541 = vmatpush1.msra.mxu0 0.0
    %4542 = vmatprep.subr.mxu0 0.0
    %4543 = vmatpush1.msra.mxu0 0.0
    %4544 = vmatprep.subr.mxu0 0.0
    %4545 = vmatpush1.msra.mxu0 0.0
    %4546 = vmatprep.subr.mxu0 0.0
    %4547 = vmatpush1.msra.mxu0 0.0
    %4548 = vmatprep.subr.mxu0 0.0
    %4549 = vmatpush1.msra.mxu0 0.0
    %4550 = vmatprep.subr.mxu0 0.0
    %4551 = vmatpush1.msra.mxu0 0.0
    %4552 = vmatprep.subr.mxu0 0.0
    %4553 = vmatpush1.msra.mxu0 0.0
    %4554 = vmatprep.subr.mxu0 0.0
    %4555 = vmatpush1.msra.mxu0 0.0
    %4556 = vmatprep.subr.mxu0 0.0
    %4557 = vmatpush1.msra.mxu0 0.0
    %4558 = vmatprep.subr.mxu0 0.0
    %4559 = vmatpush1.msra.mxu0 0.0
    %4560 = vmatprep.subr.mxu0 0.0
    %4561 = vmatpush1.msra.mxu0 0.0
    %4562 = vmatprep.subr.mxu0 0.0
    %4563 = vmatpush1.msra.mxu0 0.0
    %4564 = vmatprep.subr.mxu0 0.0
    %4565 = vmatpush1.msra.mxu0 0.0
    %4566 = vmatprep.subr.mxu0 0.0
    %4567 = vmatpush1.msra.mxu0 0.0
    %4568 = vmatprep.subr.mxu0 0.0
    %4569 = vmatpush1.msra.mxu0 0.0
    %4570 = vmatprep.subr.mxu0 0.0
    %4571 = vmatpush1.msra.mxu0 0.0
    %4572 = vmatprep.subr.mxu0 0.0
    %4573 = vmatpush1.msra.mxu0 0.0
    %4574 = vmatprep.subr.mxu0 0.0
    %4575 = vmatpush1.msra.mxu0 0.0
    %4576 = vmatprep.subr.mxu0 0.0
    %4577 = vmatpush1.msra.mxu0 0.0
    %4578 = vmatprep.subr.mxu0 0.0
    %4579 = vmatpush1.msra.mxu0 0.0
    %4580 = vmatprep.subr.mxu0 0.0
    %4581 = vmatpush1.msra.mxu0 0.0
    %4582 = vmatprep.subr.mxu0 0.0
    %4583 = vmatpush1.msra.mxu0 0.0
    %4584 = vmatprep.subr.mxu0 0.0
    %4585 = vmatpush1.msra.mxu0 0.0
    %4586 = vmatprep.subr.mxu0 0.0
    %4587 = vmatpush1.msra.mxu0 0.0
    %4588 = vmatprep.subr.mxu0 0.0
    %4589 = vmatpush1.msra.mxu0 0.0
    %4590 = vmatprep.subr.mxu0 0.0
    %4591 = vmatpush1.msra.mxu0 0.0
    %4592 = vmatprep.subr.mxu0 0.0
    %4593 = vmatpush1.msra.mxu0 0.0
    %4594 = vmatprep.mubr.f32.mxu0 0.0
    %v4595 = vand.u32 %v4148, 4294901760
    %v4596 = vsub.f32 %v4148, %v4595
    %v4597 = vand.u32 %v4596, 4294901760
    %4598 = vmatmul.mubr.f32.gmra.mrb[0].mxu0 %v4597
    %v4599 = vpop.f32.mrb[0].mxu0
    %v4600 = vadd.f32 %v4494, %v4599
    %v4601 = vpop.f32.mrb[0].mxu0
    %v4602 = vadd.f32 %v4496, %v4601
    %4603 = vmatprep.mubr.f32.mxu0 0.0
    %v4604 = vand.u32 %v4151, 4294901760
    %v4605 = vsub.f32 %v4151, %v4604
    %v4606 = vand.u32 %v4605, 4294901760
    %4607 = vmatmul.mubr.f32.gmra.mrb[0].mxu0 %v4606
    %v4608 = vpop.f32.mrb[0].mxu0
    %v4609 = vadd.f32 %v4502, %v4608
    %v4610 = vpop.f32.mrb[0].mxu0
    %v4611 = vadd.f32 %v4504, %v4610
    %4612 = vmatprep.mubr.f32.mxu0 0.0
    %v4613 = vand.u32 %v4154, 4294901760
    %v4614 = vsub.f32 %v4154, %v4613
    %v4615 = vand.u32 %v4614, 4294901760
    %4616 = vmatmul.mubr.f32.gmra.mrb[0].mxu0 %v4615
    %v4617 = vpop.f32.mrb[0].mxu0
    %v4618 = vadd.f32 %v4510, %v4617
    %v4619 = vpop.f32.mrb[0].mxu0
    %v4620 = vadd.f32 %v4512, %v4619
    %4621 = vmatprep.mubr.f32.mxu0 0.0
    %v4622 = vand.u32 %v4157, 4294901760
    %v4623 = vsub.f32 %v4157, %v4622
    %v4624 = vand.u32 %v4623, 4294901760
    %4625 = vmatmul.mubr.f32.gmra.mrb[0].mxu0 %v4624
    %v4626 = vpop.f32.mrb[0].mxu0
    %v4627 = vadd.f32 %v4518, %v4626
    %v4628 = vpop.f32.mrb[0].mxu0
    %v4629 = vadd.f32 %v4520, %v4628
    %4630 = vdwg.mxu0
    %v4631 = vand.u32 %v3502, 4294901760
    %v4632 = vsub.f32 %v3502, %v4631
    %v4633 = vand.u32 %v4632, 4294901760
    %4634 = vmatprep.subr.mxu0 %v4633
    %v4635 = vand.u32 %v3398, 4294901760
    %v4636 = vsub.f32 %v3398, %v4635
    %v4637 = vand.u32 %v4636, 4294901760
    %4638 = vmatpush1.msra.mxu0 %v4637
    %v4639 = vand.u32 %v3710, 4294901760
    %v4640 = vsub.f32 %v3710, %v4639
    %v4641 = vand.u32 %v4640, 4294901760
    %4642 = vmatprep.subr.mxu0 %v4641
    %v4643 = vand.u32 %v3606, 4294901760
    %v4644 = vsub.f32 %v3606, %v4643
    %v4645 = vand.u32 %v4644, 4294901760
    %4646 = vmatpush1.msra.mxu0 %v4645
    %v4647 = vand.u32 %v3918, 4294901760
    %v4648 = vsub.f32 %v3918, %v4647
    %v4649 = vand.u32 %v4648, 4294901760
    %4650 = vmatprep.subr.mxu0 %v4649
    %v4651 = vand.u32 %v3814, 4294901760
    %v4652 = vsub.f32 %v3814, %v4651
    %v4653 = vand.u32 %v4652, 4294901760
    %4654 = vmatpush1.msra.mxu0 %v4653
    %v4655 = vand.u32 %v4126, 4294901760
    %v4656 = vsub.f32 %v4126, %v4655
    %v4657 = vand.u32 %v4656, 4294901760
    %4658 = vmatprep.subr.mxu0 %v4657
    %v4659 = vand.u32 %v4022, 4294901760
    %v4660 = vsub.f32 %v4022, %v4659
    %v4661 = vand.u32 %v4660, 4294901760
    %4662 = vmatpush1.msra.mxu0 %v4661
    %4663 = vmatprep.subr.mxu0 0.0
    %4664 = vmatpush1.msra.mxu0 0.0
    %4665 = vmatprep.subr.mxu0 0.0
    %4666 = vmatpush1.msra.mxu0 0.0
    %4667 = vmatprep.subr.mxu0 0.0
    %4668 = vmatpush1.msra.mxu0 0.0
    %4669 = vmatprep.subr.mxu0 0.0
    %4670 = vmatpush1.msra.mxu0 0.0
    %4671 = vmatprep.subr.mxu0 0.0
    %4672 = vmatpush1.msra.mxu0 0.0
    %4673 = vmatprep.subr.mxu0 0.0
    %4674 = vmatpush1.msra.mxu0 0.0
    %4675 = vmatprep.subr.mxu0 0.0
    %4676 = vmatpush1.msra.mxu0 0.0
    %4677 = vmatprep.subr.mxu0 0.0
    %4678 = vmatpush1.msra.mxu0 0.0
    %4679 = vmatprep.subr.mxu0 0.0
    %4680 = vmatpush1.msra.mxu0 0.0
    %4681 = vmatprep.subr.mxu0 0.0
    %4682 = vmatpush1.msra.mxu0 0.0
    %4683 = vmatprep.subr.mxu0 0.0
    %4684 = vmatpush1.msra.mxu0 0.0
    %4685 = vmatprep.subr.mxu0 0.0
    %4686 = vmatpush1.msra.mxu0 0.0
    %4687 = vmatprep.subr.mxu0 0.0
    %4688 = vmatpush1.msra.mxu0 0.0
    %4689 = vmatprep.subr.mxu0 0.0
    %4690 = vmatpush1.msra.mxu0 0.0
    %4691 = vmatprep.subr.mxu0 0.0
    %4692 = vmatpush1.msra.mxu0 0.0
    %4693 = vmatprep.subr.mxu0 0.0
    %4694 = vmatpush1.msra.mxu0 0.0
    %4695 = vmatprep.subr.mxu0 0.0
    %4696 = vmatpush1.msra.mxu0 0.0
    %4697 = vmatprep.subr.mxu0 0.0
    %4698 = vmatpush1.msra.mxu0 0.0
    %4699 = vmatprep.subr.mxu0 0.0
    %4700 = vmatpush1.msra.mxu0 0.0
    %4701 = vmatprep.subr.mxu0 0.0
    %4702 = vmatpush1.msra.mxu0 0.0
    %4703 = vmatprep.subr.mxu0 0.0
    %4704 = vmatpush1.msra.mxu0 0.0
    %4705 = vmatprep.subr.mxu0 0.0
    %4706 = vmatpush1.msra.mxu0 0.0
    %4707 = vmatprep.subr.mxu0 0.0
    %4708 = vmatpush1.msra.mxu0 0.0
    %4709 = vmatprep.subr.mxu0 0.0
    %4710 = vmatpush1.msra.mxu0 0.0
    %4711 = vmatprep.subr.mxu0 0.0
    %4712 = vmatpush1.msra.mxu0 0.0
    %4713 = vmatprep.subr.mxu0 0.0
    %4714 = vmatpush1.msra.mxu0 0.0
    %4715 = vmatprep.subr.mxu0 0.0
    %4716 = vmatpush1.msra.mxu0 0.0
    %4717 = vmatprep.subr.mxu0 0.0
    %4718 = vmatpush1.msra.mxu0 0.0
    %4719 = vmatprep.mubr.f32.mxu0 0.0
    %v4720 = vand.u32 %v4148, 4294901760
    %4721 = vmatmul.mubr.f32.gmra.mrb[0].mxu0 %v4720
    %v4722 = vpop.f32.mrb[0].mxu0
    %v4723 = vadd.f32 %v4600, %v4722
    %v4724 = vpop.f32.mrb[0].mxu0
    %v4725 = vadd.f32 %v4602, %v4724
    %4726 = vmatprep.mubr.f32.mxu0 0.0
    %v4727 = vand.u32 %v4151, 4294901760
    %4728 = vmatmul.mubr.f32.gmra.mrb[0].mxu0 %v4727
    %v4729 = vpop.f32.mrb[0].mxu0
    %v4730 = vadd.f32 %v4609, %v4729
    %v4731 = vpop.f32.mrb[0].mxu0
    %v4732 = vadd.f32 %v4611, %v4731
    %4733 = vmatprep.mubr.f32.mxu0 0.0
    %v4734 = vand.u32 %v4154, 4294901760
    %4735 = vmatmul.mubr.f32.gmra.mrb[0].mxu0 %v4734
    %v4736 = vpop.f32.mrb[0].mxu0
    %v4737 = vadd.f32 %v4618, %v4736
    %v4738 = vpop.f32.mrb[0].mxu0
    %v4739 = vadd.f32 %v4620, %v4738
    %4740 = vmatprep.mubr.f32.mxu0 0.0
    %v4741 = vand.u32 %v4157, 4294901760
    %4742 = vmatmul.mubr.f32.gmra.mrb[0].mxu0 %v4741
    %v4743 = vpop.f32.mrb[0].mxu0
    %v4744 = vadd.f32 %v4627, %v4743
    %v4745 = vpop.f32.mrb[0].mxu0
    %v4746 = vadd.f32 %v4629, %v4745
    %4747 = vdwg.mxu0
    %v4748 = vand.u32 %v3502, 4294901760
    %4749 = vmatprep.subr.mxu0 %v4748
    %v4750 = vand.u32 %v3398, 4294901760
    %4751 = vmatpush1.msra.mxu0 %v4750
    %v4752 = vand.u32 %v3710, 4294901760
    %4753 = vmatprep.subr.mxu0 %v4752
    %v4754 = vand.u32 %v3606, 4294901760
    %4755 = vmatpush1.msra.mxu0 %v4754
    %v4756 = vand.u32 %v3918, 4294901760
    %4757 = vmatprep.subr.mxu0 %v4756
    %v4758 = vand.u32 %v3814, 4294901760
    %4759 = vmatpush1.msra.mxu0 %v4758
    %v4760 = vand.u32 %v4126, 4294901760
    %4761 = vmatprep.subr.mxu0 %v4760
    %v4762 = vand.u32 %v4022, 4294901760
    %4763 = vmatpush1.msra.mxu0 %v4762
    %4764 = vmatprep.subr.mxu0 0.0
    %4765 = vmatpush1.msra.mxu0 0.0
    %4766 = vmatprep.subr.mxu0 0.0
    %4767 = vmatpush1.msra.mxu0 0.0
    %4768 = vmatprep.subr.mxu0 0.0
    %4769 = vmatpush1.msra.mxu0 0.0
    %4770 = vmatprep.subr.mxu0 0.0
    %4771 = vmatpush1.msra.mxu0 0.0
    %4772 = vmatprep.subr.mxu0 0.0
    %4773 = vmatpush1.msra.mxu0 0.0
    %4774 = vmatprep.subr.mxu0 0.0
    %4775 = vmatpush1.msra.mxu0 0.0
    %4776 = vmatprep.subr.mxu0 0.0
    %4777 = vmatpush1.msra.mxu0 0.0
    %4778 = vmatprep.subr.mxu0 0.0
    %4779 = vmatpush1.msra.mxu0 0.0
    %4780 = vmatprep.subr.mxu0 0.0
    %4781 = vmatpush1.msra.mxu0 0.0
    %4782 = vmatprep.subr.mxu0 0.0
    %4783 = vmatpush1.msra.mxu0 0.0
    %4784 = vmatprep.subr.mxu0 0.0
    %4785 = vmatpush1.msra.mxu0 0.0
    %4786 = vmatprep.subr.mxu0 0.0
    %4787 = vmatpush1.msra.mxu0 0.0
    %4788 = vmatprep.subr.mxu0 0.0
    %4789 = vmatpush1.msra.mxu0 0.0
    %4790 = vmatprep.subr.mxu0 0.0
    %4791 = vmatpush1.msra.mxu0 0.0
    %4792 = vmatprep.subr.mxu0 0.0
    %4793 = vmatpush1.msra.mxu0 0.0
    %4794 = vmatprep.subr.mxu0 0.0
    %4795 = vmatpush1.msra.mxu0 0.0
    %4796 = vmatprep.subr.mxu0 0.0
    %4797 = vmatpush1.msra.mxu0 0.0
    %4798 = vmatprep.subr.mxu0 0.0
    %4799 = vmatpush1.msra.mxu0 0.0
    %4800 = vmatprep.subr.mxu0 0.0
    %4801 = vmatpush1.msra.mxu0 0.0
    %4802 = vmatprep.subr.mxu0 0.0
    %4803 = vmatpush1.msra.mxu0 0.0
    %4804 = vmatprep.subr.mxu0 0.0
    %4805 = vmatpush1.msra.mxu0 0.0
    %4806 = vmatprep.subr.mxu0 0.0
    %4807 = vmatpush1.msra.mxu0 0.0
    %4808 = vmatprep.subr.mxu0 0.0
    %4809 = vmatpush1.msra.mxu0 0.0
    %4810 = vmatprep.subr.mxu0 0.0
    %4811 = vmatpush1.msra.mxu0 0.0
    %4812 = vmatprep.subr.mxu0 0.0
    %4813 = vmatpush1.msra.mxu0 0.0
    %4814 = vmatprep.subr.mxu0 0.0
    %4815 = vmatpush1.msra.mxu0 0.0
    %4816 = vmatprep.subr.mxu0 0.0
    %4817 = vmatpush1.msra.mxu0 0.0
    %4818 = vmatprep.subr.mxu0 0.0
    %4819 = vmatpush1.msra.mxu0 0.0
    %4820 = vmatprep.mubr.f32.mxu0 0.0
    %v4821 = vand.u32 %v4148, 4294901760
    %4822 = vmatmul.mubr.f32.gmra.mrb[0].mxu0 %v4821
    %v4823 = vpop.f32.mrb[0].mxu0
    %v4824 = vadd.f32 %v4723, %v4823
    %v4825 = vpop.f32.mrb[0].mxu0
    %v4826 = vadd.f32 %v4725, %v4825
    %4827 = vmatprep.mubr.f32.mxu0 0.0
    %v4828 = vand.u32 %v4151, 4294901760
    %4829 = vmatmul.mubr.f32.gmra.mrb[0].mxu0 %v4828
    %v4830 = vpop.f32.mrb[0].mxu0
    %v4831 = vadd.f32 %v4730, %v4830
    %v4832 = vpop.f32.mrb[0].mxu0
    %v4833 = vadd.f32 %v4732, %v4832
    %4834 = vmatprep.mubr.f32.mxu0 0.0
    %v4835 = vand.u32 %v4154, 4294901760
    %4836 = vmatmul.mubr.f32.gmra.mrb[0].mxu0 %v4835
    %v4837 = vpop.f32.mrb[0].mxu0
    %v4838 = vadd.f32 %v4737, %v4837
    %v4839 = vpop.f32.mrb[0].mxu0
    %v4840 = vadd.f32 %v4739, %v4839
    %4841 = vmatprep.mubr.f32.mxu0 0.0
    %v4842 = vand.u32 %v4157, 4294901760
    %4843 = vmatmul.mubr.f32.gmra.mrb[0].mxu0 %v4842
    %v4844 = vpop.f32.mrb[0].mxu0
    %v4845 = vadd.f32 %v4744, %v4844
    %v4846 = vpop.f32.mrb[0].mxu0
    %v4847 = vadd.f32 %v4746, %v4846
    %4848 = vdwg.mxu0
    %v4849 = vand.u32 2147483647, %v4824
    %vm4850 = vcmp.le.f32.partialorder %v4849, 0.7853982
    %vm4851 = vcmp.lt.s32.totalorder %v4824, 0
    %v4852 = vand.u32 %v4824, 2139095040
    %v4853 = vshrl.u32 %v4852, 23
    %v4854 = vsub.s32 %v4853, 127
    %v4855 = vand.u32 2147483647, %v4824
    %v4856 = vand.u32 %v4855, 8388607
    %v4857 = vor.u32 %v4856, 8388608
    %v4858 = vsub.s32 0, %v4857
    %v4859 = vadd.s32 %v4854, 1
    %vm4860 = vcmp.gt.s32.totalorder %v4859, 0
    %v4861 = vsel %vm4860, %v4859, 0
    %v4862 = vshrl.u32 %v4861, 5
    %v4863 = vand.u32 %v4861, 31
    %v4864 = vsub.s32 32, %v4863
    %v4865 = vshrl.u32 683565275, %v4864
    %v4866 = vshll.u32 683565275, %v4863
    %v4867 = vshrl.u32 2475754826, %v4864
    %v4868 = vor.u32 %v4866, %v4867
    %v4869 = vshll.u32 2475754826, %v4863
    %v4870 = vshrl.u32 2131351028, %v4864
    %v4871 = vor.u32 %v4869, %v4870
    %v4872 = vshll.u32 2131351028, %v4863
    %v4873 = vshrl.u32 2102212464, %v4864
    %v4874 = vor.u32 %v4872, %v4873
    %v4875 = vshll.u32 2102212464, %v4863
    %v4876 = vshrl.u32 920167782, %v4864
    %v4877 = vor.u32 %v4875, %v4876
    %v4878 = vshll.u32 920167782, %v4863
    %v4879 = vshrl.u32 1326507024, %v4864
    %v4880 = vor.u32 %v4878, %v4879
    %vm4881 = vcmp.lt.s32.totalorder %v4862, 1
    %vm4882 = vcmp.lt.s32.totalorder %v4862, 2
    %vm4883 = vcmp.lt.s32.totalorder %v4862, 3
    %vm4884 = vcmp.lt.s32.totalorder %v4862, 4
    %v4885 = vsel %vm4881, %v4865, %v4868
    %v4886 = vsel %vm4884, %v4874, 2102212464
    %v4887 = vsel %vm4883, %v4871, %v4886
    %v4888 = vsel %vm4882, %v4885, %v4887
    %v4889 = vsel %vm4881, %v4868, %v4871
    %v4890 = vsel %vm4884, %v4877, 920167782
    %v4891 = vsel %vm4883, %v4874, %v4890
    %v4892 = vsel %vm4882, %v4889, %v4891
    %v4893 = vsel %vm4881, %v4871, %v4874
    %v4894 = vsel %vm4884, %v4880, 1326507024
    %v4895 = vsel %vm4883, %v4877, %v4894
    %v4896 = vsel %vm4882, %v4893, %v4895
    %v4897 = vshll.u32 %v4857, 8
    %v4898 = vmul.u32.u64.compose %v4897, %v4896
    %v4899 = vextract.low.u32 %v4898
    %v4900 = vextract.high.u32 %v4898
    %v4901 = vmul.u32.u64.compose %v4897, %v4892
    %v4902 = vextract.low.u32 %v4901
    %v4903 = vextract.high.u32 %v4901
    %v4904 = vmul.u32 %v4897, %v4888
    %v4905 = vadd.s32 %v4900, %v4902
    %vm4906 = vc.u32 %v4900, %v4902
    %v4907 = vadd.s32 %v4903, 1
    %v4908 = vsel %vm4906, %v4907, %v4903
    %v4909 = vadd.s32 %v4904, %v4908
    %v4910 = vadd.s32 %v4909, 536870912
    %v4911 = vshrl.u32 %v4910, 30
    %v4912 = vshll.u32 %v4911, 30
    %v4913 = vsub.s32 %v4909, %v4912
    %vm4914 = vcmp.lt.s32.totalorder %v4913, 0
    %v4915 = vsub.s32 0, %v4913
    %v4916 = vsel %vm4914, %v4915, %v4913
    %v4917 = vclz %v4916
    %v4918 = vsub.s32 %v4917, 2
    %vm4919 = vcmp.gt.s32.totalorder 0, %v4918
    %v4920 = vsel %vm4919, 0, %v4918
    %v4921 = vsub.s32 32, %v4920
    %v4922 = vshll.u32 %v4913, %v4920
    %v4923 = vshrl.u32 %v4905, %v4921
    %v4924 = vor.u32 %v4922, %v4923
    %v4925 = vsub.s32 4294967266, %v4920
    %v4926 = vadd.s32 %v4925, 127
    %v4927 = vshll.u32 %v4926, 23
    %v4928 = vor.u32 4788187, %v4927
    %v4929 = vand.u32 2147483647, %v4928
    %v4931 = vcvt.s32.f32 %v4924
    %v4932 = vmul.f32 %v4931, %v4929
    %v4933 = vxor.u32 %v4932, 2147483648
    %v4934 = vsel %vm4851, %v4933, %v4932
    %v4935 = vsub.s32 4, %v4911
    %v4936 = vsel %vm4851, %v4935, %v4911
    %v4937 = vsel %vm4850, %v4824, %v4934
    %v4938 = vsel %vm4850, 0, %v4936
    %v4939 = vcosq.f32.pop %v4937
    %v4940 = vsinq.f32.pop %v4937
    %vm4941 = vweird.f32 %v4824
    %v4942 = vadd.s32 %v4938, 3
    %v4943 = vand.u32 %v4942, 3
    %vm4944 = vcmp.lt.s32.totalorder %v4943, 2
    %vm4945 = vcmp.eq.s32.totalorder %v4943, 0
    %v4946 = vxor.u32 %v4940, 2147483648
    %v4947 = vsel %vm4945, %v4939, %v4946
    %vm4948 = vcmp.eq.s32.totalorder %v4943, 2
    %v4949 = vxor.u32 %v4939, 2147483648
    %v4950 = vsel %vm4948, %v4949, %v4940
    %v4951 = vsel %vm4944, %v4947, %v4950
    %v4952 = vsel %vm4941, nan, %v4951
    %v4953 = vand.u32 2147483647, %v4826
    %vm4954 = vcmp.le.f32.partialorder %v4953, 0.7853982
    %vm4955 = vcmp.lt.s32.totalorder %v4826, 0
    %v4956 = vand.u32 %v4826, 2139095040
    %v4957 = vshrl.u32 %v4956, 23
    %v4958 = vsub.s32 %v4957, 127
    %v4959 = vand.u32 2147483647, %v4826
    %v4960 = vand.u32 %v4959, 8388607
    %v4961 = vor.u32 %v4960, 8388608
    %v4962 = vsub.s32 0, %v4961
    %v4963 = vadd.s32 %v4958, 1
    %vm4964 = vcmp.gt.s32.totalorder %v4963, 0
    %v4965 = vsel %vm4964, %v4963, 0
    %v4966 = vshrl.u32 %v4965, 5
    %v4967 = vand.u32 %v4965, 31
    %v4968 = vsub.s32 32, %v4967
    %v4969 = vshrl.u32 683565275, %v4968
    %v4970 = vshll.u32 683565275, %v4967
    %v4971 = vshrl.u32 2475754826, %v4968
    %v4972 = vor.u32 %v4970, %v4971
    %v4973 = vshll.u32 2475754826, %v4967
    %v4974 = vshrl.u32 2131351028, %v4968
    %v4975 = vor.u32 %v4973, %v4974
    %v4976 = vshll.u32 2131351028, %v4967
    %v4977 = vshrl.u32 2102212464, %v4968
    %v4978 = vor.u32 %v4976, %v4977
    %v4979 = vshll.u32 2102212464, %v4967
    %v4980 = vshrl.u32 920167782, %v4968
    %v4981 = vor.u32 %v4979, %v4980
    %v4982 = vshll.u32 920167782, %v4967
    %v4983 = vshrl.u32 1326507024, %v4968
    %v4984 = vor.u32 %v4982, %v4983
    %vm4985 = vcmp.lt.s32.totalorder %v4966, 1
    %vm4986 = vcmp.lt.s32.totalorder %v4966, 2
    %vm4987 = vcmp.lt.s32.totalorder %v4966, 3
    %vm4988 = vcmp.lt.s32.totalorder %v4966, 4
    %v4989 = vsel %vm4985, %v4969, %v4972
    %v4990 = vsel %vm4988, %v4978, 2102212464
    %v4991 = vsel %vm4987, %v4975, %v4990
    %v4992 = vsel %vm4986, %v4989, %v4991
    %v4993 = vsel %vm4985, %v4972, %v4975
    %v4994 = vsel %vm4988, %v4981, 920167782
    %v4995 = vsel %vm4987, %v4978, %v4994
    %v4996 = vsel %vm4986, %v4993, %v4995
    %v4997 = vsel %vm4985, %v4975, %v4978
    %v4998 = vsel %vm4988, %v4984, 1326507024
    %v4999 = vsel %vm4987, %v4981, %v4998
    %v5000 = vsel %vm4986, %v4997, %v4999
    %v5001 = vshll.u32 %v4961, 8
    %v5002 = vmul.u32.u64.compose %v5001, %v5000
    %v5003 = vextract.low.u32 %v5002
    %v5004 = vextract.high.u32 %v5002
    %v5005 = vmul.u32.u64.compose %v5001, %v4996
    %v5006 = vextract.low.u32 %v5005
    %v5007 = vextract.high.u32 %v5005
    %v5008 = vmul.u32 %v5001, %v4992
    %v5009 = vadd.s32 %v5004, %v5006
    %vm5010 = vc.u32 %v5004, %v5006
    %v5011 = vadd.s32 %v5007, 1
    %v5012 = vsel %vm5010, %v5011, %v5007
    %v5013 = vadd.s32 %v5008, %v5012
    %v5014 = vadd.s32 %v5013, 536870912
    %v5015 = vshrl.u32 %v5014, 30
    %v5016 = vshll.u32 %v5015, 30
    %v5017 = vsub.s32 %v5013, %v5016
    %vm5018 = vcmp.lt.s32.totalorder %v5017, 0
    %v5019 = vsub.s32 0, %v5017
    %v5020 = vsel %vm5018, %v5019, %v5017
    %v5021 = vclz %v5020
    %v5022 = vsub.s32 %v5021, 2
    %vm5023 = vcmp.gt.s32.totalorder 0, %v5022
    %v5024 = vsel %vm5023, 0, %v5022
    %v5025 = vsub.s32 32, %v5024
    %v5026 = vshll.u32 %v5017, %v5024
    %v5027 = vshrl.u32 %v5009, %v5025
    %v5028 = vor.u32 %v5026, %v5027
    %v5029 = vsub.s32 4294967266, %v5024
    %v5030 = vadd.s32 %v5029, 127
    %v5031 = vshll.u32 %v5030, 23
    %v5032 = vor.u32 4788187, %v5031
    %v5033 = vand.u32 2147483647, %v5032
    %v5035 = vcvt.s32.f32 %v5028
    %v5036 = vmul.f32 %v5035, %v5033
    %v5037 = vxor.u32 %v5036, 2147483648
    %v5038 = vsel %vm4955, %v5037, %v5036
    %v5039 = vsub.s32 4, %v5015
    %v5040 = vsel %vm4955, %v5039, %v5015
    %v5041 = vsel %vm4954, %v4826, %v5038
    %v5042 = vsel %vm4954, 0, %v5040
    %v5043 = vcosq.f32.pop %v5041
    %v5044 = vsinq.f32.pop %v5041
    %vm5045 = vweird.f32 %v4826
    %v5046 = vadd.s32 %v5042, 3
    %v5047 = vand.u32 %v5046, 3
    %vm5048 = vcmp.lt.s32.totalorder %v5047, 2
    %vm5049 = vcmp.eq.s32.totalorder %v5047, 0
    %v5050 = vxor.u32 %v5044, 2147483648
    %v5051 = vsel %vm5049, %v5043, %v5050
    %vm5052 = vcmp.eq.s32.totalorder %v5047, 2
    %v5053 = vxor.u32 %v5043, 2147483648
    %v5054 = vsel %vm5052, %v5053, %v5044
    %v5055 = vsel %vm5048, %v5051, %v5054
    %v5056 = vsel %vm5045, nan, %v5055
    %v5057 = vand.u32 2147483647, %v4831
    %vm5058 = vcmp.le.f32.partialorder %v5057, 0.7853982
    %vm5059 = vcmp.lt.s32.totalorder %v4831, 0
    %v5060 = vand.u32 %v4831, 2139095040
    %v5061 = vshrl.u32 %v5060, 23
    %v5062 = vsub.s32 %v5061, 127
    %v5063 = vand.u32 2147483647, %v4831
    %v5064 = vand.u32 %v5063, 8388607
    %v5065 = vor.u32 %v5064, 8388608
    %v5066 = vsub.s32 0, %v5065
    %v5067 = vadd.s32 %v5062, 1
    %vm5068 = vcmp.gt.s32.totalorder %v5067, 0
    %v5069 = vsel %vm5068, %v5067, 0
    %v5070 = vshrl.u32 %v5069, 5
    %v5071 = vand.u32 %v5069, 31
    %v5072 = vsub.s32 32, %v5071
    %v5073 = vshrl.u32 683565275, %v5072
    %v5074 = vshll.u32 683565275, %v5071
    %v5075 = vshrl.u32 2475754826, %v5072
    %v5076 = vor.u32 %v5074, %v5075
    %v5077 = vshll.u32 2475754826, %v5071
    %v5078 = vshrl.u32 2131351028, %v5072
    %v5079 = vor.u32 %v5077, %v5078
    %v5080 = vshll.u32 2131351028, %v5071
    %v5081 = vshrl.u32 2102212464, %v5072
    %v5082 = vor.u32 %v5080, %v5081
    %v5083 = vshll.u32 2102212464, %v5071
    %v5084 = vshrl.u32 920167782, %v5072
    %v5085 = vor.u32 %v5083, %v5084
    %v5086 = vshll.u32 920167782, %v5071
    %v5087 = vshrl.u32 1326507024, %v5072
    %v5088 = vor.u32 %v5086, %v5087
    %vm5089 = vcmp.lt.s32.totalorder %v5070, 1
    %vm5090 = vcmp.lt.s32.totalorder %v5070, 2
    %vm5091 = vcmp.lt.s32.totalorder %v5070, 3
    %vm5092 = vcmp.lt.s32.totalorder %v5070, 4
    %v5093 = vsel %vm5089, %v5073, %v5076
    %v5094 = vsel %vm5092, %v5082, 2102212464
    %v5095 = vsel %vm5091, %v5079, %v5094
    %v5096 = vsel %vm5090, %v5093, %v5095
    %v5097 = vsel %vm5089, %v5076, %v5079
    %v5098 = vsel %vm5092, %v5085, 920167782
    %v5099 = vsel %vm5091, %v5082, %v5098
    %v5100 = vsel %vm5090, %v5097, %v5099
    %v5101 = vsel %vm5089, %v5079, %v5082
    %v5102 = vsel %vm5092, %v5088, 1326507024
    %v5103 = vsel %vm5091, %v5085, %v5102
    %v5104 = vsel %vm5090, %v5101, %v5103
    %v5105 = vshll.u32 %v5065, 8
    %v5106 = vmul.u32.u64.compose %v5105, %v5104
    %v5107 = vextract.low.u32 %v5106
    %v5108 = vextract.high.u32 %v5106
    %v5109 = vmul.u32.u64.compose %v5105, %v5100
    %v5110 = vextract.low.u32 %v5109
    %v5111 = vextract.high.u32 %v5109
    %v5112 = vmul.u32 %v5105, %v5096
    %v5113 = vadd.s32 %v5108, %v5110
    %vm5114 = vc.u32 %v5108, %v5110
    %v5115 = vadd.s32 %v5111, 1
    %v5116 = vsel %vm5114, %v5115, %v5111
    %v5117 = vadd.s32 %v5112, %v5116
    %v5118 = vadd.s32 %v5117, 536870912
    %v5119 = vshrl.u32 %v5118, 30
    %v5120 = vshll.u32 %v5119, 30
    %v5121 = vsub.s32 %v5117, %v5120
    %vm5122 = vcmp.lt.s32.totalorder %v5121, 0
    %v5123 = vsub.s32 0, %v5121
    %v5124 = vsel %vm5122, %v5123, %v5121
    %v5125 = vclz %v5124
    %v5126 = vsub.s32 %v5125, 2
    %vm5127 = vcmp.gt.s32.totalorder 0, %v5126
    %v5128 = vsel %vm5127, 0, %v5126
    %v5129 = vsub.s32 32, %v5128
    %v5130 = vshll.u32 %v5121, %v5128
    %v5131 = vshrl.u32 %v5113, %v5129
    %v5132 = vor.u32 %v5130, %v5131
    %v5133 = vsub.s32 4294967266, %v5128
    %v5134 = vadd.s32 %v5133, 127
    %v5135 = vshll.u32 %v5134, 23
    %v5136 = vor.u32 4788187, %v5135
    %v5137 = vand.u32 2147483647, %v5136
    %v5139 = vcvt.s32.f32 %v5132
    %v5140 = vmul.f32 %v5139, %v5137
    %v5141 = vxor.u32 %v5140, 2147483648
    %v5142 = vsel %vm5059, %v5141, %v5140
    %v5143 = vsub.s32 4, %v5119
    %v5144 = vsel %vm5059, %v5143, %v5119
    %v5145 = vsel %vm5058, %v4831, %v5142
    %v5146 = vsel %vm5058, 0, %v5144
    %v5147 = vcosq.f32.pop %v5145
    %v5148 = vsinq.f32.pop %v5145
    %vm5149 = vweird.f32 %v4831
    %v5150 = vadd.s32 %v5146, 3
    %v5151 = vand.u32 %v5150, 3
    %vm5152 = vcmp.lt.s32.totalorder %v5151, 2
    %vm5153 = vcmp.eq.s32.totalorder %v5151, 0
    %v5154 = vxor.u32 %v5148, 2147483648
    %v5155 = vsel %vm5153, %v5147, %v5154
    %vm5156 = vcmp.eq.s32.totalorder %v5151, 2
    %v5157 = vxor.u32 %v5147, 2147483648
    %v5158 = vsel %vm5156, %v5157, %v5148
    %v5159 = vsel %vm5152, %v5155, %v5158
    %v5160 = vsel %vm5149, nan, %v5159
    %v5161 = vand.u32 2147483647, %v4833
    %vm5162 = vcmp.le.f32.partialorder %v5161, 0.7853982
    %vm5163 = vcmp.lt.s32.totalorder %v4833, 0
    %v5164 = vand.u32 %v4833, 2139095040
    %v5165 = vshrl.u32 %v5164, 23
    %v5166 = vsub.s32 %v5165, 127
    %v5167 = vand.u32 2147483647, %v4833
    %v5168 = vand.u32 %v5167, 8388607
    %v5169 = vor.u32 %v5168, 8388608
    %v5170 = vsub.s32 0, %v5169
    %v5171 = vadd.s32 %v5166, 1
    %vm5172 = vcmp.gt.s32.totalorder %v5171, 0
    %v5173 = vsel %vm5172, %v5171, 0
    %v5174 = vshrl.u32 %v5173, 5
    %v5175 = vand.u32 %v5173, 31
    %v5176 = vsub.s32 32, %v5175
    %v5177 = vshrl.u32 683565275, %v5176
    %v5178 = vshll.u32 683565275, %v5175
    %v5179 = vshrl.u32 2475754826, %v5176
    %v5180 = vor.u32 %v5178, %v5179
    %v5181 = vshll.u32 2475754826, %v5175
    %v5182 = vshrl.u32 2131351028, %v5176
    %v5183 = vor.u32 %v5181, %v5182
    %v5184 = vshll.u32 2131351028, %v5175
    %v5185 = vshrl.u32 2102212464, %v5176
    %v5186 = vor.u32 %v5184, %v5185
    %v5187 = vshll.u32 2102212464, %v5175
    %v5188 = vshrl.u32 920167782, %v5176
    %v5189 = vor.u32 %v5187, %v5188
    %v5190 = vshll.u32 920167782, %v5175
    %v5191 = vshrl.u32 1326507024, %v5176
    %v5192 = vor.u32 %v5190, %v5191
    %vm5193 = vcmp.lt.s32.totalorder %v5174, 1
    %vm5194 = vcmp.lt.s32.totalorder %v5174, 2
    %vm5195 = vcmp.lt.s32.totalorder %v5174, 3
    %vm5196 = vcmp.lt.s32.totalorder %v5174, 4
    %v5197 = vsel %vm5193, %v5177, %v5180
    %v5198 = vsel %vm5196, %v5186, 2102212464
    %v5199 = vsel %vm5195, %v5183, %v5198
    %v5200 = vsel %vm5194, %v5197, %v5199
    %v5201 = vsel %vm5193, %v5180, %v5183
    %v5202 = vsel %vm5196, %v5189, 920167782
    %v5203 = vsel %vm5195, %v5186, %v5202
    %v5204 = vsel %vm5194, %v5201, %v5203
    %v5205 = vsel %vm5193, %v5183, %v5186
    %v5206 = vsel %vm5196, %v5192, 1326507024
    %v5207 = vsel %vm5195, %v5189, %v5206
    %v5208 = vsel %vm5194, %v5205, %v5207
    %v5209 = vshll.u32 %v5169, 8
    %v5210 = vmul.u32.u64.compose %v5209, %v5208
    %v5211 = vextract.low.u32 %v5210
    %v5212 = vextract.high.u32 %v5210
    %v5213 = vmul.u32.u64.compose %v5209, %v5204
    %v5214 = vextract.low.u32 %v5213
    %v5215 = vextract.high.u32 %v5213
    %v5216 = vmul.u32 %v5209, %v5200
    %v5217 = vadd.s32 %v5212, %v5214
    %vm5218 = vc.u32 %v5212, %v5214
    %v5219 = vadd.s32 %v5215, 1
    %v5220 = vsel %vm5218, %v5219, %v5215
    %v5221 = vadd.s32 %v5216, %v5220
    %v5222 = vadd.s32 %v5221, 536870912
    %v5223 = vshrl.u32 %v5222, 30
    %v5224 = vshll.u32 %v5223, 30
    %v5225 = vsub.s32 %v5221, %v5224
    %vm5226 = vcmp.lt.s32.totalorder %v5225, 0
    %v5227 = vsub.s32 0, %v5225
    %v5228 = vsel %vm5226, %v5227, %v5225
    %v5229 = vclz %v5228
    %v5230 = vsub.s32 %v5229, 2
    %vm5231 = vcmp.gt.s32.totalorder 0, %v5230
    %v5232 = vsel %vm5231, 0, %v5230
    %v5233 = vsub.s32 32, %v5232
    %v5234 = vshll.u32 %v5225, %v5232
    %v5235 = vshrl.u32 %v5217, %v5233
    %v5236 = vor.u32 %v5234, %v5235
    %v5237 = vsub.s32 4294967266, %v5232
    %v5238 = vadd.s32 %v5237, 127
    %v5239 = vshll.u32 %v5238, 23
    %v5240 = vor.u32 4788187, %v5239
    %v5241 = vand.u32 2147483647, %v5240
    %v5243 = vcvt.s32.f32 %v5236
    %v5244 = vmul.f32 %v5243, %v5241
    %v5245 = vxor.u32 %v5244, 2147483648
    %v5246 = vsel %vm5163, %v5245, %v5244
    %v5247 = vsub.s32 4, %v5223
    %v5248 = vsel %vm5163, %v5247, %v5223
    %v5249 = vsel %vm5162, %v4833, %v5246
    %v5250 = vsel %vm5162, 0, %v5248
    %v5251 = vcosq.f32.pop %v5249
    %v5252 = vsinq.f32.pop %v5249
    %vm5253 = vweird.f32 %v4833
    %v5254 = vadd.s32 %v5250, 3
    %v5255 = vand.u32 %v5254, 3
    %vm5256 = vcmp.lt.s32.totalorder %v5255, 2
    %vm5257 = vcmp.eq.s32.totalorder %v5255, 0
    %v5258 = vxor.u32 %v5252, 2147483648
    %v5259 = vsel %vm5257, %v5251, %v5258
    %vm5260 = vcmp.eq.s32.totalorder %v5255, 2
    %v5261 = vxor.u32 %v5251, 2147483648
    %v5262 = vsel %vm5260, %v5261, %v5252
    %v5263 = vsel %vm5256, %v5259, %v5262
    %v5264 = vsel %vm5253, nan, %v5263
    %v5265 = vand.u32 2147483647, %v4838
    %vm5266 = vcmp.le.f32.partialorder %v5265, 0.7853982
    %vm5267 = vcmp.lt.s32.totalorder %v4838, 0
    %v5268 = vand.u32 %v4838, 2139095040
    %v5269 = vshrl.u32 %v5268, 23
    %v5270 = vsub.s32 %v5269, 127
    %v5271 = vand.u32 2147483647, %v4838
    %v5272 = vand.u32 %v5271, 8388607
    %v5273 = vor.u32 %v5272, 8388608
    %v5274 = vsub.s32 0, %v5273
    %v5275 = vadd.s32 %v5270, 1
    %vm5276 = vcmp.gt.s32.totalorder %v5275, 0
    %v5277 = vsel %vm5276, %v5275, 0
    %v5278 = vshrl.u32 %v5277, 5
    %v5279 = vand.u32 %v5277, 31
    %v5280 = vsub.s32 32, %v5279
    %v5281 = vshrl.u32 683565275, %v5280
    %v5282 = vshll.u32 683565275, %v5279
    %v5283 = vshrl.u32 2475754826, %v5280
    %v5284 = vor.u32 %v5282, %v5283
    %v5285 = vshll.u32 2475754826, %v5279
    %v5286 = vshrl.u32 2131351028, %v5280
    %v5287 = vor.u32 %v5285, %v5286
    %v5288 = vshll.u32 2131351028, %v5279
    %v5289 = vshrl.u32 2102212464, %v5280
    %v5290 = vor.u32 %v5288, %v5289
    %v5291 = vshll.u32 2102212464, %v5279
    %v5292 = vshrl.u32 920167782, %v5280
    %v5293 = vor.u32 %v5291, %v5292
    %v5294 = vshll.u32 920167782, %v5279
    %v5295 = vshrl.u32 1326507024, %v5280
    %v5296 = vor.u32 %v5294, %v5295
    %vm5297 = vcmp.lt.s32.totalorder %v5278, 1
    %vm5298 = vcmp.lt.s32.totalorder %v5278, 2
    %vm5299 = vcmp.lt.s32.totalorder %v5278, 3
    %vm5300 = vcmp.lt.s32.totalorder %v5278, 4
    %v5301 = vsel %vm5297, %v5281, %v5284
    %v5302 = vsel %vm5300, %v5290, 2102212464
    %v5303 = vsel %vm5299, %v5287, %v5302
    %v5304 = vsel %vm5298, %v5301, %v5303
    %v5305 = vsel %vm5297, %v5284, %v5287
    %v5306 = vsel %vm5300, %v5293, 920167782
    %v5307 = vsel %vm5299, %v5290, %v5306
    %v5308 = vsel %vm5298, %v5305, %v5307
    %v5309 = vsel %vm5297, %v5287, %v5290
    %v5310 = vsel %vm5300, %v5296, 1326507024
    %v5311 = vsel %vm5299, %v5293, %v5310
    %v5312 = vsel %vm5298, %v5309, %v5311
    %v5313 = vshll.u32 %v5273, 8
    %v5314 = vmul.u32.u64.compose %v5313, %v5312
    %v5315 = vextract.low.u32 %v5314
    %v5316 = vextract.high.u32 %v5314
    %v5317 = vmul.u32.u64.compose %v5313, %v5308
    %v5318 = vextract.low.u32 %v5317
    %v5319 = vextract.high.u32 %v5317
    %v5320 = vmul.u32 %v5313, %v5304
    %v5321 = vadd.s32 %v5316, %v5318
    %vm5322 = vc.u32 %v5316, %v5318
    %v5323 = vadd.s32 %v5319, 1
    %v5324 = vsel %vm5322, %v5323, %v5319
    %v5325 = vadd.s32 %v5320, %v5324
    %v5326 = vadd.s32 %v5325, 536870912
    %v5327 = vshrl.u32 %v5326, 30
    %v5328 = vshll.u32 %v5327, 30
    %v5329 = vsub.s32 %v5325, %v5328
    %vm5330 = vcmp.lt.s32.totalorder %v5329, 0
    %v5331 = vsub.s32 0, %v5329
    %v5332 = vsel %vm5330, %v5331, %v5329
    %v5333 = vclz %v5332
    %v5334 = vsub.s32 %v5333, 2
    %vm5335 = vcmp.gt.s32.totalorder 0, %v5334
    %v5336 = vsel %vm5335, 0, %v5334
    %v5337 = vsub.s32 32, %v5336
    %v5338 = vshll.u32 %v5329, %v5336
    %v5339 = vshrl.u32 %v5321, %v5337
    %v5340 = vor.u32 %v5338, %v5339
    %v5341 = vsub.s32 4294967266, %v5336
    %v5342 = vadd.s32 %v5341, 127
    %v5343 = vshll.u32 %v5342, 23
    %v5344 = vor.u32 4788187, %v5343
    %v5345 = vand.u32 2147483647, %v5344
    %v5347 = vcvt.s32.f32 %v5340
    %v5348 = vmul.f32 %v5347, %v5345
    %v5349 = vxor.u32 %v5348, 2147483648
    %v5350 = vsel %vm5267, %v5349, %v5348
    %v5351 = vsub.s32 4, %v5327
    %v5352 = vsel %vm5267, %v5351, %v5327
    %v5353 = vsel %vm5266, %v4838, %v5350
    %v5354 = vsel %vm5266, 0, %v5352
    %v5355 = vcosq.f32.pop %v5353
    %v5356 = vsinq.f32.pop %v5353
    %vm5357 = vweird.f32 %v4838
    %v5358 = vadd.s32 %v5354, 3
    %v5359 = vand.u32 %v5358, 3
    %vm5360 = vcmp.lt.s32.totalorder %v5359, 2
    %vm5361 = vcmp.eq.s32.totalorder %v5359, 0
    %v5362 = vxor.u32 %v5356, 2147483648
    %v5363 = vsel %vm5361, %v5355, %v5362
    %vm5364 = vcmp.eq.s32.totalorder %v5359, 2
    %v5365 = vxor.u32 %v5355, 2147483648
    %v5366 = vsel %vm5364, %v5365, %v5356
    %v5367 = vsel %vm5360, %v5363, %v5366
    %v5368 = vsel %vm5357, nan, %v5367
    %v5369 = vand.u32 2147483647, %v4840
    %vm5370 = vcmp.le.f32.partialorder %v5369, 0.7853982
    %vm5371 = vcmp.lt.s32.totalorder %v4840, 0
    %v5372 = vand.u32 %v4840, 2139095040
    %v5373 = vshrl.u32 %v5372, 23
    %v5374 = vsub.s32 %v5373, 127
    %v5375 = vand.u32 2147483647, %v4840
    %v5376 = vand.u32 %v5375, 8388607
    %v5377 = vor.u32 %v5376, 8388608
    %v5378 = vsub.s32 0, %v5377
    %v5379 = vadd.s32 %v5374, 1
    %vm5380 = vcmp.gt.s32.totalorder %v5379, 0
    %v5381 = vsel %vm5380, %v5379, 0
    %v5382 = vshrl.u32 %v5381, 5
    %v5383 = vand.u32 %v5381, 31
    %v5384 = vsub.s32 32, %v5383
    %v5385 = vshrl.u32 683565275, %v5384
    %v5386 = vshll.u32 683565275, %v5383
    %v5387 = vshrl.u32 2475754826, %v5384
    %v5388 = vor.u32 %v5386, %v5387
    %v5389 = vshll.u32 2475754826, %v5383
    %v5390 = vshrl.u32 2131351028, %v5384
    %v5391 = vor.u32 %v5389, %v5390
    %v5392 = vshll.u32 2131351028, %v5383
    %v5393 = vshrl.u32 2102212464, %v5384
    %v5394 = vor.u32 %v5392, %v5393
    %v5395 = vshll.u32 2102212464, %v5383
    %v5396 = vshrl.u32 920167782, %v5384
    %v5397 = vor.u32 %v5395, %v5396
    %v5398 = vshll.u32 920167782, %v5383
    %v5399 = vshrl.u32 1326507024, %v5384
    %v5400 = vor.u32 %v5398, %v5399
    %vm5401 = vcmp.lt.s32.totalorder %v5382, 1
    %vm5402 = vcmp.lt.s32.totalorder %v5382, 2
    %vm5403 = vcmp.lt.s32.totalorder %v5382, 3
    %vm5404 = vcmp.lt.s32.totalorder %v5382, 4
    %v5405 = vsel %vm5401, %v5385, %v5388
    %v5406 = vsel %vm5404, %v5394, 2102212464
    %v5407 = vsel %vm5403, %v5391, %v5406
    %v5408 = vsel %vm5402, %v5405, %v5407
    %v5409 = vsel %vm5401, %v5388, %v5391
    %v5410 = vsel %vm5404, %v5397, 920167782
    %v5411 = vsel %vm5403, %v5394, %v5410
    %v5412 = vsel %vm5402, %v5409, %v5411
    %v5413 = vsel %vm5401, %v5391, %v5394
    %v5414 = vsel %vm5404, %v5400, 1326507024
    %v5415 = vsel %vm5403, %v5397, %v5414
    %v5416 = vsel %vm5402, %v5413, %v5415
    %v5417 = vshll.u32 %v5377, 8
    %v5418 = vmul.u32.u64.compose %v5417, %v5416
    %v5419 = vextract.low.u32 %v5418
    %v5420 = vextract.high.u32 %v5418
    %v5421 = vmul.u32.u64.compose %v5417, %v5412
    %v5422 = vextract.low.u32 %v5421
    %v5423 = vextract.high.u32 %v5421
    %v5424 = vmul.u32 %v5417, %v5408
    %v5425 = vadd.s32 %v5420, %v5422
    %vm5426 = vc.u32 %v5420, %v5422
    %v5427 = vadd.s32 %v5423, 1
    %v5428 = vsel %vm5426, %v5427, %v5423
    %v5429 = vadd.s32 %v5424, %v5428
    %v5430 = vadd.s32 %v5429, 536870912
    %v5431 = vshrl.u32 %v5430, 30
    %v5432 = vshll.u32 %v5431, 30
    %v5433 = vsub.s32 %v5429, %v5432
    %vm5434 = vcmp.lt.s32.totalorder %v5433, 0
    %v5435 = vsub.s32 0, %v5433
    %v5436 = vsel %vm5434, %v5435, %v5433
    %v5437 = vclz %v5436
    %v5438 = vsub.s32 %v5437, 2
    %vm5439 = vcmp.gt.s32.totalorder 0, %v5438
    %v5440 = vsel %vm5439, 0, %v5438
    %v5441 = vsub.s32 32, %v5440
    %v5442 = vshll.u32 %v5433, %v5440
    %v5443 = vshrl.u32 %v5425, %v5441
    %v5444 = vor.u32 %v5442, %v5443
    %v5445 = vsub.s32 4294967266, %v5440
    %v5446 = vadd.s32 %v5445, 127
    %v5447 = vshll.u32 %v5446, 23
    %v5448 = vor.u32 4788187, %v5447
    %v5449 = vand.u32 2147483647, %v5448
    %v5451 = vcvt.s32.f32 %v5444
    %v5452 = vmul.f32 %v5451, %v5449
    %v5453 = vxor.u32 %v5452, 2147483648
    %v5454 = vsel %vm5371, %v5453, %v5452
    %v5455 = vsub.s32 4, %v5431
    %v5456 = vsel %vm5371, %v5455, %v5431
    %v5457 = vsel %vm5370, %v4840, %v5454
    %v5458 = vsel %vm5370, 0, %v5456
    %v5459 = vcosq.f32.pop %v5457
    %v5460 = vsinq.f32.pop %v5457
    %vm5461 = vweird.f32 %v4840
    %v5462 = vadd.s32 %v5458, 3
    %v5463 = vand.u32 %v5462, 3
    %vm5464 = vcmp.lt.s32.totalorder %v5463, 2
    %vm5465 = vcmp.eq.s32.totalorder %v5463, 0
    %v5466 = vxor.u32 %v5460, 2147483648
    %v5467 = vsel %vm5465, %v5459, %v5466
    %vm5468 = vcmp.eq.s32.totalorder %v5463, 2
    %v5469 = vxor.u32 %v5459, 2147483648
    %v5470 = vsel %vm5468, %v5469, %v5460
    %v5471 = vsel %vm5464, %v5467, %v5470
    %v5472 = vsel %vm5461, nan, %v5471
    %v5473 = vand.u32 2147483647, %v4845
    %vm5474 = vcmp.le.f32.partialorder %v5473, 0.7853982
    %vm5475 = vcmp.lt.s32.totalorder %v4845, 0
    %v5476 = vand.u32 %v4845, 2139095040
    %v5477 = vshrl.u32 %v5476, 23
    %v5478 = vsub.s32 %v5477, 127
    %v5479 = vand.u32 2147483647, %v4845
    %v5480 = vand.u32 %v5479, 8388607
    %v5481 = vor.u32 %v5480, 8388608
    %v5482 = vsub.s32 0, %v5481
    %v5483 = vadd.s32 %v5478, 1
    %vm5484 = vcmp.gt.s32.totalorder %v5483, 0
    %v5485 = vsel %vm5484, %v5483, 0
    %v5486 = vshrl.u32 %v5485, 5
    %v5487 = vand.u32 %v5485, 31
    %v5488 = vsub.s32 32, %v5487
    %v5489 = vshrl.u32 683565275, %v5488
    %v5490 = vshll.u32 683565275, %v5487
    %v5491 = vshrl.u32 2475754826, %v5488
    %v5492 = vor.u32 %v5490, %v5491
    %v5493 = vshll.u32 2475754826, %v5487
    %v5494 = vshrl.u32 2131351028, %v5488
    %v5495 = vor.u32 %v5493, %v5494
    %v5496 = vshll.u32 2131351028, %v5487
    %v5497 = vshrl.u32 2102212464, %v5488
    %v5498 = vor.u32 %v5496, %v5497
    %v5499 = vshll.u32 2102212464, %v5487
    %v5500 = vshrl.u32 920167782, %v5488
    %v5501 = vor.u32 %v5499, %v5500
    %v5502 = vshll.u32 920167782, %v5487
    %v5503 = vshrl.u32 1326507024, %v5488
    %v5504 = vor.u32 %v5502, %v5503
    %vm5505 = vcmp.lt.s32.totalorder %v5486, 1
    %vm5506 = vcmp.lt.s32.totalorder %v5486, 2
    %vm5507 = vcmp.lt.s32.totalorder %v5486, 3
    %vm5508 = vcmp.lt.s32.totalorder %v5486, 4
    %v5509 = vsel %vm5505, %v5489, %v5492
    %v5510 = vsel %vm5508, %v5498, 2102212464
    %v5511 = vsel %vm5507, %v5495, %v5510
    %v5512 = vsel %vm5506, %v5509, %v5511
    %v5513 = vsel %vm5505, %v5492, %v5495
    %v5514 = vsel %vm5508, %v5501, 920167782
    %v5515 = vsel %vm5507, %v5498, %v5514
    %v5516 = vsel %vm5506, %v5513, %v5515
    %v5517 = vsel %vm5505, %v5495, %v5498
    %v5518 = vsel %vm5508, %v5504, 1326507024
    %v5519 = vsel %vm5507, %v5501, %v5518
    %v5520 = vsel %vm5506, %v5517, %v5519
    %v5521 = vshll.u32 %v5481, 8
    %v5522 = vmul.u32.u64.compose %v5521, %v5520
    %v5523 = vextract.low.u32 %v5522
    %v5524 = vextract.high.u32 %v5522
    %v5525 = vmul.u32.u64.compose %v5521, %v5516
    %v5526 = vextract.low.u32 %v5525
    %v5527 = vextract.high.u32 %v5525
    %v5528 = vmul.u32 %v5521, %v5512
    %v5529 = vadd.s32 %v5524, %v5526
    %vm5530 = vc.u32 %v5524, %v5526
    %v5531 = vadd.s32 %v5527, 1
    %v5532 = vsel %vm5530, %v5531, %v5527
    %v5533 = vadd.s32 %v5528, %v5532
    %v5534 = vadd.s32 %v5533, 536870912
    %v5535 = vshrl.u32 %v5534, 30
    %v5536 = vshll.u32 %v5535, 30
    %v5537 = vsub.s32 %v5533, %v5536
    %vm5538 = vcmp.lt.s32.totalorder %v5537, 0
    %v5539 = vsub.s32 0, %v5537
    %v5540 = vsel %vm5538, %v5539, %v5537
    %v5541 = vclz %v5540
    %v5542 = vsub.s32 %v5541, 2
    %vm5543 = vcmp.gt.s32.totalorder 0, %v5542
    %v5544 = vsel %vm5543, 0, %v5542
    %v5545 = vsub.s32 32, %v5544
    %v5546 = vshll.u32 %v5537, %v5544
    %v5547 = vshrl.u32 %v5529, %v5545
    %v5548 = vor.u32 %v5546, %v5547
    %v5549 = vsub.s32 4294967266, %v5544
    %v5550 = vadd.s32 %v5549, 127
    %v5551 = vshll.u32 %v5550, 23
    %v5552 = vor.u32 4788187, %v5551
    %v5553 = vand.u32 2147483647, %v5552
    %v5555 = vcvt.s32.f32 %v5548
    %v5556 = vmul.f32 %v5555, %v5553
    %v5557 = vxor.u32 %v5556, 2147483648
    %v5558 = vsel %vm5475, %v5557, %v5556
    %v5559 = vsub.s32 4, %v5535
    %v5560 = vsel %vm5475, %v5559, %v5535
    %v5561 = vsel %vm5474, %v4845, %v5558
    %v5562 = vsel %vm5474, 0, %v5560
    %v5563 = vcosq.f32.pop %v5561
    %v5564 = vsinq.f32.pop %v5561
    %vm5565 = vweird.f32 %v4845
    %v5566 = vadd.s32 %v5562, 3
    %v5567 = vand.u32 %v5566, 3
    %vm5568 = vcmp.lt.s32.totalorder %v5567, 2
    %vm5569 = vcmp.eq.s32.totalorder %v5567, 0
    %v5570 = vxor.u32 %v5564, 2147483648
    %v5571 = vsel %vm5569, %v5563, %v5570
    %vm5572 = vcmp.eq.s32.totalorder %v5567, 2
    %v5573 = vxor.u32 %v5563, 2147483648
    %v5574 = vsel %vm5572, %v5573, %v5564
    %v5575 = vsel %vm5568, %v5571, %v5574
    %v5576 = vsel %vm5565, nan, %v5575
    %v5577 = vand.u32 2147483647, %v4847
    %vm5578 = vcmp.le.f32.partialorder %v5577, 0.7853982
    %vm5579 = vcmp.lt.s32.totalorder %v4847, 0
    %v5580 = vand.u32 %v4847, 2139095040
    %v5581 = vshrl.u32 %v5580, 23
    %v5582 = vsub.s32 %v5581, 127
    %v5583 = vand.u32 2147483647, %v4847
    %v5584 = vand.u32 %v5583, 8388607
    %v5585 = vor.u32 %v5584, 8388608
    %v5586 = vsub.s32 0, %v5585
    %v5587 = vadd.s32 %v5582, 1
    %vm5588 = vcmp.gt.s32.totalorder %v5587, 0
    %v5589 = vsel %vm5588, %v5587, 0
    %v5590 = vshrl.u32 %v5589, 5
    %v5591 = vand.u32 %v5589, 31
    %v5592 = vsub.s32 32, %v5591
    %v5593 = vshrl.u32 683565275, %v5592
    %v5594 = vshll.u32 683565275, %v5591
    %v5595 = vshrl.u32 2475754826, %v5592
    %v5596 = vor.u32 %v5594, %v5595
    %v5597 = vshll.u32 2475754826, %v5591
    %v5598 = vshrl.u32 2131351028, %v5592
    %v5599 = vor.u32 %v5597, %v5598
    %v5600 = vshll.u32 2131351028, %v5591
    %v5601 = vshrl.u32 2102212464, %v5592
    %v5602 = vor.u32 %v5600, %v5601
    %v5603 = vshll.u32 2102212464, %v5591
    %v5604 = vshrl.u32 920167782, %v5592
    %v5605 = vor.u32 %v5603, %v5604
    %v5606 = vshll.u32 920167782, %v5591
    %v5607 = vshrl.u32 1326507024, %v5592
    %v5608 = vor.u32 %v5606, %v5607
    %vm5609 = vcmp.lt.s32.totalorder %v5590, 1
    %vm5610 = vcmp.lt.s32.totalorder %v5590, 2
    %vm5611 = vcmp.lt.s32.totalorder %v5590, 3
    %vm5612 = vcmp.lt.s32.totalorder %v5590, 4
    %v5613 = vsel %vm5609, %v5593, %v5596
    %v5614 = vsel %vm5612, %v5602, 2102212464
    %v5615 = vsel %vm5611, %v5599, %v5614
    %v5616 = vsel %vm5610, %v5613, %v5615
    %v5617 = vsel %vm5609, %v5596, %v5599
    %v5618 = vsel %vm5612, %v5605, 920167782
    %v5619 = vsel %vm5611, %v5602, %v5618
    %v5620 = vsel %vm5610, %v5617, %v5619
    %v5621 = vsel %vm5609, %v5599, %v5602
    %v5622 = vsel %vm5612, %v5608, 1326507024
    %v5623 = vsel %vm5611, %v5605, %v5622
    %v5624 = vsel %vm5610, %v5621, %v5623
    %v5625 = vshll.u32 %v5585, 8
    %v5626 = vmul.u32.u64.compose %v5625, %v5624
    %v5627 = vextract.low.u32 %v5626
    %v5628 = vextract.high.u32 %v5626
    %v5629 = vmul.u32.u64.compose %v5625, %v5620
    %v5630 = vextract.low.u32 %v5629
    %v5631 = vextract.high.u32 %v5629
    %v5632 = vmul.u32 %v5625, %v5616
    %v5633 = vadd.s32 %v5628, %v5630
    %vm5634 = vc.u32 %v5628, %v5630
    %v5635 = vadd.s32 %v5631, 1
    %v5636 = vsel %vm5634, %v5635, %v5631
    %v5637 = vadd.s32 %v5632, %v5636
    %v5638 = vadd.s32 %v5637, 536870912
    %v5639 = vshrl.u32 %v5638, 30
    %v5640 = vshll.u32 %v5639, 30
    %v5641 = vsub.s32 %v5637, %v5640
    %vm5642 = vcmp.lt.s32.totalorder %v5641, 0
    %v5643 = vsub.s32 0, %v5641
    %v5644 = vsel %vm5642, %v5643, %v5641
    %v5645 = vclz %v5644
    %v5646 = vsub.s32 %v5645, 2
    %vm5647 = vcmp.gt.s32.totalorder 0, %v5646
    %v5648 = vsel %vm5647, 0, %v5646
    %v5649 = vsub.s32 32, %v5648
    %v5650 = vshll.u32 %v5641, %v5648
    %v5651 = vshrl.u32 %v5633, %v5649
    %v5652 = vor.u32 %v5650, %v5651
    %v5653 = vsub.s32 4294967266, %v5648
    %v5654 = vadd.s32 %v5653, 127
    %v5655 = vshll.u32 %v5654, 23
    %v5656 = vor.u32 4788187, %v5655
    %v5657 = vand.u32 2147483647, %v5656
    %v5659 = vcvt.s32.f32 %v5652
    %v5660 = vmul.f32 %v5659, %v5657
    %v5661 = vxor.u32 %v5660, 2147483648
    %v5662 = vsel %vm5579, %v5661, %v5660
    %v5663 = vsub.s32 4, %v5639
    %v5664 = vsel %vm5579, %v5663, %v5639
    %v5665 = vsel %vm5578, %v4847, %v5662
    %v5666 = vsel %vm5578, 0, %v5664
    %v5667 = vcosq.f32.pop %v5665
    %v5668 = vsinq.f32.pop %v5665
    %vm5669 = vweird.f32 %v4847
    %v5670 = vadd.s32 %v5666, 3
    %v5671 = vand.u32 %v5670, 3
    %vm5672 = vcmp.lt.s32.totalorder %v5671, 2
    %vm5673 = vcmp.eq.s32.totalorder %v5671, 0
    %v5674 = vxor.u32 %v5668, 2147483648
    %v5675 = vsel %vm5673, %v5667, %v5674
    %vm5676 = vcmp.eq.s32.totalorder %v5671, 2
    %v5677 = vxor.u32 %v5667, 2147483648
    %v5678 = vsel %vm5676, %v5677, %v5668
    %v5679 = vsel %vm5672, %v5675, %v5678
    %v5680 = vsel %vm5669, nan, %v5679
    %5682 = vset.pattern.permute.xlu0 0
    %5683 = vperm.xlu0 %5682, %v24
    %v5684 = vpop.permute.xlu0 %5683
    %5687 = vset.pattern.permute.xlu0 0
    %5688 = vperm.xlu0 %5687, %v25
    %v5689 = vpop.permute.xlu0 %5688
    %5692 = vset.pattern.permute.xlu0 0
    %5693 = vperm.xlu0 %5692, %v26
    %v5694 = vpop.permute.xlu0 %5693
    %5697 = vset.pattern.permute.xlu0 0
    %5698 = vperm.xlu0 %5697, %v27
    %v5699 = vpop.permute.xlu0 %5698
    %v5701 = vmul.f32 %v4952, %v5684
    %v5702 = vmul.f32 %v5056, %v5684
    %v5703 = vmul.f32 %v5160, %v5689
    %v5704 = vmul.f32 %v5264, %v5689
    %v5705 = vmul.f32 %v5368, %v5694
    %v5706 = vmul.f32 %v5472, %v5694
    %v5707 = vmul.f32 %v5576, %v5699
    %v5708 = vmul.f32 %v5680, %v5699
    %v5709 = vadd.f32 %v5701, %v5703
    %v5710 = vadd.f32 %v5709, %v5705
    %v5711 = vadd.f32 %v5710, %v5707
    %v5712 = vrot.slane %v5711, 4
    %v5713 = vadd.f32 %v5711, %v5712
    %v5714 = vrot.slane %v5713, 2
    %v5715 = vadd.f32 %v5713, %v5714
    %v5716 = vrot.slane %v5715, 1
    %v5717 = vadd.f32 %v5715, %v5716
    %v5718 = vadd.f32 %v5702, %v5704
    %v5719 = vadd.f32 %v5718, %v5706
    %v5720 = vadd.f32 %v5719, %v5708
    %v5721 = vrot.slane %v5720, 4
    %v5722 = vadd.f32 %v5720, %v5721
    %v5723 = vrot.slane %v5722, 2
    %v5724 = vadd.f32 %v5722, %v5723
    %v5725 = vrot.slane %v5724, 1
    %v5726 = vadd.f32 %v5724, %v5725
    %5728 = vset.pattern.permute.xlu0 0
    %5729 = vperm.xlu0 %5728, %v29
    %v5730 = vpop.permute.xlu0 %5729
    %v5732 = vadd.f32 %v5717, %v5730
    %v5733 = vadd.f32 %v5726, %v5730
    %v5736 = vcombine.low %v5732, %v5733
    %v5738 = vunpack.c.l.s4 1966171168
    %v5739 = vunpack.c.0.s8 %v5738
    %v5740 = vlaneseq
    %v5741 = vshrl.u32 %v5740, 7
    %v5742 = vsub.s32 %v5739, %v5741
    %v5743 = vrot.slane %v5736, %v5742
    %v5745 = vunpack.c.l.s4 1966171168
    %v5746 = vunpack.c.0.s8 %v5745
    %v5747 = vlaneseq
    %v5748 = vshrl.u32 %v5747, 7
    %v5749 = vsub.s32 %v5746, %v5748
    %v5750 = vrot.slane %v5743, %v5749
    %v5752 = vlaneseq
    %vm5753 = vcmp.ge.s32.totalorder %v5752, 0
    %vm5754 = vcmp.lt.s32.totalorder %v5752, 256
    %vm5755 = vmand %vm5753, %vm5754
    %5756 = vst.msk [vmem:[#allocation2] sm:$0x3] %vm5755, %v5750
    // Predicated region
    $region14: #{fcn_forward_packed.1} parent=1 // pred_check
      _
    $region15: #{fcn_forward_packed.1} parent=1 // pred_check_branch
      %5758 = sbr.rel (0) target = $region17
    $region16: #{fcn_forward_packed.1} parent=1 // pred_region
      %s5760 = ssub.s32 32, 32
      %5761 = vsyncadd [#allocation3], %s5760
      %s5763 = sshll.u32 [#allocation2], 4
      %s5764 = int_to_ptr.vmem [resolvable:$true] %s5763
      %5766 = dma.vmem_to_hbm [thread:$0]  %s5764, 32, %s3, [#allocation3]
    $region17: #{fcn_forward_packed.1} parent=1 // pred_fallthru
      _
    // Predicated region
    $region18: #{fcn_forward_packed.1} parent=1 // pred_check
      _
    $region19: #{fcn_forward_packed.1} parent=1 // pred_check_branch
      %5768 = sbr.rel (0) target = $region21
    $region20: #{fcn_forward_packed.1} parent=1 // pred_region
      %5769 = dma.done [#allocation3], 32
    $region21: #{fcn_forward_packed.1} parent=1 // pred_fallthru
      _
    %5770 = vsyncpa [#allocation3], 1

</llo_original>
